<compile_context>
chip_gen: v5e
topology: v5e:2x2
jax: 0.10.0
libtpu: 0.0.40
codegen_flags: <defaults>
</compile_context>

<pallas_src>
import functools
import math

import jax
import jax.numpy as jnp
from jax.experimental import pallas as pl
from jax.experimental.pallas import tpu as pltpu


# ---------------------------------------------------------------------------
# Fused kernel
# ---------------------------------------------------------------------------
def _latent_sde_fused_kernel(
    xsmask_ref,   # (T*B, D+1)  : [xs | mask]
    eps_ref,      # (B, L)
    dw_ref,       # ((T-1)*n_sub*B, L)  pre-scaled by sqrt(dt_sub)
    hsub_ref,     # (T-1,) SMEM  substep dt per observation interval
    w_ih_ref,     # (D, 3H)                 GRU input projection
    w_enc_ref,    # (H, 3H + C)             [gru_w_hh.T | lin_w.T]
    w_ctx_ref,    # (C, 2L + 2H)            [qz0_w.T | w1c(ctx->f layer1)]
    w_z_ref,      # (L, 2H + L*H + D)       [w1_fh | g_expand | proj_w.T]
    w2_ref,       # (2H + L*H, 2H + L)      blockdiag(w2_fh, g_reduce)
    w3_ref,       # (2H, 2L)                blockdiag(f_w3.T, h_w3.T)
    bias_ref,     # (1, NB)                 packed bias slab
    out_ref,      # (1, 2)                  [log_pxs, logqp]
    *, T, B, D, L, C, H, n_sub, noise_std):
  f32 = jnp.float32
  G1 = 2 * H + L * H          # fused layer-1 width
  G2 = 2 * H + L              # fused layer-2 width

  def mm(a, b):
    return jnp.dot(a, b, preferred_element_type=f32)

  # --- bias slab static offsets -------------------------------------------
  offs = {}
  cur = 0
  for name, n in (("b_ih", 3 * H), ("b_hh", 3 * H), ("b_lin", C), ("b_q", 2 * L),
                  ("b1_fh", 2 * H), ("gb1", L * H), ("b2g", G2), ("b3_fh", 2 * L),
                  ("b_p", D), ("pm", L), ("pls", L)):
    offs[name] = (cur, n)
    cur += n

  def bias(name):
    s, n = offs[name]
    return bias_ref[:, s:s + n]                       # (1, n)

  xs_all = xsmask_ref[:, :D]                          # (T*B, D)
  mask_all = xsmask_ref[:, D:D + 1]                   # (T*B, 1)

  # --- 1) GRU encoder over the time-reversed sequence ----------------------
  # lengths = mask.sum(dim=0)  (pack_padded_sequence semantics of the reference)
  lengths = jnp.zeros((B, 1), f32)
  for t in range(T):
    lengths = lengths + mask_all[t * B:(t + 1) * B, :]

  # hoisted input projection (one batched matmul, rows in ORIGINAL time order)
  gi_all = mm(xs_all, w_ih_ref[...]) + bias("b_ih")   # (T*B, 3H)

  w_enc = w_enc_ref[...]
  w_hh = w_enc[:, :3 * H]
  w_lin = w_enc[:, 3 * H:]
  b_hhB = jnp.broadcast_to(bias("b_hh"), (B, 3 * H))  # hoisted out of the unroll

  h = jnp.zeros((B, H), f32)
  hs_rev = []                                         # masked h per reversed step
  for t in range(T):                                  # static unroll; T is small
    gi = gi_all[(T - 1 - t) * B:(T - t) * B, :]       # flip(xs) via reversed slicing
    gh = mm(h, w_hh) + b_hhB
    rz = jax.nn.sigmoid(gi[:, :2 * H] + gh[:, :2 * H])   # fused r,z gates
    r = rz[:, :H]
    zg = rz[:, H:]
    n = jnp.tanh(gi[:, 2 * H:] + r * gh[:, 2 * H:])
    h_new = (1.0 - zg) * n + zg * h
    # pack_padded_sequence on flip(xs): first `length` reversed steps advance h;
    # padded positions emit zeros before the Linear (pad_packed_sequence).
    valid = t < lengths                               # (B, 1)
    h = jnp.where(valid, h_new, h)
    hs_rev.append(jnp.where(valid, h_new, jnp.zeros_like(h_new)))

  # deferred ctx projection: one (T*B, H) @ (H, C) matmul
  hs_all_rev = jnp.concatenate(hs_rev, axis=0)        # (T*B, H) reversed-time order
  ctx_all_rev = mm(hs_all_rev, w_lin) + bias("b_lin")  # (T*B, C)

  # --- 2) qz0 head on ctx[0] (original order == last reversed step) --------
  w_ctx = w_ctx_ref[...]
  w_q = w_ctx[:, :2 * L]
  w1c = w_ctx[:, 2 * L:]
  ctx0 = ctx_all_rev[(T - 1) * B:T * B, :]
  qz0 = mm(ctx0, w_q) + bias("b_q")                   # (B, 2L)
  qz0_mean = qz0[:, :L]
  qz0_logstd = qz0[:, L:]
  z = qz0_mean + jnp.exp(qz0_logstd) * eps_ref[...]   # z0 (B, L)

  # --- 3) hoisted per-interval ctx bias + pre-broadcast SDE biases ---------
  biasf_all = mm(ctx_all_rev, w1c) + bias("b1_fh")    # (T*B, 2H), reversed ctx order
  gb1B = jnp.broadcast_to(bias("gb1"), (T * B, L * H))
  bias1_all = jnp.concatenate([biasf_all, gb1B], axis=1)   # (T*B, G1)
  b2gB = jnp.broadcast_to(bias("b2g"), (B, G2))
  b3B = jnp.broadcast_to(bias("b3_fh"), (B, 2 * L))

  w_z = w_z_ref[...]
  w1z = w_z[:, :G1]                                   # (L, G1)  [f/h layer1 | g expand]
  w_proj = w_z[:, G1:]                                # (L, D)
  w2 = w2_ref[...]
  w3 = w3_ref[...]

  # --- 4) Euler-Maruyama sdeint(..., logqp=True) ---------------------------
  # TODO(synk): for large T / n_sub switch these static unrolls to
  # lax.fori_loop(..., unroll=k) plus a T grid to bound code size / VMEM.
  lq_acc = jnp.zeros((B, L), f32)                     # element-wise logqp accumulator
  z_list = [z]                                        # z at each observation time
  for i in range(T - 1):
    # interval [ts[i], ts[i+1]) uses ctx[i+1] (searchsorted right=True)
    r0 = (T - 2 - i) * B
    bias1 = bias1_all[r0:r0 + B, :]                   # (B, G1)
    dt = hsub_ref[i]                                  # SMEM scalar substep size
    for s in range(n_sub):
      # fused [f | h | g-hidden] layer 1: one matmul + one softplus
      act1 = jax.nn.softplus(mm(z, w1z) + bias1)      # (B, G1)
      # fused layer 2: blockdiag(f/h layer2, g reduce)
      pre2 = mm(act1, w2) + b2gB                      # (B, G2)
      a2 = jax.nn.softplus(pre2[:, :2 * H])           # (B, 2H)
      g = jax.nn.sigmoid(pre2[:, 2 * H:])             # (B, L) diagonal diffusion
      a3 = mm(a2, w3) + b3B                           # (B, 2L)
      fdrift = a3[:, :L]
      hdrift = a3[:, L:]
      # logqp path drift: 0.5 * ||(f - h) / g||^2  (reduced once at the end)
      u = (fdrift - hdrift) / g
      lq_acc = lq_acc + (0.5 * dt) * (u * u)
      row = (i * n_sub + s) * B
      z = z + fdrift * dt + g * dw_ref[row:row + B, :]
    z_list.append(z)

  # --- 5) batched projector + masked Gaussian log-prob ---------------------
  z_obs = jnp.concatenate(z_list, axis=0)             # (T*B, L), original time order
  xhat = mm(z_obs, w_proj) + bias("b_p")              # (T*B, D)
  log_c = -math.log(noise_std) - 0.5 * math.log(2.0 * math.pi)
  inv_var = 1.0 / (noise_std * noise_std)
  lp = (-0.5 * inv_var) * (xs_all - xhat) ** 2 + log_c
  log_pxs = jnp.sum(lp * mask_all) * (1.0 / B)        # sum(0,2).mean(0)

  # --- 6) KL(qz0 || pz0) ----------------------------------------------------
  pm = bias("pm")
  pls = bias("pls")
  var_ratio = jnp.exp(2.0 * (qz0_logstd - pls))
  term = (qz0_mean - pm) ** 2 * jnp.exp(-2.0 * pls)
  kl = 0.5 * (var_ratio + term - 1.0) - (qz0_logstd - pls)      # (B, L)
  logqp = (jnp.sum(kl) + jnp.sum(lq_acc)) * (1.0 / B)

  out_ref[...] = jnp.concatenate(
      [jnp.broadcast_to(log_pxs, (1, 1)), jnp.broadcast_to(logqp, (1, 1))], axis=1)


# ---------------------------------------------------------------------------
# Weight packing (few pre-concatenated slabs -> few prologue DMAs)
# ---------------------------------------------------------------------------
def _pack_weights(params, D, L, C, H):
  f32 = jnp.float32
  eye = jnp.eye(L, dtype=f32)

  # fused f/h layer 1 acting on z, and g-net lane-dense expand
  w1_fh = jnp.concatenate([params["f_w1"][:, :L].T, params["h_w1"].T], axis=1)    # (L, 2H)
  g1 = (eye[:, :, None] * params["g_w1"][None, :, :]).reshape(L, L * H)           # (L, L*H)
  w_z = jnp.concatenate([w1_fh, g1, params["proj_w"].T], axis=1)                  # (L, 2H+L*H+D)

  # ctx enters only the f half of layer 1
  w1c = jnp.concatenate([params["f_w1"][:, L:].T, jnp.zeros((C, H), f32)], axis=1)  # (C, 2H)
  w_ctx = jnp.concatenate([params["qz0_w"].T, w1c], axis=1)                        # (C, 2L+2H)

  # fused layer 2: blockdiag(f_w2.T, h_w2.T) stacked with the g-net reduce
  zHH = jnp.zeros((H, H), f32)
  w2_fh = jnp.block([[params["f_w2"].T, zHH], [zHH, params["h_w2"].T]])            # (2H, 2H)
  g2 = (params["g_w2"][:, :, None] * eye[:, None, :]).reshape(L * H, L)            # (L*H, L)
  w2 = jnp.zeros((2 * H + L * H, 2 * H + L), f32)
  w2 = w2.at[:2 * H, :2 * H].set(w2_fh)
  w2 = w2.at[2 * H:, 2 * H:].set(g2)

  zHL = jnp.zeros((H, L), f32)
  w3 = jnp.block([[params["f_w3"].T, zHL], [zHL, params["h_w3"].T]])               # (2H, 2L)

  w_enc = jnp.concatenate([params["gru_w_hh"].T, params["lin_w"].T], axis=1)       # (H, 3H+C)

  bias_slab = jnp.concatenate([
      params["gru_b_ih"], params["gru_b_hh"], params["lin_b"], params["qz0_b"],
      jnp.concatenate([params["f_b1"], params["h_b1"]]),                 # b1_fh  (2H)
      params["g_b1"].reshape(L * H),                                     # gb1    (L*H)
      jnp.concatenate([params["f_b2"], params["h_b2"], params["g_b2"]]),  # b2g    (2H+L)
      jnp.concatenate([params["f_b3"], params["h_b3"]]),                 # b3_fh  (2L)
      params["proj_b"],
      params["pz0_mean"].reshape(L), params["pz0_logstd"].reshape(L),
  ]).reshape(1, -1).astype(f32)

  return (params["gru_w_ih"].T, w_enc, w_ctx, w_z, w2, w3, bias_slab)


# ---------------------------------------------------------------------------
# Parameters (deterministic, PyTorch-default-style uniform init)
# ---------------------------------------------------------------------------
def init_params(key, data_size, latent_size, context_size, hidden_size):
  D, L, C, H = data_size, latent_size, context_size, hidden_size
  keys = jax.random.split(key, 12)

  def linear(k, out_f, in_f):
    kw, kb = jax.random.split(k)
    bound = 1.0 / math.sqrt(in_f)
    w = jax.random.uniform(kw, (out_f, in_f), jnp.float32, -bound, bound)
    b = jax.random.uniform(kb, (out_f,), jnp.float32, -bound, bound)
    return w, b

  p = {}
  kg = jax.random.split(keys[0], 4)
  bound = 1.0 / math.sqrt(H)
  p["gru_w_ih"] = jax.random.uniform(kg[0], (3 * H, D), jnp.float32, -bound, bound)
  p["gru_w_hh"] = jax.random.uniform(kg[1], (3 * H, H), jnp.float32, -bound, bound)
  p["gru_b_ih"] = jax.random.uniform(kg[2], (3 * H,), jnp.float32, -bound, bound)
  p["gru_b_hh"] = jax.random.uniform(kg[3], (3 * H,), jnp.float32, -bound, bound)
  p["lin_w"], p["lin_b"] = linear(keys[1], C, H)
  p["qz0_w"], p["qz0_b"] = linear(keys[2], 2 * L, C)
  p["f_w1"], p["f_b1"] = linear(keys[3], H, L + C)
  p["f_w2"], p["f_b2"] = linear(keys[4], H, H)
  p["f_w3"], p["f_b3"] = linear(keys[5], L, H)
  p["h_w1"], p["h_b1"] = linear(keys[6], H, L)
  p["h_w2"], p["h_b2"] = linear(keys[7], H, H)
  p["h_w3"], p["h_b3"] = linear(keys[8], L, H)
  # g_nets: L independent scalar MLPs Linear(1,H)->Softplus->Linear(H,1)->Sigmoid
  kgn = jax.random.split(keys[9], L)
  gw1, gb1, gw2, gb2 = [], [], [], []
  for j in range(L):
    k1, k2 = jax.random.split(kgn[j])
    w1, b1 = linear(k1, H, 1)
    w2, b2 = linear(k2, 1, H)
    gw1.append(w1[:, 0]); gb1.append(b1); gw2.append(w2[0]); gb2.append(b2[0])
  p["g_w1"] = jnp.stack(gw1)       # (L, H)
  p["g_b1"] = jnp.stack(gb1)       # (L, H)
  p["g_w2"] = jnp.stack(gw2)       # (L, H)
  p["g_b2"] = jnp.stack(gb2)       # (L,)
  p["proj_w"], p["proj_b"] = linear(keys[10], D, L)
  p["pz0_mean"] = jnp.zeros((1, L), jnp.float32)
  p["pz0_logstd"] = jnp.zeros((1, L), jnp.float32)
  return p


# ---------------------------------------------------------------------------
# Full forward pass (single fused pallas_call)
# ---------------------------------------------------------------------------
def latent_sde_forward(params, xs, mask, ts, key, *, noise_std, dt=0.01, n_sub=None):
  T, B, D = xs.shape
  L = params["pz0_mean"].shape[1]
  H = params["gru_w_hh"].shape[1]
  C = params["lin_w"].shape[0]

  if n_sub is None:
    # TODO(synk): requires concrete, ~uniformly spaced ts; pass n_sub explicitly
    # when ts is traced or non-uniform (torchsde euler uses fixed dt substeps).
    spacing = float(ts[1] - ts[0])
    n_sub = max(1, int(round(spacing / dt)))

  xs_flat = xs.reshape(T * B, D).astype(jnp.float32)
  mask_col = mask.reshape(T * B, 1).astype(jnp.float32)
  xsmask = jnp.concatenate([xs_flat, mask_col], axis=1)          # (T*B, D+1)

  k_eps, k_bm = jax.random.split(key)
  eps = jax.random.normal(k_eps, (B, L), dtype=jnp.float32)
  hsub = (jnp.diff(ts) / n_sub).astype(jnp.float32)              # (T-1,)
  # TODO(synk): Brownian increments could be drawn in-kernel with
  # pltpu.prng_seed + pltpu.prng_random_bits to drop this input (changes RNG stream).
  dw = jax.random.normal(k_bm, (T - 1, n_sub, B, L), dtype=jnp.float32)
  dw = (dw * jnp.sqrt(hsub)[:, None, None, None]).reshape((T - 1) * n_sub * B, L)

  w_ih, w_enc, w_ctx, w_z, w2, w3, bias_slab = _pack_weights(params, D, L, C, H)

  ins = (xsmask, eps, dw, hsub, w_ih, w_enc, w_ctx, w_z, w2, w3, bias_slab)
  smem_idx = 3                                                   # hsub lives in SMEM
  in_specs = [
      pl.BlockSpec(memory_space=(pltpu.MemorySpace.SMEM if i == smem_idx
                                 else pltpu.MemorySpace.VMEM))
      for i in range(len(ins))
  ]

  out = pl.pallas_call(
      functools.partial(_latent_sde_fused_kernel, T=T, B=B, D=D, L=L, C=C, H=H,
                        n_sub=n_sub, noise_std=float(noise_std)),
      out_shape=jax.ShapeDtypeStruct((1, 2), jnp.float32),
      in_specs=in_specs,
      out_specs=pl.BlockSpec(memory_space=pltpu.MemorySpace.VMEM),
  )(*ins)
  return out[0, 0], out[0, 1]


if __name__ == "__main__":
  T, B = 8, 8          # B=8 fills all 8 sublanes of each vreg
  data_size, latent_size, context_size, hidden_size = 4, 4, 8, 16

  key = jax.random.PRNGKey(0)
  k_param, k_data, k_fwd = jax.random.split(key, 3)

  params = init_params(k_param, data_size, latent_size, context_size, hidden_size)
  xs = jax.random.normal(k_data, (T, B, data_size), dtype=jnp.float32)
  mask = jnp.ones((T, B), dtype=jnp.float32)
  ts = jnp.arange(T, dtype=jnp.float32) * 0.02   # spacing = 2 * internal dt (n_sub=2)
  noise_std = 0.1

  fwd = jax.jit(functools.partial(latent_sde_forward, noise_std=noise_std, n_sub=2))
  log_pxs, logqp = fwd(params, xs, mask, ts, k_fwd)
  jax.block_until_ready(log_pxs)
  jax.block_until_ready(logqp)
  print("KERNEL_OK")
</pallas_src>

<mosaic_0001>
module attributes {stable_mosaic.version = 11 : i64} {
  func.func @_latent_sde_fused_kernel(%arg0: memref<64x5xf32, #tpu.memory_space<vmem>>, %arg1: memref<8x4xf32, #tpu.memory_space<vmem>>, %arg2: memref<112x4xf32, #tpu.memory_space<vmem>>, %arg3: memref<7xf32, #tpu.memory_space<smem>>, %arg4: memref<4x48xf32, #tpu.memory_space<vmem>>, %arg5: memref<16x56xf32, #tpu.memory_space<vmem>>, %arg6: memref<8x40xf32, #tpu.memory_space<vmem>>, %arg7: memref<4x100xf32, #tpu.memory_space<vmem>>, %arg8: memref<96x36xf32, #tpu.memory_space<vmem>>, %arg9: memref<32x8xf32, #tpu.memory_space<vmem>>, %arg10: memref<1x264xf32, #tpu.memory_space<vmem>>, %arg11: memref<1x2xf32, #tpu.memory_space<vmem>>) attributes {dimension_semantics = [], scalar_prefetch = 0 : i64, scratch_operands = 0 : i64, tpu.core_type = #tpu.core_type<tc>} {
    %c0 = arith.constant 0 : index
    %c0_0 = arith.constant 0 : index
    %0 = vector.load %arg0[%c0, %c0_0] : memref<64x5xf32, #tpu.memory_space<vmem>>, vector<64x4xf32>
    %c0_1 = arith.constant 0 : index
    %c4 = arith.constant 4 : index
    %1 = vector.load %arg0[%c0_1, %c4] : memref<64x5xf32, #tpu.memory_space<vmem>>, vector<64x1xf32>
    %cst = arith.constant 0.000000e+00 : f32
    %2 = vector.broadcast %cst : f32 to vector<8x1xf32>
    %3 = vector.extract_strided_slice %1 {offsets = [0, 0], sizes = [8, 1], strides = [1, 1]} : vector<64x1xf32> to vector<8x1xf32>
    %4 = arith.addf %2, %3 : vector<8x1xf32>
    %5 = vector.extract_strided_slice %1 {offsets = [8, 0], sizes = [8, 1], strides = [1, 1]} : vector<64x1xf32> to vector<8x1xf32>
    %6 = arith.addf %4, %5 : vector<8x1xf32>
    %7 = vector.extract_strided_slice %1 {offsets = [16, 0], sizes = [8, 1], strides = [1, 1]} : vector<64x1xf32> to vector<8x1xf32>
    %8 = arith.addf %6, %7 : vector<8x1xf32>
    %9 = vector.extract_strided_slice %1 {offsets = [24, 0], sizes = [8, 1], strides = [1, 1]} : vector<64x1xf32> to vector<8x1xf32>
    %10 = arith.addf %8, %9 : vector<8x1xf32>
    %11 = vector.extract_strided_slice %1 {offsets = [32, 0], sizes = [8, 1], strides = [1, 1]} : vector<64x1xf32> to vector<8x1xf32>
    %12 = arith.addf %10, %11 : vector<8x1xf32>
    %13 = vector.extract_strided_slice %1 {offsets = [40, 0], sizes = [8, 1], strides = [1, 1]} : vector<64x1xf32> to vector<8x1xf32>
    %14 = arith.addf %12, %13 : vector<8x1xf32>
    %15 = vector.extract_strided_slice %1 {offsets = [48, 0], sizes = [8, 1], strides = [1, 1]} : vector<64x1xf32> to vector<8x1xf32>
    %16 = arith.addf %14, %15 : vector<8x1xf32>
    %17 = vector.extract_strided_slice %1 {offsets = [56, 0], sizes = [8, 1], strides = [1, 1]} : vector<64x1xf32> to vector<8x1xf32>
    %18 = arith.addf %16, %17 : vector<8x1xf32>
    %c0_2 = arith.constant 0 : index
    %c0_3 = arith.constant 0 : index
    %19 = vector.load %arg4[%c0_2, %c0_3] : memref<4x48xf32, #tpu.memory_space<vmem>>, vector<4x48xf32>
    %cst_4 = arith.constant dense<0.000000e+00> : vector<64x48xf32>
    %20 = tpu.matmul %0, %19, %cst_4 {dimension_numbers = #tpu.dot_dimension_numbers<[1], [0], [0], [1], [0, 0, 1, 1], [], []>} : vector<64x4xf32>, vector<4x48xf32>, vector<64x48xf32> -> vector<64x48xf32>
    %c0_5 = arith.constant 0 : index
    %c0_6 = arith.constant 0 : index
    %21 = vector.load %arg10[%c0_5, %c0_6] : memref<1x264xf32, #tpu.memory_space<vmem>>, vector<1x48xf32>
    %22 = vector.broadcast %21 : vector<1x48xf32> to vector<64x48xf32>
    %23 = arith.addf %20, %22 : vector<64x48xf32>
    %c0_7 = arith.constant 0 : index
    %c0_8 = arith.constant 0 : index
    %24 = vector.load %arg5[%c0_7, %c0_8] : memref<16x56xf32, #tpu.memory_space<vmem>>, vector<16x56xf32>
    %25 = vector.extract_strided_slice %24 {offsets = [0, 0], sizes = [16, 48], strides = [1, 1]} : vector<16x56xf32> to vector<16x48xf32>
    %26 = vector.extract_strided_slice %24 {offsets = [0, 48], sizes = [16, 8], strides = [1, 1]} : vector<16x56xf32> to vector<16x8xf32>
    %c0_9 = arith.constant 0 : index
    %c48 = arith.constant 48 : index
    %27 = vector.load %arg10[%c0_9, %c48] : memref<1x264xf32, #tpu.memory_space<vmem>>, vector<1x48xf32>
    %28 = vector.shape_cast %27 : vector<1x48xf32> to vector<1x48xf32>
    %29 = vector.broadcast %28 : vector<1x48xf32> to vector<8x48xf32>
    %cst_10 = arith.constant 0.000000e+00 : f32
    %30 = vector.broadcast %cst_10 : f32 to vector<8x16xf32>
    %31 = vector.extract_strided_slice %23 {offsets = [56, 0], sizes = [8, 48], strides = [1, 1]} : vector<64x48xf32> to vector<8x48xf32>
    %cst_11 = arith.constant dense<0.000000e+00> : vector<8x48xf32>
    %32 = tpu.matmul %30, %25, %cst_11 {dimension_numbers = #tpu.dot_dimension_numbers<[1], [0], [0], [1], [0, 0, 1, 1], [], []>} : vector<8x16xf32>, vector<16x48xf32>, vector<8x48xf32> -> vector<8x48xf32>
    %33 = arith.addf %32, %29 : vector<8x48xf32>
    %34 = vector.extract_strided_slice %31 {offsets = [0, 0], sizes = [8, 32], strides = [1, 1]} : vector<8x48xf32> to vector<8x32xf32>
    %35 = vector.extract_strided_slice %33 {offsets = [0, 0], sizes = [8, 32], strides = [1, 1]} : vector<8x48xf32> to vector<8x32xf32>
    %36 = arith.addf %34, %35 : vector<8x32xf32>
    %37 = arith.negf %36 : vector<8x32xf32>
    %38 = math.exp %37 : vector<8x32xf32>
    %cst_12 = arith.constant 1.000000e+00 : f32
    %39 = vector.broadcast %cst_12 : f32 to vector<8x32xf32>
    %40 = arith.addf %39, %38 : vector<8x32xf32>
    %41 = arith.divf %39, %40 : vector<8x32xf32>
    %42 = vector.extract_strided_slice %41 {offsets = [0, 0], sizes = [8, 16], strides = [1, 1]} : vector<8x32xf32> to vector<8x16xf32>
    %43 = vector.extract_strided_slice %41 {offsets = [0, 16], sizes = [8, 16], strides = [1, 1]} : vector<8x32xf32> to vector<8x16xf32>
    %44 = vector.extract_strided_slice %31 {offsets = [0, 32], sizes = [8, 16], strides = [1, 1]} : vector<8x48xf32> to vector<8x16xf32>
    %45 = vector.extract_strided_slice %33 {offsets = [0, 32], sizes = [8, 16], strides = [1, 1]} : vector<8x48xf32> to vector<8x16xf32>
    %46 = arith.mulf %42, %45 : vector<8x16xf32>
    %47 = arith.addf %44, %46 : vector<8x16xf32>
    %48 = math.tanh %47 : vector<8x16xf32>
    %cst_13 = arith.constant 1.000000e+00 : f32
    %49 = vector.broadcast %cst_13 : f32 to vector<8x16xf32>
    %50 = arith.subf %49, %43 : vector<8x16xf32>
    %51 = arith.mulf %50, %48 : vector<8x16xf32>
    %52 = arith.mulf %43, %30 : vector<8x16xf32>
    %53 = arith.addf %51, %52 : vector<8x16xf32>
    %cst_14 = arith.constant 0.000000e+00 : f32
    %54 = vector.broadcast %cst_14 : f32 to vector<8x1xf32>
    %55 = arith.cmpf ogt, %18, %54 : vector<8x1xf32>
    %56 = vector.shape_cast %55 : vector<8x1xi1> to vector<8x1xi1>
    %57 = vector.broadcast %56 : vector<8x1xi1> to vector<8x16xi1>
    %58 = arith.select %57, %53, %30 : vector<8x16xi1>, vector<8x16xf32>
    %cst_15 = arith.constant 0.000000e+00 : f32
    %59 = vector.broadcast %cst_15 : f32 to vector<8x16xf32>
    %60 = vector.shape_cast %55 : vector<8x1xi1> to vector<8x1xi1>
    %61 = vector.broadcast %60 : vector<8x1xi1> to vector<8x16xi1>
    %62 = arith.select %61, %53, %59 : vector<8x16xi1>, vector<8x16xf32>
    %63 = vector.extract_strided_slice %23 {offsets = [48, 0], sizes = [8, 48], strides = [1, 1]} : vector<64x48xf32> to vector<8x48xf32>
    %cst_16 = arith.constant dense<0.000000e+00> : vector<8x48xf32>
    %64 = tpu.matmul %58, %25, %cst_16 {dimension_numbers = #tpu.dot_dimension_numbers<[1], [0], [0], [1], [0, 0, 1, 1], [], []>} : vector<8x16xf32>, vector<16x48xf32>, vector<8x48xf32> -> vector<8x48xf32>
    %65 = arith.addf %64, %29 : vector<8x48xf32>
    %66 = vector.extract_strided_slice %63 {offsets = [0, 0], sizes = [8, 32], strides = [1, 1]} : vector<8x48xf32> to vector<8x32xf32>
    %67 = vector.extract_strided_slice %65 {offsets = [0, 0], sizes = [8, 32], strides = [1, 1]} : vector<8x48xf32> to vector<8x32xf32>
    %68 = arith.addf %66, %67 : vector<8x32xf32>
    %69 = arith.negf %68 : vector<8x32xf32>
    %70 = math.exp %69 : vector<8x32xf32>
    %cst_17 = arith.constant 1.000000e+00 : f32
    %71 = vector.broadcast %cst_17 : f32 to vector<8x32xf32>
    %72 = arith.addf %71, %70 : vector<8x32xf32>
    %73 = arith.divf %71, %72 : vector<8x32xf32>
    %74 = vector.extract_strided_slice %73 {offsets = [0, 0], sizes = [8, 16], strides = [1, 1]} : vector<8x32xf32> to vector<8x16xf32>
    %75 = vector.extract_strided_slice %73 {offsets = [0, 16], sizes = [8, 16], strides = [1, 1]} : vector<8x32xf32> to vector<8x16xf32>
    %76 = vector.extract_strided_slice %63 {offsets = [0, 32], sizes = [8, 16], strides = [1, 1]} : vector<8x48xf32> to vector<8x16xf32>
    %77 = vector.extract_strided_slice %65 {offsets = [0, 32], sizes = [8, 16], strides = [1, 1]} : vector<8x48xf32> to vector<8x16xf32>
    %78 = arith.mulf %74, %77 : vector<8x16xf32>
    %79 = arith.addf %76, %78 : vector<8x16xf32>
    %80 = math.tanh %79 : vector<8x16xf32>
    %cst_18 = arith.constant 1.000000e+00 : f32
    %81 = vector.broadcast %cst_18 : f32 to vector<8x16xf32>
    %82 = arith.subf %81, %75 : vector<8x16xf32>
    %83 = arith.mulf %82, %80 : vector<8x16xf32>
    %84 = arith.mulf %75, %58 : vector<8x16xf32>
    %85 = arith.addf %83, %84 : vector<8x16xf32>
    %cst_19 = arith.constant 1.000000e+00 : f32
    %86 = vector.broadcast %cst_19 : f32 to vector<8x1xf32>
    %87 = arith.cmpf ogt, %18, %86 : vector<8x1xf32>
    %88 = vector.shape_cast %87 : vector<8x1xi1> to vector<8x1xi1>
    %89 = vector.broadcast %88 : vector<8x1xi1> to vector<8x16xi1>
    %90 = arith.select %89, %85, %58 : vector<8x16xi1>, vector<8x16xf32>
    %cst_20 = arith.constant 0.000000e+00 : f32
    %91 = vector.broadcast %cst_20 : f32 to vector<8x16xf32>
    %92 = vector.shape_cast %87 : vector<8x1xi1> to vector<8x1xi1>
    %93 = vector.broadcast %92 : vector<8x1xi1> to vector<8x16xi1>
    %94 = arith.select %93, %85, %91 : vector<8x16xi1>, vector<8x16xf32>
    %95 = vector.extract_strided_slice %23 {offsets = [40, 0], sizes = [8, 48], strides = [1, 1]} : vector<64x48xf32> to vector<8x48xf32>
    %cst_21 = arith.constant dense<0.000000e+00> : vector<8x48xf32>
    %96 = tpu.matmul %90, %25, %cst_21 {dimension_numbers = #tpu.dot_dimension_numbers<[1], [0], [0], [1], [0, 0, 1, 1], [], []>} : vector<8x16xf32>, vector<16x48xf32>, vector<8x48xf32> -> vector<8x48xf32>
    %97 = arith.addf %96, %29 : vector<8x48xf32>
    %98 = vector.extract_strided_slice %95 {offsets = [0, 0], sizes = [8, 32], strides = [1, 1]} : vector<8x48xf32> to vector<8x32xf32>
    %99 = vector.extract_strided_slice %97 {offsets = [0, 0], sizes = [8, 32], strides = [1, 1]} : vector<8x48xf32> to vector<8x32xf32>
    %100 = arith.addf %98, %99 : vector<8x32xf32>
    %101 = arith.negf %100 : vector<8x32xf32>
    %102 = math.exp %101 : vector<8x32xf32>
    %cst_22 = arith.constant 1.000000e+00 : f32
    %103 = vector.broadcast %cst_22 : f32 to vector<8x32xf32>
    %104 = arith.addf %103, %102 : vector<8x32xf32>
    %105 = arith.divf %103, %104 : vector<8x32xf32>
    %106 = vector.extract_strided_slice %105 {offsets = [0, 0], sizes = [8, 16], strides = [1, 1]} : vector<8x32xf32> to vector<8x16xf32>
    %107 = vector.extract_strided_slice %105 {offsets = [0, 16], sizes = [8, 16], strides = [1, 1]} : vector<8x32xf32> to vector<8x16xf32>
    %108 = vector.extract_strided_slice %95 {offsets = [0, 32], sizes = [8, 16], strides = [1, 1]} : vector<8x48xf32> to vector<8x16xf32>
    %109 = vector.extract_strided_slice %97 {offsets = [0, 32], sizes = [8, 16], strides = [1, 1]} : vector<8x48xf32> to vector<8x16xf32>
    %110 = arith.mulf %106, %109 : vector<8x16xf32>
    %111 = arith.addf %108, %110 : vector<8x16xf32>
    %112 = math.tanh %111 : vector<8x16xf32>
    %cst_23 = arith.constant 1.000000e+00 : f32
    %113 = vector.broadcast %cst_23 : f32 to vector<8x16xf32>
    %114 = arith.subf %113, %107 : vector<8x16xf32>
    %115 = arith.mulf %114, %112 : vector<8x16xf32>
    %116 = arith.mulf %107, %90 : vector<8x16xf32>
    %117 = arith.addf %115, %116 : vector<8x16xf32>
    %cst_24 = arith.constant 2.000000e+00 : f32
    %118 = vector.broadcast %cst_24 : f32 to vector<8x1xf32>
    %119 = arith.cmpf ogt, %18, %118 : vector<8x1xf32>
    %120 = vector.shape_cast %119 : vector<8x1xi1> to vector<8x1xi1>
    %121 = vector.broadcast %120 : vector<8x1xi1> to vector<8x16xi1>
    %122 = arith.select %121, %117, %90 : vector<8x16xi1>, vector<8x16xf32>
    %cst_25 = arith.constant 0.000000e+00 : f32
    %123 = vector.broadcast %cst_25 : f32 to vector<8x16xf32>
    %124 = vector.shape_cast %119 : vector<8x1xi1> to vector<8x1xi1>
    %125 = vector.broadcast %124 : vector<8x1xi1> to vector<8x16xi1>
    %126 = arith.select %125, %117, %123 : vector<8x16xi1>, vector<8x16xf32>
    %127 = vector.extract_strided_slice %23 {offsets = [32, 0], sizes = [8, 48], strides = [1, 1]} : vector<64x48xf32> to vector<8x48xf32>
    %cst_26 = arith.constant dense<0.000000e+00> : vector<8x48xf32>
    %128 = tpu.matmul %122, %25, %cst_26 {dimension_numbers = #tpu.dot_dimension_numbers<[1], [0], [0], [1], [0, 0, 1, 1], [], []>} : vector<8x16xf32>, vector<16x48xf32>, vector<8x48xf32> -> vector<8x48xf32>
    %129 = arith.addf %128, %29 : vector<8x48xf32>
    %130 = vector.extract_strided_slice %127 {offsets = [0, 0], sizes = [8, 32], strides = [1, 1]} : vector<8x48xf32> to vector<8x32xf32>
    %131 = vector.extract_strided_slice %129 {offsets = [0, 0], sizes = [8, 32], strides = [1, 1]} : vector<8x48xf32> to vector<8x32xf32>
    %132 = arith.addf %130, %131 : vector<8x32xf32>
    %133 = arith.negf %132 : vector<8x32xf32>
    %134 = math.exp %133 : vector<8x32xf32>
    %cst_27 = arith.constant 1.000000e+00 : f32
    %135 = vector.broadcast %cst_27 : f32 to vector<8x32xf32>
    %136 = arith.addf %135, %134 : vector<8x32xf32>
    %137 = arith.divf %135, %136 : vector<8x32xf32>
    %138 = vector.extract_strided_slice %137 {offsets = [0, 0], sizes = [8, 16], strides = [1, 1]} : vector<8x32xf32> to vector<8x16xf32>
    %139 = vector.extract_strided_slice %137 {offsets = [0, 16], sizes = [8, 16], strides = [1, 1]} : vector<8x32xf32> to vector<8x16xf32>
    %140 = vector.extract_strided_slice %127 {offsets = [0, 32], sizes = [8, 16], strides = [1, 1]} : vector<8x48xf32> to vector<8x16xf32>
    %141 = vector.extract_strided_slice %129 {offsets = [0, 32], sizes = [8, 16], strides = [1, 1]} : vector<8x48xf32> to vector<8x16xf32>
    %142 = arith.mulf %138, %141 : vector<8x16xf32>
    %143 = arith.addf %140, %142 : vector<8x16xf32>
    %144 = math.tanh %143 : vector<8x16xf32>
    %cst_28 = arith.constant 1.000000e+00 : f32
    %145 = vector.broadcast %cst_28 : f32 to vector<8x16xf32>
    %146 = arith.subf %145, %139 : vector<8x16xf32>
    %147 = arith.mulf %146, %144 : vector<8x16xf32>
    %148 = arith.mulf %139, %122 : vector<8x16xf32>
    %149 = arith.addf %147, %148 : vector<8x16xf32>
    %cst_29 = arith.constant 3.000000e+00 : f32
    %150 = vector.broadcast %cst_29 : f32 to vector<8x1xf32>
    %151 = arith.cmpf ogt, %18, %150 : vector<8x1xf32>
    %152 = vector.shape_cast %151 : vector<8x1xi1> to vector<8x1xi1>
    %153 = vector.broadcast %152 : vector<8x1xi1> to vector<8x16xi1>
    %154 = arith.select %153, %149, %122 : vector<8x16xi1>, vector<8x16xf32>
    %cst_30 = arith.constant 0.000000e+00 : f32
    %155 = vector.broadcast %cst_30 : f32 to vector<8x16xf32>
    %156 = vector.shape_cast %151 : vector<8x1xi1> to vector<8x1xi1>
    %157 = vector.broadcast %156 : vector<8x1xi1> to vector<8x16xi1>
    %158 = arith.select %157, %149, %155 : vector<8x16xi1>, vector<8x16xf32>
    %159 = vector.extract_strided_slice %23 {offsets = [24, 0], sizes = [8, 48], strides = [1, 1]} : vector<64x48xf32> to vector<8x48xf32>
    %cst_31 = arith.constant dense<0.000000e+00> : vector<8x48xf32>
    %160 = tpu.matmul %154, %25, %cst_31 {dimension_numbers = #tpu.dot_dimension_numbers<[1], [0], [0], [1], [0, 0, 1, 1], [], []>} : vector<8x16xf32>, vector<16x48xf32>, vector<8x48xf32> -> vector<8x48xf32>
    %161 = arith.addf %160, %29 : vector<8x48xf32>
    %162 = vector.extract_strided_slice %159 {offsets = [0, 0], sizes = [8, 32], strides = [1, 1]} : vector<8x48xf32> to vector<8x32xf32>
    %163 = vector.extract_strided_slice %161 {offsets = [0, 0], sizes = [8, 32], strides = [1, 1]} : vector<8x48xf32> to vector<8x32xf32>
    %164 = arith.addf %162, %163 : vector<8x32xf32>
    %165 = arith.negf %164 : vector<8x32xf32>
    %166 = math.exp %165 : vector<8x32xf32>
    %cst_32 = arith.constant 1.000000e+00 : f32
    %167 = vector.broadcast %cst_32 : f32 to vector<8x32xf32>
    %168 = arith.addf %167, %166 : vector<8x32xf32>
    %169 = arith.divf %167, %168 : vector<8x32xf32>
    %170 = vector.extract_strided_slice %169 {offsets = [0, 0], sizes = [8, 16], strides = [1, 1]} : vector<8x32xf32> to vector<8x16xf32>
    %171 = vector.extract_strided_slice %169 {offsets = [0, 16], sizes = [8, 16], strides = [1, 1]} : vector<8x32xf32> to vector<8x16xf32>
    %172 = vector.extract_strided_slice %159 {offsets = [0, 32], sizes = [8, 16], strides = [1, 1]} : vector<8x48xf32> to vector<8x16xf32>
    %173 = vector.extract_strided_slice %161 {offsets = [0, 32], sizes = [8, 16], strides = [1, 1]} : vector<8x48xf32> to vector<8x16xf32>
    %174 = arith.mulf %170, %173 : vector<8x16xf32>
    %175 = arith.addf %172, %174 : vector<8x16xf32>
    %176 = math.tanh %175 : vector<8x16xf32>
    %cst_33 = arith.constant 1.000000e+00 : f32
    %177 = vector.broadcast %cst_33 : f32 to vector<8x16xf32>
    %178 = arith.subf %177, %171 : vector<8x16xf32>
    %179 = arith.mulf %178, %176 : vector<8x16xf32>
    %180 = arith.mulf %171, %154 : vector<8x16xf32>
    %181 = arith.addf %179, %180 : vector<8x16xf32>
    %cst_34 = arith.constant 4.000000e+00 : f32
    %182 = vector.broadcast %cst_34 : f32 to vector<8x1xf32>
    %183 = arith.cmpf ogt, %18, %182 : vector<8x1xf32>
    %184 = vector.shape_cast %183 : vector<8x1xi1> to vector<8x1xi1>
    %185 = vector.broadcast %184 : vector<8x1xi1> to vector<8x16xi1>
    %186 = arith.select %185, %181, %154 : vector<8x16xi1>, vector<8x16xf32>
    %cst_35 = arith.constant 0.000000e+00 : f32
    %187 = vector.broadcast %cst_35 : f32 to vector<8x16xf32>
    %188 = vector.shape_cast %183 : vector<8x1xi1> to vector<8x1xi1>
    %189 = vector.broadcast %188 : vector<8x1xi1> to vector<8x16xi1>
    %190 = arith.select %189, %181, %187 : vector<8x16xi1>, vector<8x16xf32>
    %191 = vector.extract_strided_slice %23 {offsets = [16, 0], sizes = [8, 48], strides = [1, 1]} : vector<64x48xf32> to vector<8x48xf32>
    %cst_36 = arith.constant dense<0.000000e+00> : vector<8x48xf32>
    %192 = tpu.matmul %186, %25, %cst_36 {dimension_numbers = #tpu.dot_dimension_numbers<[1], [0], [0], [1], [0, 0, 1, 1], [], []>} : vector<8x16xf32>, vector<16x48xf32>, vector<8x48xf32> -> vector<8x48xf32>
    %193 = arith.addf %192, %29 : vector<8x48xf32>
    %194 = vector.extract_strided_slice %191 {offsets = [0, 0], sizes = [8, 32], strides = [1, 1]} : vector<8x48xf32> to vector<8x32xf32>
    %195 = vector.extract_strided_slice %193 {offsets = [0, 0], sizes = [8, 32], strides = [1, 1]} : vector<8x48xf32> to vector<8x32xf32>
    %196 = arith.addf %194, %195 : vector<8x32xf32>
    %197 = arith.negf %196 : vector<8x32xf32>
    %198 = math.exp %197 : vector<8x32xf32>
    %cst_37 = arith.constant 1.000000e+00 : f32
    %199 = vector.broadcast %cst_37 : f32 to vector<8x32xf32>
    %200 = arith.addf %199, %198 : vector<8x32xf32>
    %201 = arith.divf %199, %200 : vector<8x32xf32>
    %202 = vector.extract_strided_slice %201 {offsets = [0, 0], sizes = [8, 16], strides = [1, 1]} : vector<8x32xf32> to vector<8x16xf32>
    %203 = vector.extract_strided_slice %201 {offsets = [0, 16], sizes = [8, 16], strides = [1, 1]} : vector<8x32xf32> to vector<8x16xf32>
    %204 = vector.extract_strided_slice %191 {offsets = [0, 32], sizes = [8, 16], strides = [1, 1]} : vector<8x48xf32> to vector<8x16xf32>
    %205 = vector.extract_strided_slice %193 {offsets = [0, 32], sizes = [8, 16], strides = [1, 1]} : vector<8x48xf32> to vector<8x16xf32>
    %206 = arith.mulf %202, %205 : vector<8x16xf32>
    %207 = arith.addf %204, %206 : vector<8x16xf32>
    %208 = math.tanh %207 : vector<8x16xf32>
    %cst_38 = arith.constant 1.000000e+00 : f32
    %209 = vector.broadcast %cst_38 : f32 to vector<8x16xf32>
    %210 = arith.subf %209, %203 : vector<8x16xf32>
    %211 = arith.mulf %210, %208 : vector<8x16xf32>
    %212 = arith.mulf %203, %186 : vector<8x16xf32>
    %213 = arith.addf %211, %212 : vector<8x16xf32>
    %cst_39 = arith.constant 5.000000e+00 : f32
    %214 = vector.broadcast %cst_39 : f32 to vector<8x1xf32>
    %215 = arith.cmpf ogt, %18, %214 : vector<8x1xf32>
    %216 = vector.shape_cast %215 : vector<8x1xi1> to vector<8x1xi1>
    %217 = vector.broadcast %216 : vector<8x1xi1> to vector<8x16xi1>
    %218 = arith.select %217, %213, %186 : vector<8x16xi1>, vector<8x16xf32>
    %cst_40 = arith.constant 0.000000e+00 : f32
    %219 = vector.broadcast %cst_40 : f32 to vector<8x16xf32>
    %220 = vector.shape_cast %215 : vector<8x1xi1> to vector<8x1xi1>
    %221 = vector.broadcast %220 : vector<8x1xi1> to vector<8x16xi1>
    %222 = arith.select %221, %213, %219 : vector<8x16xi1>, vector<8x16xf32>
    %223 = vector.extract_strided_slice %23 {offsets = [8, 0], sizes = [8, 48], strides = [1, 1]} : vector<64x48xf32> to vector<8x48xf32>
    %cst_41 = arith.constant dense<0.000000e+00> : vector<8x48xf32>
    %224 = tpu.matmul %218, %25, %cst_41 {dimension_numbers = #tpu.dot_dimension_numbers<[1], [0], [0], [1], [0, 0, 1, 1], [], []>} : vector<8x16xf32>, vector<16x48xf32>, vector<8x48xf32> -> vector<8x48xf32>
    %225 = arith.addf %224, %29 : vector<8x48xf32>
    %226 = vector.extract_strided_slice %223 {offsets = [0, 0], sizes = [8, 32], strides = [1, 1]} : vector<8x48xf32> to vector<8x32xf32>
    %227 = vector.extract_strided_slice %225 {offsets = [0, 0], sizes = [8, 32], strides = [1, 1]} : vector<8x48xf32> to vector<8x32xf32>
    %228 = arith.addf %226, %227 : vector<8x32xf32>
    %229 = arith.negf %228 : vector<8x32xf32>
    %230 = math.exp %229 : vector<8x32xf32>
    %cst_42 = arith.constant 1.000000e+00 : f32
    %231 = vector.broadcast %cst_42 : f32 to vector<8x32xf32>
    %232 = arith.addf %231, %230 : vector<8x32xf32>
    %233 = arith.divf %231, %232 : vector<8x32xf32>
    %234 = vector.extract_strided_slice %233 {offsets = [0, 0], sizes = [8, 16], strides = [1, 1]} : vector<8x32xf32> to vector<8x16xf32>
    %235 = vector.extract_strided_slice %233 {offsets = [0, 16], sizes = [8, 16], strides = [1, 1]} : vector<8x32xf32> to vector<8x16xf32>
    %236 = vector.extract_strided_slice %223 {offsets = [0, 32], sizes = [8, 16], strides = [1, 1]} : vector<8x48xf32> to vector<8x16xf32>
    %237 = vector.extract_strided_slice %225 {offsets = [0, 32], sizes = [8, 16], strides = [1, 1]} : vector<8x48xf32> to vector<8x16xf32>
    %238 = arith.mulf %234, %237 : vector<8x16xf32>
    %239 = arith.addf %236, %238 : vector<8x16xf32>
    %240 = math.tanh %239 : vector<8x16xf32>
    %cst_43 = arith.constant 1.000000e+00 : f32
    %241 = vector.broadcast %cst_43 : f32 to vector<8x16xf32>
    %242 = arith.subf %241, %235 : vector<8x16xf32>
    %243 = arith.mulf %242, %240 : vector<8x16xf32>
    %244 = arith.mulf %235, %218 : vector<8x16xf32>
    %245 = arith.addf %243, %244 : vector<8x16xf32>
    %cst_44 = arith.constant 6.000000e+00 : f32
    %246 = vector.broadcast %cst_44 : f32 to vector<8x1xf32>
    %247 = arith.cmpf ogt, %18, %246 : vector<8x1xf32>
    %248 = vector.shape_cast %247 : vector<8x1xi1> to vector<8x1xi1>
    %249 = vector.broadcast %248 : vector<8x1xi1> to vector<8x16xi1>
    %250 = arith.select %249, %245, %218 : vector<8x16xi1>, vector<8x16xf32>
    %cst_45 = arith.constant 0.000000e+00 : f32
    %251 = vector.broadcast %cst_45 : f32 to vector<8x16xf32>
    %252 = vector.shape_cast %247 : vector<8x1xi1> to vector<8x1xi1>
    %253 = vector.broadcast %252 : vector<8x1xi1> to vector<8x16xi1>
    %254 = arith.select %253, %245, %251 : vector<8x16xi1>, vector<8x16xf32>
    %255 = vector.extract_strided_slice %23 {offsets = [0, 0], sizes = [8, 48], strides = [1, 1]} : vector<64x48xf32> to vector<8x48xf32>
    %cst_46 = arith.constant dense<0.000000e+00> : vector<8x48xf32>
    %256 = tpu.matmul %250, %25, %cst_46 {dimension_numbers = #tpu.dot_dimension_numbers<[1], [0], [0], [1], [0, 0, 1, 1], [], []>} : vector<8x16xf32>, vector<16x48xf32>, vector<8x48xf32> -> vector<8x48xf32>
    %257 = arith.addf %256, %29 : vector<8x48xf32>
    %258 = vector.extract_strided_slice %255 {offsets = [0, 0], sizes = [8, 32], strides = [1, 1]} : vector<8x48xf32> to vector<8x32xf32>
    %259 = vector.extract_strided_slice %257 {offsets = [0, 0], sizes = [8, 32], strides = [1, 1]} : vector<8x48xf32> to vector<8x32xf32>
    %260 = arith.addf %258, %259 : vector<8x32xf32>
    %261 = arith.negf %260 : vector<8x32xf32>
    %262 = math.exp %261 : vector<8x32xf32>
    %cst_47 = arith.constant 1.000000e+00 : f32
    %263 = vector.broadcast %cst_47 : f32 to vector<8x32xf32>
    %264 = arith.addf %263, %262 : vector<8x32xf32>
    %265 = arith.divf %263, %264 : vector<8x32xf32>
    %266 = vector.extract_strided_slice %265 {offsets = [0, 0], sizes = [8, 16], strides = [1, 1]} : vector<8x32xf32> to vector<8x16xf32>
    %267 = vector.extract_strided_slice %265 {offsets = [0, 16], sizes = [8, 16], strides = [1, 1]} : vector<8x32xf32> to vector<8x16xf32>
    %268 = vector.extract_strided_slice %255 {offsets = [0, 32], sizes = [8, 16], strides = [1, 1]} : vector<8x48xf32> to vector<8x16xf32>
    %269 = vector.extract_strided_slice %257 {offsets = [0, 32], sizes = [8, 16], strides = [1, 1]} : vector<8x48xf32> to vector<8x16xf32>
    %270 = arith.mulf %266, %269 : vector<8x16xf32>
    %271 = arith.addf %268, %270 : vector<8x16xf32>
    %272 = math.tanh %271 : vector<8x16xf32>
    %cst_48 = arith.constant 1.000000e+00 : f32
    %273 = vector.broadcast %cst_48 : f32 to vector<8x16xf32>
    %274 = arith.subf %273, %267 : vector<8x16xf32>
    %275 = arith.mulf %274, %272 : vector<8x16xf32>
    %276 = arith.mulf %267, %250 : vector<8x16xf32>
    %277 = arith.addf %275, %276 : vector<8x16xf32>
    %cst_49 = arith.constant 7.000000e+00 : f32
    %278 = vector.broadcast %cst_49 : f32 to vector<8x1xf32>
    %279 = arith.cmpf ogt, %18, %278 : vector<8x1xf32>
    %cst_50 = arith.constant 0.000000e+00 : f32
    %280 = vector.broadcast %cst_50 : f32 to vector<8x16xf32>
    %281 = vector.shape_cast %279 : vector<8x1xi1> to vector<8x1xi1>
    %282 = vector.broadcast %281 : vector<8x1xi1> to vector<8x16xi1>
    %283 = arith.select %282, %277, %280 : vector<8x16xi1>, vector<8x16xf32>
    %284 = tpu.concatenate %62, %94, %126, %158, %190, %222, %254, %283 in 0 : vector<8x16xf32>, vector<8x16xf32>, vector<8x16xf32>, vector<8x16xf32>, vector<8x16xf32>, vector<8x16xf32>, vector<8x16xf32>, vector<8x16xf32> -> vector<64x16xf32>
    %cst_51 = arith.constant dense<0.000000e+00> : vector<64x8xf32>
    %285 = tpu.matmul %284, %26, %cst_51 {dimension_numbers = #tpu.dot_dimension_numbers<[1], [0], [0], [1], [0, 0, 1, 1], [], []>} : vector<64x16xf32>, vector<16x8xf32>, vector<64x8xf32> -> vector<64x8xf32>
    %c0_52 = arith.constant 0 : index
    %c96 = arith.constant 96 : index
    %286 = vector.load %arg10[%c0_52, %c96] : memref<1x264xf32, #tpu.memory_space<vmem>>, vector<1x8xf32>
    %287 = vector.broadcast %286 : vector<1x8xf32> to vector<64x8xf32>
    %288 = arith.addf %285, %287 : vector<64x8xf32>
    %c0_53 = arith.constant 0 : index
    %c0_54 = arith.constant 0 : index
    %289 = vector.load %arg6[%c0_53, %c0_54] : memref<8x40xf32, #tpu.memory_space<vmem>>, vector<8x40xf32>
    %290 = vector.extract_strided_slice %289 {offsets = [0, 0], sizes = [8, 8], strides = [1, 1]} : vector<8x40xf32> to vector<8x8xf32>
    %291 = vector.extract_strided_slice %289 {offsets = [0, 8], sizes = [8, 32], strides = [1, 1]} : vector<8x40xf32> to vector<8x32xf32>
    %292 = vector.extract_strided_slice %288 {offsets = [56, 0], sizes = [8, 8], strides = [1, 1]} : vector<64x8xf32> to vector<8x8xf32>
    %cst_55 = arith.constant dense<0.000000e+00> : vector<8x8xf32>
    %293 = tpu.matmul %292, %290, %cst_55 {dimension_numbers = #tpu.dot_dimension_numbers<[1], [0], [0], [1], [0, 0, 1, 1], [], []>} : vector<8x8xf32>, vector<8x8xf32>, vector<8x8xf32> -> vector<8x8xf32>
    %c0_56 = arith.constant 0 : index
    %c104 = arith.constant 104 : index
    %294 = vector.load %arg10[%c0_56, %c104] : memref<1x264xf32, #tpu.memory_space<vmem>>, vector<1x8xf32>
    %295 = vector.broadcast %294 : vector<1x8xf32> to vector<8x8xf32>
    %296 = arith.addf %293, %295 : vector<8x8xf32>
    %297 = vector.extract_strided_slice %296 {offsets = [0, 0], sizes = [8, 4], strides = [1, 1]} : vector<8x8xf32> to vector<8x4xf32>
    %298 = vector.extract_strided_slice %296 {offsets = [0, 4], sizes = [8, 4], strides = [1, 1]} : vector<8x8xf32> to vector<8x4xf32>
    %299 = math.exp %298 : vector<8x4xf32>
    %c0_57 = arith.constant 0 : index
    %c0_58 = arith.constant 0 : index
    %300 = vector.load %arg1[%c0_57, %c0_58] : memref<8x4xf32, #tpu.memory_space<vmem>>, vector<8x4xf32>
    %301 = arith.mulf %299, %300 : vector<8x4xf32>
    %302 = arith.addf %297, %301 : vector<8x4xf32>
    %cst_59 = arith.constant dense<0.000000e+00> : vector<64x32xf32>
    %303 = tpu.matmul %288, %291, %cst_59 {dimension_numbers = #tpu.dot_dimension_numbers<[1], [0], [0], [1], [0, 0, 1, 1], [], []>} : vector<64x8xf32>, vector<8x32xf32>, vector<64x32xf32> -> vector<64x32xf32>
    %c0_60 = arith.constant 0 : index
    %c112 = arith.constant 112 : index
    %304 = vector.load %arg10[%c0_60, %c112] : memref<1x264xf32, #tpu.memory_space<vmem>>, vector<1x32xf32>
    %305 = vector.broadcast %304 : vector<1x32xf32> to vector<64x32xf32>
    %306 = arith.addf %303, %305 : vector<64x32xf32>
    %c0_61 = arith.constant 0 : index
    %c144 = arith.constant 144 : index
    %307 = vector.load %arg10[%c0_61, %c144] : memref<1x264xf32, #tpu.memory_space<vmem>>, vector<1x64xf32>
    %308 = vector.shape_cast %307 : vector<1x64xf32> to vector<1x64xf32>
    %309 = vector.broadcast %308 : vector<1x64xf32> to vector<64x64xf32>
    %310 = tpu.concatenate %306, %309 in 1 : vector<64x32xf32>, vector<64x64xf32> -> vector<64x96xf32>
    %c0_62 = arith.constant 0 : index
    %c208 = arith.constant 208 : index
    %311 = vector.load %arg10[%c0_62, %c208] : memref<1x264xf32, #tpu.memory_space<vmem>>, vector<1x36xf32>
    %312 = vector.shape_cast %311 : vector<1x36xf32> to vector<1x36xf32>
    %313 = vector.broadcast %312 : vector<1x36xf32> to vector<8x36xf32>
    %c0_63 = arith.constant 0 : index
    %c244 = arith.constant 244 : index
    %314 = vector.load %arg10[%c0_63, %c244] : memref<1x264xf32, #tpu.memory_space<vmem>>, vector<1x8xf32>
    %315 = vector.shape_cast %314 : vector<1x8xf32> to vector<1x8xf32>
    %316 = vector.broadcast %315 : vector<1x8xf32> to vector<8x8xf32>
    %c0_64 = arith.constant 0 : index
    %c0_65 = arith.constant 0 : index
    %317 = vector.load %arg7[%c0_64, %c0_65] : memref<4x100xf32, #tpu.memory_space<vmem>>, vector<4x100xf32>
    %318 = vector.extract_strided_slice %317 {offsets = [0, 0], sizes = [4, 96], strides = [1, 1]} : vector<4x100xf32> to vector<4x96xf32>
    %319 = vector.extract_strided_slice %317 {offsets = [0, 96], sizes = [4, 4], strides = [1, 1]} : vector<4x100xf32> to vector<4x4xf32>
    %c0_66 = arith.constant 0 : index
    %c0_67 = arith.constant 0 : index
    %320 = vector.load %arg8[%c0_66, %c0_67] : memref<96x36xf32, #tpu.memory_space<vmem>>, vector<96x36xf32>
    %c0_68 = arith.constant 0 : index
    %c0_69 = arith.constant 0 : index
    %321 = vector.load %arg9[%c0_68, %c0_69] : memref<32x8xf32, #tpu.memory_space<vmem>>, vector<32x8xf32>
    %cst_70 = arith.constant 0.000000e+00 : f32
    %322 = vector.broadcast %cst_70 : f32 to vector<8x4xf32>
    %323 = vector.extract_strided_slice %310 {offsets = [48, 0], sizes = [8, 96], strides = [1, 1]} : vector<64x96xf32> to vector<8x96xf32>
    %c0_71 = arith.constant 0 : index
    %324 = memref.load %arg3[%c0_71] : memref<7xf32, #tpu.memory_space<smem>>
    %cst_72 = arith.constant dense<0.000000e+00> : vector<8x96xf32>
    %325 = tpu.matmul %302, %318, %cst_72 {dimension_numbers = #tpu.dot_dimension_numbers<[1], [0], [0], [1], [0, 0, 1, 1], [], []>} : vector<8x4xf32>, vector<4x96xf32>, vector<8x96xf32> -> vector<8x96xf32>
    %326 = arith.addf %325, %323 : vector<8x96xf32>
    %cst_73 = arith.constant 0.000000e+00 : f32
    %327 = vector.broadcast %cst_73 : f32 to vector<8x96xf32>
    %328 = arith.maximumf %326, %327 : vector<8x96xf32>
    %329 = vector.broadcast %cst_73 : f32 to vector<8x96xf32>
    %330 = arith.subf %326, %329 : vector<8x96xf32>
    %331 = arith.cmpf one, %330, %330 : vector<8x96xf32>
    %332 = vector.broadcast %cst_73 : f32 to vector<8x96xf32>
    %333 = arith.addf %326, %332 : vector<8x96xf32>
    %334 = math.absf %330 : vector<8x96xf32>
    %cst_74 = arith.constant 0.000000e+00 : f32
    %335 = vector.broadcast %cst_74 : f32 to vector<8x96xf32>
    %336 = arith.subf %335, %334 : vector<8x96xf32>
    %337 = math.exp %336 : vector<8x96xf32>
    %338 = math.log1p %337 : vector<8x96xf32>
    %339 = arith.addf %328, %338 : vector<8x96xf32>
    %340 = arith.select %331, %333, %339 : vector<8x96xi1>, vector<8x96xf32>
    %cst_75 = arith.constant dense<0.000000e+00> : vector<8x36xf32>
    %341 = tpu.matmul %340, %320, %cst_75 {dimension_numbers = #tpu.dot_dimension_numbers<[1], [0], [0], [1], [0, 0, 1, 1], [], []>} : vector<8x96xf32>, vector<96x36xf32>, vector<8x36xf32> -> vector<8x36xf32>
    %342 = arith.addf %341, %313 : vector<8x36xf32>
    %343 = vector.extract_strided_slice %342 {offsets = [0, 0], sizes = [8, 32], strides = [1, 1]} : vector<8x36xf32> to vector<8x32xf32>
    %cst_76 = arith.constant 0.000000e+00 : f32
    %344 = vector.broadcast %cst_76 : f32 to vector<8x32xf32>
    %345 = arith.maximumf %343, %344 : vector<8x32xf32>
    %346 = vector.broadcast %cst_76 : f32 to vector<8x32xf32>
    %347 = arith.subf %343, %346 : vector<8x32xf32>
    %348 = arith.cmpf one, %347, %347 : vector<8x32xf32>
    %349 = vector.broadcast %cst_76 : f32 to vector<8x32xf32>
    %350 = arith.addf %343, %349 : vector<8x32xf32>
    %351 = math.absf %347 : vector<8x32xf32>
    %cst_77 = arith.constant 0.000000e+00 : f32
    %352 = vector.broadcast %cst_77 : f32 to vector<8x32xf32>
    %353 = arith.subf %352, %351 : vector<8x32xf32>
    %354 = math.exp %353 : vector<8x32xf32>
    %355 = math.log1p %354 : vector<8x32xf32>
    %356 = arith.addf %345, %355 : vector<8x32xf32>
    %357 = arith.select %348, %350, %356 : vector<8x32xi1>, vector<8x32xf32>
    %358 = vector.extract_strided_slice %342 {offsets = [0, 32], sizes = [8, 4], strides = [1, 1]} : vector<8x36xf32> to vector<8x4xf32>
    %359 = arith.negf %358 : vector<8x4xf32>
    %360 = math.exp %359 : vector<8x4xf32>
    %cst_78 = arith.constant 1.000000e+00 : f32
    %361 = vector.broadcast %cst_78 : f32 to vector<8x4xf32>
    %362 = arith.addf %361, %360 : vector<8x4xf32>
    %363 = arith.divf %361, %362 : vector<8x4xf32>
    %cst_79 = arith.constant dense<0.000000e+00> : vector<8x8xf32>
    %364 = tpu.matmul %357, %321, %cst_79 {dimension_numbers = #tpu.dot_dimension_numbers<[1], [0], [0], [1], [0, 0, 1, 1], [], []>} : vector<8x32xf32>, vector<32x8xf32>, vector<8x8xf32> -> vector<8x8xf32>
    %365 = arith.addf %364, %316 : vector<8x8xf32>
    %366 = vector.extract_strided_slice %365 {offsets = [0, 0], sizes = [8, 4], strides = [1, 1]} : vector<8x8xf32> to vector<8x4xf32>
    %367 = vector.extract_strided_slice %365 {offsets = [0, 4], sizes = [8, 4], strides = [1, 1]} : vector<8x8xf32> to vector<8x4xf32>
    %368 = arith.subf %366, %367 : vector<8x4xf32>
    %369 = arith.divf %368, %363 : vector<8x4xf32>
    %cst_80 = arith.constant 5.000000e-01 : f32
    %370 = arith.mulf %cst_80, %324 : f32
    %371 = arith.mulf %369, %369 : vector<8x4xf32>
    %372 = vector.broadcast %370 : f32 to vector<8x4xf32>
    %373 = arith.mulf %372, %371 : vector<8x4xf32>
    %374 = arith.addf %322, %373 : vector<8x4xf32>
    %375 = vector.broadcast %324 : f32 to vector<8x4xf32>
    %376 = arith.mulf %366, %375 : vector<8x4xf32>
    %377 = arith.addf %302, %376 : vector<8x4xf32>
    %c0_81 = arith.constant 0 : index
    %c0_82 = arith.constant 0 : index
    %378 = vector.load %arg2[%c0_81, %c0_82] : memref<112x4xf32, #tpu.memory_space<vmem>>, vector<8x4xf32>
    %379 = arith.mulf %363, %378 : vector<8x4xf32>
    %380 = arith.addf %377, %379 : vector<8x4xf32>
    %cst_83 = arith.constant dense<0.000000e+00> : vector<8x96xf32>
    %381 = tpu.matmul %380, %318, %cst_83 {dimension_numbers = #tpu.dot_dimension_numbers<[1], [0], [0], [1], [0, 0, 1, 1], [], []>} : vector<8x4xf32>, vector<4x96xf32>, vector<8x96xf32> -> vector<8x96xf32>
    %382 = arith.addf %381, %323 : vector<8x96xf32>
    %cst_84 = arith.constant 0.000000e+00 : f32
    %383 = vector.broadcast %cst_84 : f32 to vector<8x96xf32>
    %384 = arith.maximumf %382, %383 : vector<8x96xf32>
    %385 = vector.broadcast %cst_84 : f32 to vector<8x96xf32>
    %386 = arith.subf %382, %385 : vector<8x96xf32>
    %387 = arith.cmpf one, %386, %386 : vector<8x96xf32>
    %388 = vector.broadcast %cst_84 : f32 to vector<8x96xf32>
    %389 = arith.addf %382, %388 : vector<8x96xf32>
    %390 = math.absf %386 : vector<8x96xf32>
    %cst_85 = arith.constant 0.000000e+00 : f32
    %391 = vector.broadcast %cst_85 : f32 to vector<8x96xf32>
    %392 = arith.subf %391, %390 : vector<8x96xf32>
    %393 = math.exp %392 : vector<8x96xf32>
    %394 = math.log1p %393 : vector<8x96xf32>
    %395 = arith.addf %384, %394 : vector<8x96xf32>
    %396 = arith.select %387, %389, %395 : vector<8x96xi1>, vector<8x96xf32>
    %cst_86 = arith.constant dense<0.000000e+00> : vector<8x36xf32>
    %397 = tpu.matmul %396, %320, %cst_86 {dimension_numbers = #tpu.dot_dimension_numbers<[1], [0], [0], [1], [0, 0, 1, 1], [], []>} : vector<8x96xf32>, vector<96x36xf32>, vector<8x36xf32> -> vector<8x36xf32>
    %398 = arith.addf %397, %313 : vector<8x36xf32>
    %399 = vector.extract_strided_slice %398 {offsets = [0, 0], sizes = [8, 32], strides = [1, 1]} : vector<8x36xf32> to vector<8x32xf32>
    %cst_87 = arith.constant 0.000000e+00 : f32
    %400 = vector.broadcast %cst_87 : f32 to vector<8x32xf32>
    %401 = arith.maximumf %399, %400 : vector<8x32xf32>
    %402 = vector.broadcast %cst_87 : f32 to vector<8x32xf32>
    %403 = arith.subf %399, %402 : vector<8x32xf32>
    %404 = arith.cmpf one, %403, %403 : vector<8x32xf32>
    %405 = vector.broadcast %cst_87 : f32 to vector<8x32xf32>
    %406 = arith.addf %399, %405 : vector<8x32xf32>
    %407 = math.absf %403 : vector<8x32xf32>
    %cst_88 = arith.constant 0.000000e+00 : f32
    %408 = vector.broadcast %cst_88 : f32 to vector<8x32xf32>
    %409 = arith.subf %408, %407 : vector<8x32xf32>
    %410 = math.exp %409 : vector<8x32xf32>
    %411 = math.log1p %410 : vector<8x32xf32>
    %412 = arith.addf %401, %411 : vector<8x32xf32>
    %413 = arith.select %404, %406, %412 : vector<8x32xi1>, vector<8x32xf32>
    %414 = vector.extract_strided_slice %398 {offsets = [0, 32], sizes = [8, 4], strides = [1, 1]} : vector<8x36xf32> to vector<8x4xf32>
    %415 = arith.negf %414 : vector<8x4xf32>
    %416 = math.exp %415 : vector<8x4xf32>
    %cst_89 = arith.constant 1.000000e+00 : f32
    %417 = vector.broadcast %cst_89 : f32 to vector<8x4xf32>
    %418 = arith.addf %417, %416 : vector<8x4xf32>
    %419 = arith.divf %417, %418 : vector<8x4xf32>
    %cst_90 = arith.constant dense<0.000000e+00> : vector<8x8xf32>
    %420 = tpu.matmul %413, %321, %cst_90 {dimension_numbers = #tpu.dot_dimension_numbers<[1], [0], [0], [1], [0, 0, 1, 1], [], []>} : vector<8x32xf32>, vector<32x8xf32>, vector<8x8xf32> -> vector<8x8xf32>
    %421 = arith.addf %420, %316 : vector<8x8xf32>
    %422 = vector.extract_strided_slice %421 {offsets = [0, 0], sizes = [8, 4], strides = [1, 1]} : vector<8x8xf32> to vector<8x4xf32>
    %423 = vector.extract_strided_slice %421 {offsets = [0, 4], sizes = [8, 4], strides = [1, 1]} : vector<8x8xf32> to vector<8x4xf32>
    %424 = arith.subf %422, %423 : vector<8x4xf32>
    %425 = arith.divf %424, %419 : vector<8x4xf32>
    %cst_91 = arith.constant 5.000000e-01 : f32
    %426 = arith.mulf %cst_91, %324 : f32
    %427 = arith.mulf %425, %425 : vector<8x4xf32>
    %428 = vector.broadcast %426 : f32 to vector<8x4xf32>
    %429 = arith.mulf %428, %427 : vector<8x4xf32>
    %430 = arith.addf %374, %429 : vector<8x4xf32>
    %431 = vector.broadcast %324 : f32 to vector<8x4xf32>
    %432 = arith.mulf %422, %431 : vector<8x4xf32>
    %433 = arith.addf %380, %432 : vector<8x4xf32>
    %c8 = arith.constant 8 : index
    %c0_92 = arith.constant 0 : index
    %434 = vector.load %arg2[%c8, %c0_92] : memref<112x4xf32, #tpu.memory_space<vmem>>, vector<8x4xf32>
    %435 = arith.mulf %419, %434 : vector<8x4xf32>
    %436 = arith.addf %433, %435 : vector<8x4xf32>
    %437 = vector.extract_strided_slice %310 {offsets = [40, 0], sizes = [8, 96], strides = [1, 1]} : vector<64x96xf32> to vector<8x96xf32>
    %c1 = arith.constant 1 : index
    %438 = memref.load %arg3[%c1] : memref<7xf32, #tpu.memory_space<smem>>
    %cst_93 = arith.constant dense<0.000000e+00> : vector<8x96xf32>
    %439 = tpu.matmul %436, %318, %cst_93 {dimension_numbers = #tpu.dot_dimension_numbers<[1], [0], [0], [1], [0, 0, 1, 1], [], []>} : vector<8x4xf32>, vector<4x96xf32>, vector<8x96xf32> -> vector<8x96xf32>
    %440 = arith.addf %439, %437 : vector<8x96xf32>
    %cst_94 = arith.constant 0.000000e+00 : f32
    %441 = vector.broadcast %cst_94 : f32 to vector<8x96xf32>
    %442 = arith.maximumf %440, %441 : vector<8x96xf32>
    %443 = vector.broadcast %cst_94 : f32 to vector<8x96xf32>
    %444 = arith.subf %440, %443 : vector<8x96xf32>
    %445 = arith.cmpf one, %444, %444 : vector<8x96xf32>
    %446 = vector.broadcast %cst_94 : f32 to vector<8x96xf32>
    %447 = arith.addf %440, %446 : vector<8x96xf32>
    %448 = math.absf %444 : vector<8x96xf32>
    %cst_95 = arith.constant 0.000000e+00 : f32
    %449 = vector.broadcast %cst_95 : f32 to vector<8x96xf32>
    %450 = arith.subf %449, %448 : vector<8x96xf32>
    %451 = math.exp %450 : vector<8x96xf32>
    %452 = math.log1p %451 : vector<8x96xf32>
    %453 = arith.addf %442, %452 : vector<8x96xf32>
    %454 = arith.select %445, %447, %453 : vector<8x96xi1>, vector<8x96xf32>
    %cst_96 = arith.constant dense<0.000000e+00> : vector<8x36xf32>
    %455 = tpu.matmul %454, %320, %cst_96 {dimension_numbers = #tpu.dot_dimension_numbers<[1], [0], [0], [1], [0, 0, 1, 1], [], []>} : vector<8x96xf32>, vector<96x36xf32>, vector<8x36xf32> -> vector<8x36xf32>
    %456 = arith.addf %455, %313 : vector<8x36xf32>
    %457 = vector.extract_strided_slice %456 {offsets = [0, 0], sizes = [8, 32], strides = [1, 1]} : vector<8x36xf32> to vector<8x32xf32>
    %cst_97 = arith.constant 0.000000e+00 : f32
    %458 = vector.broadcast %cst_97 : f32 to vector<8x32xf32>
    %459 = arith.maximumf %457, %458 : vector<8x32xf32>
    %460 = vector.broadcast %cst_97 : f32 to vector<8x32xf32>
    %461 = arith.subf %457, %460 : vector<8x32xf32>
    %462 = arith.cmpf one, %461, %461 : vector<8x32xf32>
    %463 = vector.broadcast %cst_97 : f32 to vector<8x32xf32>
    %464 = arith.addf %457, %463 : vector<8x32xf32>
    %465 = math.absf %461 : vector<8x32xf32>
    %cst_98 = arith.constant 0.000000e+00 : f32
    %466 = vector.broadcast %cst_98 : f32 to vector<8x32xf32>
    %467 = arith.subf %466, %465 : vector<8x32xf32>
    %468 = math.exp %467 : vector<8x32xf32>
    %469 = math.log1p %468 : vector<8x32xf32>
    %470 = arith.addf %459, %469 : vector<8x32xf32>
    %471 = arith.select %462, %464, %470 : vector<8x32xi1>, vector<8x32xf32>
    %472 = vector.extract_strided_slice %456 {offsets = [0, 32], sizes = [8, 4], strides = [1, 1]} : vector<8x36xf32> to vector<8x4xf32>
    %473 = arith.negf %472 : vector<8x4xf32>
    %474 = math.exp %473 : vector<8x4xf32>
    %cst_99 = arith.constant 1.000000e+00 : f32
    %475 = vector.broadcast %cst_99 : f32 to vector<8x4xf32>
    %476 = arith.addf %475, %474 : vector<8x4xf32>
    %477 = arith.divf %475, %476 : vector<8x4xf32>
    %cst_100 = arith.constant dense<0.000000e+00> : vector<8x8xf32>
    %478 = tpu.matmul %471, %321, %cst_100 {dimension_numbers = #tpu.dot_dimension_numbers<[1], [0], [0], [1], [0, 0, 1, 1], [], []>} : vector<8x32xf32>, vector<32x8xf32>, vector<8x8xf32> -> vector<8x8xf32>
    %479 = arith.addf %478, %316 : vector<8x8xf32>
    %480 = vector.extract_strided_slice %479 {offsets = [0, 0], sizes = [8, 4], strides = [1, 1]} : vector<8x8xf32> to vector<8x4xf32>
    %481 = vector.extract_strided_slice %479 {offsets = [0, 4], sizes = [8, 4], strides = [1, 1]} : vector<8x8xf32> to vector<8x4xf32>
    %482 = arith.subf %480, %481 : vector<8x4xf32>
    %483 = arith.divf %482, %477 : vector<8x4xf32>
    %cst_101 = arith.constant 5.000000e-01 : f32
    %484 = arith.mulf %cst_101, %438 : f32
    %485 = arith.mulf %483, %483 : vector<8x4xf32>
    %486 = vector.broadcast %484 : f32 to vector<8x4xf32>
    %487 = arith.mulf %486, %485 : vector<8x4xf32>
    %488 = arith.addf %430, %487 : vector<8x4xf32>
    %489 = vector.broadcast %438 : f32 to vector<8x4xf32>
    %490 = arith.mulf %480, %489 : vector<8x4xf32>
    %491 = arith.addf %436, %490 : vector<8x4xf32>
    %c16 = arith.constant 16 : index
    %c0_102 = arith.constant 0 : index
    %492 = vector.load %arg2[%c16, %c0_102] : memref<112x4xf32, #tpu.memory_space<vmem>>, vector<8x4xf32>
    %493 = arith.mulf %477, %492 : vector<8x4xf32>
    %494 = arith.addf %491, %493 : vector<8x4xf32>
    %cst_103 = arith.constant dense<0.000000e+00> : vector<8x96xf32>
    %495 = tpu.matmul %494, %318, %cst_103 {dimension_numbers = #tpu.dot_dimension_numbers<[1], [0], [0], [1], [0, 0, 1, 1], [], []>} : vector<8x4xf32>, vector<4x96xf32>, vector<8x96xf32> -> vector<8x96xf32>
    %496 = arith.addf %495, %437 : vector<8x96xf32>
    %cst_104 = arith.constant 0.000000e+00 : f32
    %497 = vector.broadcast %cst_104 : f32 to vector<8x96xf32>
    %498 = arith.maximumf %496, %497 : vector<8x96xf32>
    %499 = vector.broadcast %cst_104 : f32 to vector<8x96xf32>
    %500 = arith.subf %496, %499 : vector<8x96xf32>
    %501 = arith.cmpf one, %500, %500 : vector<8x96xf32>
    %502 = vector.broadcast %cst_104 : f32 to vector<8x96xf32>
    %503 = arith.addf %496, %502 : vector<8x96xf32>
    %504 = math.absf %500 : vector<8x96xf32>
    %cst_105 = arith.constant 0.000000e+00 : f32
    %505 = vector.broadcast %cst_105 : f32 to vector<8x96xf32>
    %506 = arith.subf %505, %504 : vector<8x96xf32>
    %507 = math.exp %506 : vector<8x96xf32>
    %508 = math.log1p %507 : vector<8x96xf32>
    %509 = arith.addf %498, %508 : vector<8x96xf32>
    %510 = arith.select %501, %503, %509 : vector<8x96xi1>, vector<8x96xf32>
    %cst_106 = arith.constant dense<0.000000e+00> : vector<8x36xf32>
    %511 = tpu.matmul %510, %320, %cst_106 {dimension_numbers = #tpu.dot_dimension_numbers<[1], [0], [0], [1], [0, 0, 1, 1], [], []>} : vector<8x96xf32>, vector<96x36xf32>, vector<8x36xf32> -> vector<8x36xf32>
    %512 = arith.addf %511, %313 : vector<8x36xf32>
    %513 = vector.extract_strided_slice %512 {offsets = [0, 0], sizes = [8, 32], strides = [1, 1]} : vector<8x36xf32> to vector<8x32xf32>
    %cst_107 = arith.constant 0.000000e+00 : f32
    %514 = vector.broadcast %cst_107 : f32 to vector<8x32xf32>
    %515 = arith.maximumf %513, %514 : vector<8x32xf32>
    %516 = vector.broadcast %cst_107 : f32 to vector<8x32xf32>
    %517 = arith.subf %513, %516 : vector<8x32xf32>
    %518 = arith.cmpf one, %517, %517 : vector<8x32xf32>
    %519 = vector.broadcast %cst_107 : f32 to vector<8x32xf32>
    %520 = arith.addf %513, %519 : vector<8x32xf32>
    %521 = math.absf %517 : vector<8x32xf32>
    %cst_108 = arith.constant 0.000000e+00 : f32
    %522 = vector.broadcast %cst_108 : f32 to vector<8x32xf32>
    %523 = arith.subf %522, %521 : vector<8x32xf32>
    %524 = math.exp %523 : vector<8x32xf32>
    %525 = math.log1p %524 : vector<8x32xf32>
    %526 = arith.addf %515, %525 : vector<8x32xf32>
    %527 = arith.select %518, %520, %526 : vector<8x32xi1>, vector<8x32xf32>
    %528 = vector.extract_strided_slice %512 {offsets = [0, 32], sizes = [8, 4], strides = [1, 1]} : vector<8x36xf32> to vector<8x4xf32>
    %529 = arith.negf %528 : vector<8x4xf32>
    %530 = math.exp %529 : vector<8x4xf32>
    %cst_109 = arith.constant 1.000000e+00 : f32
    %531 = vector.broadcast %cst_109 : f32 to vector<8x4xf32>
    %532 = arith.addf %531, %530 : vector<8x4xf32>
    %533 = arith.divf %531, %532 : vector<8x4xf32>
    %cst_110 = arith.constant dense<0.000000e+00> : vector<8x8xf32>
    %534 = tpu.matmul %527, %321, %cst_110 {dimension_numbers = #tpu.dot_dimension_numbers<[1], [0], [0], [1], [0, 0, 1, 1], [], []>} : vector<8x32xf32>, vector<32x8xf32>, vector<8x8xf32> -> vector<8x8xf32>
    %535 = arith.addf %534, %316 : vector<8x8xf32>
    %536 = vector.extract_strided_slice %535 {offsets = [0, 0], sizes = [8, 4], strides = [1, 1]} : vector<8x8xf32> to vector<8x4xf32>
    %537 = vector.extract_strided_slice %535 {offsets = [0, 4], sizes = [8, 4], strides = [1, 1]} : vector<8x8xf32> to vector<8x4xf32>
    %538 = arith.subf %536, %537 : vector<8x4xf32>
    %539 = arith.divf %538, %533 : vector<8x4xf32>
    %cst_111 = arith.constant 5.000000e-01 : f32
    %540 = arith.mulf %cst_111, %438 : f32
    %541 = arith.mulf %539, %539 : vector<8x4xf32>
    %542 = vector.broadcast %540 : f32 to vector<8x4xf32>
    %543 = arith.mulf %542, %541 : vector<8x4xf32>
    %544 = arith.addf %488, %543 : vector<8x4xf32>
    %545 = vector.broadcast %438 : f32 to vector<8x4xf32>
    %546 = arith.mulf %536, %545 : vector<8x4xf32>
    %547 = arith.addf %494, %546 : vector<8x4xf32>
    %c24 = arith.constant 24 : index
    %c0_112 = arith.constant 0 : index
    %548 = vector.load %arg2[%c24, %c0_112] : memref<112x4xf32, #tpu.memory_space<vmem>>, vector<8x4xf32>
    %549 = arith.mulf %533, %548 : vector<8x4xf32>
    %550 = arith.addf %547, %549 : vector<8x4xf32>
    %551 = vector.extract_strided_slice %310 {offsets = [32, 0], sizes = [8, 96], strides = [1, 1]} : vector<64x96xf32> to vector<8x96xf32>
    %c2 = arith.constant 2 : index
    %552 = memref.load %arg3[%c2] : memref<7xf32, #tpu.memory_space<smem>>
    %cst_113 = arith.constant dense<0.000000e+00> : vector<8x96xf32>
    %553 = tpu.matmul %550, %318, %cst_113 {dimension_numbers = #tpu.dot_dimension_numbers<[1], [0], [0], [1], [0, 0, 1, 1], [], []>} : vector<8x4xf32>, vector<4x96xf32>, vector<8x96xf32> -> vector<8x96xf32>
    %554 = arith.addf %553, %551 : vector<8x96xf32>
    %cst_114 = arith.constant 0.000000e+00 : f32
    %555 = vector.broadcast %cst_114 : f32 to vector<8x96xf32>
    %556 = arith.maximumf %554, %555 : vector<8x96xf32>
    %557 = vector.broadcast %cst_114 : f32 to vector<8x96xf32>
    %558 = arith.subf %554, %557 : vector<8x96xf32>
    %559 = arith.cmpf one, %558, %558 : vector<8x96xf32>
    %560 = vector.broadcast %cst_114 : f32 to vector<8x96xf32>
    %561 = arith.addf %554, %560 : vector<8x96xf32>
    %562 = math.absf %558 : vector<8x96xf32>
    %cst_115 = arith.constant 0.000000e+00 : f32
    %563 = vector.broadcast %cst_115 : f32 to vector<8x96xf32>
    %564 = arith.subf %563, %562 : vector<8x96xf32>
    %565 = math.exp %564 : vector<8x96xf32>
    %566 = math.log1p %565 : vector<8x96xf32>
    %567 = arith.addf %556, %566 : vector<8x96xf32>
    %568 = arith.select %559, %561, %567 : vector<8x96xi1>, vector<8x96xf32>
    %cst_116 = arith.constant dense<0.000000e+00> : vector<8x36xf32>
    %569 = tpu.matmul %568, %320, %cst_116 {dimension_numbers = #tpu.dot_dimension_numbers<[1], [0], [0], [1], [0, 0, 1, 1], [], []>} : vector<8x96xf32>, vector<96x36xf32>, vector<8x36xf32> -> vector<8x36xf32>
    %570 = arith.addf %569, %313 : vector<8x36xf32>
    %571 = vector.extract_strided_slice %570 {offsets = [0, 0], sizes = [8, 32], strides = [1, 1]} : vector<8x36xf32> to vector<8x32xf32>
    %cst_117 = arith.constant 0.000000e+00 : f32
    %572 = vector.broadcast %cst_117 : f32 to vector<8x32xf32>
    %573 = arith.maximumf %571, %572 : vector<8x32xf32>
    %574 = vector.broadcast %cst_117 : f32 to vector<8x32xf32>
    %575 = arith.subf %571, %574 : vector<8x32xf32>
    %576 = arith.cmpf one, %575, %575 : vector<8x32xf32>
    %577 = vector.broadcast %cst_117 : f32 to vector<8x32xf32>
    %578 = arith.addf %571, %577 : vector<8x32xf32>
    %579 = math.absf %575 : vector<8x32xf32>
    %cst_118 = arith.constant 0.000000e+00 : f32
    %580 = vector.broadcast %cst_118 : f32 to vector<8x32xf32>
    %581 = arith.subf %580, %579 : vector<8x32xf32>
    %582 = math.exp %581 : vector<8x32xf32>
    %583 = math.log1p %582 : vector<8x32xf32>
    %584 = arith.addf %573, %583 : vector<8x32xf32>
    %585 = arith.select %576, %578, %584 : vector<8x32xi1>, vector<8x32xf32>
    %586 = vector.extract_strided_slice %570 {offsets = [0, 32], sizes = [8, 4], strides = [1, 1]} : vector<8x36xf32> to vector<8x4xf32>
    %587 = arith.negf %586 : vector<8x4xf32>
    %588 = math.exp %587 : vector<8x4xf32>
    %cst_119 = arith.constant 1.000000e+00 : f32
    %589 = vector.broadcast %cst_119 : f32 to vector<8x4xf32>
    %590 = arith.addf %589, %588 : vector<8x4xf32>
    %591 = arith.divf %589, %590 : vector<8x4xf32>
    %cst_120 = arith.constant dense<0.000000e+00> : vector<8x8xf32>
    %592 = tpu.matmul %585, %321, %cst_120 {dimension_numbers = #tpu.dot_dimension_numbers<[1], [0], [0], [1], [0, 0, 1, 1], [], []>} : vector<8x32xf32>, vector<32x8xf32>, vector<8x8xf32> -> vector<8x8xf32>
    %593 = arith.addf %592, %316 : vector<8x8xf32>
    %594 = vector.extract_strided_slice %593 {offsets = [0, 0], sizes = [8, 4], strides = [1, 1]} : vector<8x8xf32> to vector<8x4xf32>
    %595 = vector.extract_strided_slice %593 {offsets = [0, 4], sizes = [8, 4], strides = [1, 1]} : vector<8x8xf32> to vector<8x4xf32>
    %596 = arith.subf %594, %595 : vector<8x4xf32>
    %597 = arith.divf %596, %591 : vector<8x4xf32>
    %cst_121 = arith.constant 5.000000e-01 : f32
    %598 = arith.mulf %cst_121, %552 : f32
    %599 = arith.mulf %597, %597 : vector<8x4xf32>
    %600 = vector.broadcast %598 : f32 to vector<8x4xf32>
    %601 = arith.mulf %600, %599 : vector<8x4xf32>
    %602 = arith.addf %544, %601 : vector<8x4xf32>
    %603 = vector.broadcast %552 : f32 to vector<8x4xf32>
    %604 = arith.mulf %594, %603 : vector<8x4xf32>
    %605 = arith.addf %550, %604 : vector<8x4xf32>
    %c32 = arith.constant 32 : index
    %c0_122 = arith.constant 0 : index
    %606 = vector.load %arg2[%c32, %c0_122] : memref<112x4xf32, #tpu.memory_space<vmem>>, vector<8x4xf32>
    %607 = arith.mulf %591, %606 : vector<8x4xf32>
    %608 = arith.addf %605, %607 : vector<8x4xf32>
    %cst_123 = arith.constant dense<0.000000e+00> : vector<8x96xf32>
    %609 = tpu.matmul %608, %318, %cst_123 {dimension_numbers = #tpu.dot_dimension_numbers<[1], [0], [0], [1], [0, 0, 1, 1], [], []>} : vector<8x4xf32>, vector<4x96xf32>, vector<8x96xf32> -> vector<8x96xf32>
    %610 = arith.addf %609, %551 : vector<8x96xf32>
    %cst_124 = arith.constant 0.000000e+00 : f32
    %611 = vector.broadcast %cst_124 : f32 to vector<8x96xf32>
    %612 = arith.maximumf %610, %611 : vector<8x96xf32>
    %613 = vector.broadcast %cst_124 : f32 to vector<8x96xf32>
    %614 = arith.subf %610, %613 : vector<8x96xf32>
    %615 = arith.cmpf one, %614, %614 : vector<8x96xf32>
    %616 = vector.broadcast %cst_124 : f32 to vector<8x96xf32>
    %617 = arith.addf %610, %616 : vector<8x96xf32>
    %618 = math.absf %614 : vector<8x96xf32>
    %cst_125 = arith.constant 0.000000e+00 : f32
    %619 = vector.broadcast %cst_125 : f32 to vector<8x96xf32>
    %620 = arith.subf %619, %618 : vector<8x96xf32>
    %621 = math.exp %620 : vector<8x96xf32>
    %622 = math.log1p %621 : vector<8x96xf32>
    %623 = arith.addf %612, %622 : vector<8x96xf32>
    %624 = arith.select %615, %617, %623 : vector<8x96xi1>, vector<8x96xf32>
    %cst_126 = arith.constant dense<0.000000e+00> : vector<8x36xf32>
    %625 = tpu.matmul %624, %320, %cst_126 {dimension_numbers = #tpu.dot_dimension_numbers<[1], [0], [0], [1], [0, 0, 1, 1], [], []>} : vector<8x96xf32>, vector<96x36xf32>, vector<8x36xf32> -> vector<8x36xf32>
    %626 = arith.addf %625, %313 : vector<8x36xf32>
    %627 = vector.extract_strided_slice %626 {offsets = [0, 0], sizes = [8, 32], strides = [1, 1]} : vector<8x36xf32> to vector<8x32xf32>
    %cst_127 = arith.constant 0.000000e+00 : f32
    %628 = vector.broadcast %cst_127 : f32 to vector<8x32xf32>
    %629 = arith.maximumf %627, %628 : vector<8x32xf32>
    %630 = vector.broadcast %cst_127 : f32 to vector<8x32xf32>
    %631 = arith.subf %627, %630 : vector<8x32xf32>
    %632 = arith.cmpf one, %631, %631 : vector<8x32xf32>
    %633 = vector.broadcast %cst_127 : f32 to vector<8x32xf32>
    %634 = arith.addf %627, %633 : vector<8x32xf32>
    %635 = math.absf %631 : vector<8x32xf32>
    %cst_128 = arith.constant 0.000000e+00 : f32
    %636 = vector.broadcast %cst_128 : f32 to vector<8x32xf32>
    %637 = arith.subf %636, %635 : vector<8x32xf32>
    %638 = math.exp %637 : vector<8x32xf32>
    %639 = math.log1p %638 : vector<8x32xf32>
    %640 = arith.addf %629, %639 : vector<8x32xf32>
    %641 = arith.select %632, %634, %640 : vector<8x32xi1>, vector<8x32xf32>
    %642 = vector.extract_strided_slice %626 {offsets = [0, 32], sizes = [8, 4], strides = [1, 1]} : vector<8x36xf32> to vector<8x4xf32>
    %643 = arith.negf %642 : vector<8x4xf32>
    %644 = math.exp %643 : vector<8x4xf32>
    %cst_129 = arith.constant 1.000000e+00 : f32
    %645 = vector.broadcast %cst_129 : f32 to vector<8x4xf32>
    %646 = arith.addf %645, %644 : vector<8x4xf32>
    %647 = arith.divf %645, %646 : vector<8x4xf32>
    %cst_130 = arith.constant dense<0.000000e+00> : vector<8x8xf32>
    %648 = tpu.matmul %641, %321, %cst_130 {dimension_numbers = #tpu.dot_dimension_numbers<[1], [0], [0], [1], [0, 0, 1, 1], [], []>} : vector<8x32xf32>, vector<32x8xf32>, vector<8x8xf32> -> vector<8x8xf32>
    %649 = arith.addf %648, %316 : vector<8x8xf32>
    %650 = vector.extract_strided_slice %649 {offsets = [0, 0], sizes = [8, 4], strides = [1, 1]} : vector<8x8xf32> to vector<8x4xf32>
    %651 = vector.extract_strided_slice %649 {offsets = [0, 4], sizes = [8, 4], strides = [1, 1]} : vector<8x8xf32> to vector<8x4xf32>
    %652 = arith.subf %650, %651 : vector<8x4xf32>
    %653 = arith.divf %652, %647 : vector<8x4xf32>
    %cst_131 = arith.constant 5.000000e-01 : f32
    %654 = arith.mulf %cst_131, %552 : f32
    %655 = arith.mulf %653, %653 : vector<8x4xf32>
    %656 = vector.broadcast %654 : f32 to vector<8x4xf32>
    %657 = arith.mulf %656, %655 : vector<8x4xf32>
    %658 = arith.addf %602, %657 : vector<8x4xf32>
    %659 = vector.broadcast %552 : f32 to vector<8x4xf32>
    %660 = arith.mulf %650, %659 : vector<8x4xf32>
    %661 = arith.addf %608, %660 : vector<8x4xf32>
    %c40 = arith.constant 40 : index
    %c0_132 = arith.constant 0 : index
    %662 = vector.load %arg2[%c40, %c0_132] : memref<112x4xf32, #tpu.memory_space<vmem>>, vector<8x4xf32>
    %663 = arith.mulf %647, %662 : vector<8x4xf32>
    %664 = arith.addf %661, %663 : vector<8x4xf32>
    %665 = vector.extract_strided_slice %310 {offsets = [24, 0], sizes = [8, 96], strides = [1, 1]} : vector<64x96xf32> to vector<8x96xf32>
    %c3 = arith.constant 3 : index
    %666 = memref.load %arg3[%c3] : memref<7xf32, #tpu.memory_space<smem>>
    %cst_133 = arith.constant dense<0.000000e+00> : vector<8x96xf32>
    %667 = tpu.matmul %664, %318, %cst_133 {dimension_numbers = #tpu.dot_dimension_numbers<[1], [0], [0], [1], [0, 0, 1, 1], [], []>} : vector<8x4xf32>, vector<4x96xf32>, vector<8x96xf32> -> vector<8x96xf32>
    %668 = arith.addf %667, %665 : vector<8x96xf32>
    %cst_134 = arith.constant 0.000000e+00 : f32
    %669 = vector.broadcast %cst_134 : f32 to vector<8x96xf32>
    %670 = arith.maximumf %668, %669 : vector<8x96xf32>
    %671 = vector.broadcast %cst_134 : f32 to vector<8x96xf32>
    %672 = arith.subf %668, %671 : vector<8x96xf32>
    %673 = arith.cmpf one, %672, %672 : vector<8x96xf32>
    %674 = vector.broadcast %cst_134 : f32 to vector<8x96xf32>
    %675 = arith.addf %668, %674 : vector<8x96xf32>
    %676 = math.absf %672 : vector<8x96xf32>
    %cst_135 = arith.constant 0.000000e+00 : f32
    %677 = vector.broadcast %cst_135 : f32 to vector<8x96xf32>
    %678 = arith.subf %677, %676 : vector<8x96xf32>
    %679 = math.exp %678 : vector<8x96xf32>
    %680 = math.log1p %679 : vector<8x96xf32>
    %681 = arith.addf %670, %680 : vector<8x96xf32>
    %682 = arith.select %673, %675, %681 : vector<8x96xi1>, vector<8x96xf32>
    %cst_136 = arith.constant dense<0.000000e+00> : vector<8x36xf32>
    %683 = tpu.matmul %682, %320, %cst_136 {dimension_numbers = #tpu.dot_dimension_numbers<[1], [0], [0], [1], [0, 0, 1, 1], [], []>} : vector<8x96xf32>, vector<96x36xf32>, vector<8x36xf32> -> vector<8x36xf32>
    %684 = arith.addf %683, %313 : vector<8x36xf32>
    %685 = vector.extract_strided_slice %684 {offsets = [0, 0], sizes = [8, 32], strides = [1, 1]} : vector<8x36xf32> to vector<8x32xf32>
    %cst_137 = arith.constant 0.000000e+00 : f32
    %686 = vector.broadcast %cst_137 : f32 to vector<8x32xf32>
    %687 = arith.maximumf %685, %686 : vector<8x32xf32>
    %688 = vector.broadcast %cst_137 : f32 to vector<8x32xf32>
    %689 = arith.subf %685, %688 : vector<8x32xf32>
    %690 = arith.cmpf one, %689, %689 : vector<8x32xf32>
    %691 = vector.broadcast %cst_137 : f32 to vector<8x32xf32>
    %692 = arith.addf %685, %691 : vector<8x32xf32>
    %693 = math.absf %689 : vector<8x32xf32>
    %cst_138 = arith.constant 0.000000e+00 : f32
    %694 = vector.broadcast %cst_138 : f32 to vector<8x32xf32>
    %695 = arith.subf %694, %693 : vector<8x32xf32>
    %696 = math.exp %695 : vector<8x32xf32>
    %697 = math.log1p %696 : vector<8x32xf32>
    %698 = arith.addf %687, %697 : vector<8x32xf32>
    %699 = arith.select %690, %692, %698 : vector<8x32xi1>, vector<8x32xf32>
    %700 = vector.extract_strided_slice %684 {offsets = [0, 32], sizes = [8, 4], strides = [1, 1]} : vector<8x36xf32> to vector<8x4xf32>
    %701 = arith.negf %700 : vector<8x4xf32>
    %702 = math.exp %701 : vector<8x4xf32>
    %cst_139 = arith.constant 1.000000e+00 : f32
    %703 = vector.broadcast %cst_139 : f32 to vector<8x4xf32>
    %704 = arith.addf %703, %702 : vector<8x4xf32>
    %705 = arith.divf %703, %704 : vector<8x4xf32>
    %cst_140 = arith.constant dense<0.000000e+00> : vector<8x8xf32>
    %706 = tpu.matmul %699, %321, %cst_140 {dimension_numbers = #tpu.dot_dimension_numbers<[1], [0], [0], [1], [0, 0, 1, 1], [], []>} : vector<8x32xf32>, vector<32x8xf32>, vector<8x8xf32> -> vector<8x8xf32>
    %707 = arith.addf %706, %316 : vector<8x8xf32>
    %708 = vector.extract_strided_slice %707 {offsets = [0, 0], sizes = [8, 4], strides = [1, 1]} : vector<8x8xf32> to vector<8x4xf32>
    %709 = vector.extract_strided_slice %707 {offsets = [0, 4], sizes = [8, 4], strides = [1, 1]} : vector<8x8xf32> to vector<8x4xf32>
    %710 = arith.subf %708, %709 : vector<8x4xf32>
    %711 = arith.divf %710, %705 : vector<8x4xf32>
    %cst_141 = arith.constant 5.000000e-01 : f32
    %712 = arith.mulf %cst_141, %666 : f32
    %713 = arith.mulf %711, %711 : vector<8x4xf32>
    %714 = vector.broadcast %712 : f32 to vector<8x4xf32>
    %715 = arith.mulf %714, %713 : vector<8x4xf32>
    %716 = arith.addf %658, %715 : vector<8x4xf32>
    %717 = vector.broadcast %666 : f32 to vector<8x4xf32>
    %718 = arith.mulf %708, %717 : vector<8x4xf32>
    %719 = arith.addf %664, %718 : vector<8x4xf32>
    %c48_142 = arith.constant 48 : index
    %c0_143 = arith.constant 0 : index
    %720 = vector.load %arg2[%c48_142, %c0_143] : memref<112x4xf32, #tpu.memory_space<vmem>>, vector<8x4xf32>
    %721 = arith.mulf %705, %720 : vector<8x4xf32>
    %722 = arith.addf %719, %721 : vector<8x4xf32>
    %cst_144 = arith.constant dense<0.000000e+00> : vector<8x96xf32>
    %723 = tpu.matmul %722, %318, %cst_144 {dimension_numbers = #tpu.dot_dimension_numbers<[1], [0], [0], [1], [0, 0, 1, 1], [], []>} : vector<8x4xf32>, vector<4x96xf32>, vector<8x96xf32> -> vector<8x96xf32>
    %724 = arith.addf %723, %665 : vector<8x96xf32>
    %cst_145 = arith.constant 0.000000e+00 : f32
    %725 = vector.broadcast %cst_145 : f32 to vector<8x96xf32>
    %726 = arith.maximumf %724, %725 : vector<8x96xf32>
    %727 = vector.broadcast %cst_145 : f32 to vector<8x96xf32>
    %728 = arith.subf %724, %727 : vector<8x96xf32>
    %729 = arith.cmpf one, %728, %728 : vector<8x96xf32>
    %730 = vector.broadcast %cst_145 : f32 to vector<8x96xf32>
    %731 = arith.addf %724, %730 : vector<8x96xf32>
    %732 = math.absf %728 : vector<8x96xf32>
    %cst_146 = arith.constant 0.000000e+00 : f32
    %733 = vector.broadcast %cst_146 : f32 to vector<8x96xf32>
    %734 = arith.subf %733, %732 : vector<8x96xf32>
    %735 = math.exp %734 : vector<8x96xf32>
    %736 = math.log1p %735 : vector<8x96xf32>
    %737 = arith.addf %726, %736 : vector<8x96xf32>
    %738 = arith.select %729, %731, %737 : vector<8x96xi1>, vector<8x96xf32>
    %cst_147 = arith.constant dense<0.000000e+00> : vector<8x36xf32>
    %739 = tpu.matmul %738, %320, %cst_147 {dimension_numbers = #tpu.dot_dimension_numbers<[1], [0], [0], [1], [0, 0, 1, 1], [], []>} : vector<8x96xf32>, vector<96x36xf32>, vector<8x36xf32> -> vector<8x36xf32>
    %740 = arith.addf %739, %313 : vector<8x36xf32>
    %741 = vector.extract_strided_slice %740 {offsets = [0, 0], sizes = [8, 32], strides = [1, 1]} : vector<8x36xf32> to vector<8x32xf32>
    %cst_148 = arith.constant 0.000000e+00 : f32
    %742 = vector.broadcast %cst_148 : f32 to vector<8x32xf32>
    %743 = arith.maximumf %741, %742 : vector<8x32xf32>
    %744 = vector.broadcast %cst_148 : f32 to vector<8x32xf32>
    %745 = arith.subf %741, %744 : vector<8x32xf32>
    %746 = arith.cmpf one, %745, %745 : vector<8x32xf32>
    %747 = vector.broadcast %cst_148 : f32 to vector<8x32xf32>
    %748 = arith.addf %741, %747 : vector<8x32xf32>
    %749 = math.absf %745 : vector<8x32xf32>
    %cst_149 = arith.constant 0.000000e+00 : f32
    %750 = vector.broadcast %cst_149 : f32 to vector<8x32xf32>
    %751 = arith.subf %750, %749 : vector<8x32xf32>
    %752 = math.exp %751 : vector<8x32xf32>
    %753 = math.log1p %752 : vector<8x32xf32>
    %754 = arith.addf %743, %753 : vector<8x32xf32>
    %755 = arith.select %746, %748, %754 : vector<8x32xi1>, vector<8x32xf32>
    %756 = vector.extract_strided_slice %740 {offsets = [0, 32], sizes = [8, 4], strides = [1, 1]} : vector<8x36xf32> to vector<8x4xf32>
    %757 = arith.negf %756 : vector<8x4xf32>
    %758 = math.exp %757 : vector<8x4xf32>
    %cst_150 = arith.constant 1.000000e+00 : f32
    %759 = vector.broadcast %cst_150 : f32 to vector<8x4xf32>
    %760 = arith.addf %759, %758 : vector<8x4xf32>
    %761 = arith.divf %759, %760 : vector<8x4xf32>
    %cst_151 = arith.constant dense<0.000000e+00> : vector<8x8xf32>
    %762 = tpu.matmul %755, %321, %cst_151 {dimension_numbers = #tpu.dot_dimension_numbers<[1], [0], [0], [1], [0, 0, 1, 1], [], []>} : vector<8x32xf32>, vector<32x8xf32>, vector<8x8xf32> -> vector<8x8xf32>
    %763 = arith.addf %762, %316 : vector<8x8xf32>
    %764 = vector.extract_strided_slice %763 {offsets = [0, 0], sizes = [8, 4], strides = [1, 1]} : vector<8x8xf32> to vector<8x4xf32>
    %765 = vector.extract_strided_slice %763 {offsets = [0, 4], sizes = [8, 4], strides = [1, 1]} : vector<8x8xf32> to vector<8x4xf32>
    %766 = arith.subf %764, %765 : vector<8x4xf32>
    %767 = arith.divf %766, %761 : vector<8x4xf32>
    %cst_152 = arith.constant 5.000000e-01 : f32
    %768 = arith.mulf %cst_152, %666 : f32
    %769 = arith.mulf %767, %767 : vector<8x4xf32>
    %770 = vector.broadcast %768 : f32 to vector<8x4xf32>
    %771 = arith.mulf %770, %769 : vector<8x4xf32>
    %772 = arith.addf %716, %771 : vector<8x4xf32>
    %773 = vector.broadcast %666 : f32 to vector<8x4xf32>
    %774 = arith.mulf %764, %773 : vector<8x4xf32>
    %775 = arith.addf %722, %774 : vector<8x4xf32>
    %c56 = arith.constant 56 : index
    %c0_153 = arith.constant 0 : index
    %776 = vector.load %arg2[%c56, %c0_153] : memref<112x4xf32, #tpu.memory_space<vmem>>, vector<8x4xf32>
    %777 = arith.mulf %761, %776 : vector<8x4xf32>
    %778 = arith.addf %775, %777 : vector<8x4xf32>
    %779 = vector.extract_strided_slice %310 {offsets = [16, 0], sizes = [8, 96], strides = [1, 1]} : vector<64x96xf32> to vector<8x96xf32>
    %c4_154 = arith.constant 4 : index
    %780 = memref.load %arg3[%c4_154] : memref<7xf32, #tpu.memory_space<smem>>
    %cst_155 = arith.constant dense<0.000000e+00> : vector<8x96xf32>
    %781 = tpu.matmul %778, %318, %cst_155 {dimension_numbers = #tpu.dot_dimension_numbers<[1], [0], [0], [1], [0, 0, 1, 1], [], []>} : vector<8x4xf32>, vector<4x96xf32>, vector<8x96xf32> -> vector<8x96xf32>
    %782 = arith.addf %781, %779 : vector<8x96xf32>
    %cst_156 = arith.constant 0.000000e+00 : f32
    %783 = vector.broadcast %cst_156 : f32 to vector<8x96xf32>
    %784 = arith.maximumf %782, %783 : vector<8x96xf32>
    %785 = vector.broadcast %cst_156 : f32 to vector<8x96xf32>
    %786 = arith.subf %782, %785 : vector<8x96xf32>
    %787 = arith.cmpf one, %786, %786 : vector<8x96xf32>
    %788 = vector.broadcast %cst_156 : f32 to vector<8x96xf32>
    %789 = arith.addf %782, %788 : vector<8x96xf32>
    %790 = math.absf %786 : vector<8x96xf32>
    %cst_157 = arith.constant 0.000000e+00 : f32
    %791 = vector.broadcast %cst_157 : f32 to vector<8x96xf32>
    %792 = arith.subf %791, %790 : vector<8x96xf32>
    %793 = math.exp %792 : vector<8x96xf32>
    %794 = math.log1p %793 : vector<8x96xf32>
    %795 = arith.addf %784, %794 : vector<8x96xf32>
    %796 = arith.select %787, %789, %795 : vector<8x96xi1>, vector<8x96xf32>
    %cst_158 = arith.constant dense<0.000000e+00> : vector<8x36xf32>
    %797 = tpu.matmul %796, %320, %cst_158 {dimension_numbers = #tpu.dot_dimension_numbers<[1], [0], [0], [1], [0, 0, 1, 1], [], []>} : vector<8x96xf32>, vector<96x36xf32>, vector<8x36xf32> -> vector<8x36xf32>
    %798 = arith.addf %797, %313 : vector<8x36xf32>
    %799 = vector.extract_strided_slice %798 {offsets = [0, 0], sizes = [8, 32], strides = [1, 1]} : vector<8x36xf32> to vector<8x32xf32>
    %cst_159 = arith.constant 0.000000e+00 : f32
    %800 = vector.broadcast %cst_159 : f32 to vector<8x32xf32>
    %801 = arith.maximumf %799, %800 : vector<8x32xf32>
    %802 = vector.broadcast %cst_159 : f32 to vector<8x32xf32>
    %803 = arith.subf %799, %802 : vector<8x32xf32>
    %804 = arith.cmpf one, %803, %803 : vector<8x32xf32>
    %805 = vector.broadcast %cst_159 : f32 to vector<8x32xf32>
    %806 = arith.addf %799, %805 : vector<8x32xf32>
    %807 = math.absf %803 : vector<8x32xf32>
    %cst_160 = arith.constant 0.000000e+00 : f32
    %808 = vector.broadcast %cst_160 : f32 to vector<8x32xf32>
    %809 = arith.subf %808, %807 : vector<8x32xf32>
    %810 = math.exp %809 : vector<8x32xf32>
    %811 = math.log1p %810 : vector<8x32xf32>
    %812 = arith.addf %801, %811 : vector<8x32xf32>
    %813 = arith.select %804, %806, %812 : vector<8x32xi1>, vector<8x32xf32>
    %814 = vector.extract_strided_slice %798 {offsets = [0, 32], sizes = [8, 4], strides = [1, 1]} : vector<8x36xf32> to vector<8x4xf32>
    %815 = arith.negf %814 : vector<8x4xf32>
    %816 = math.exp %815 : vector<8x4xf32>
    %cst_161 = arith.constant 1.000000e+00 : f32
    %817 = vector.broadcast %cst_161 : f32 to vector<8x4xf32>
    %818 = arith.addf %817, %816 : vector<8x4xf32>
    %819 = arith.divf %817, %818 : vector<8x4xf32>
    %cst_162 = arith.constant dense<0.000000e+00> : vector<8x8xf32>
    %820 = tpu.matmul %813, %321, %cst_162 {dimension_numbers = #tpu.dot_dimension_numbers<[1], [0], [0], [1], [0, 0, 1, 1], [], []>} : vector<8x32xf32>, vector<32x8xf32>, vector<8x8xf32> -> vector<8x8xf32>
    %821 = arith.addf %820, %316 : vector<8x8xf32>
    %822 = vector.extract_strided_slice %821 {offsets = [0, 0], sizes = [8, 4], strides = [1, 1]} : vector<8x8xf32> to vector<8x4xf32>
    %823 = vector.extract_strided_slice %821 {offsets = [0, 4], sizes = [8, 4], strides = [1, 1]} : vector<8x8xf32> to vector<8x4xf32>
    %824 = arith.subf %822, %823 : vector<8x4xf32>
    %825 = arith.divf %824, %819 : vector<8x4xf32>
    %cst_163 = arith.constant 5.000000e-01 : f32
    %826 = arith.mulf %cst_163, %780 : f32
    %827 = arith.mulf %825, %825 : vector<8x4xf32>
    %828 = vector.broadcast %826 : f32 to vector<8x4xf32>
    %829 = arith.mulf %828, %827 : vector<8x4xf32>
    %830 = arith.addf %772, %829 : vector<8x4xf32>
    %831 = vector.broadcast %780 : f32 to vector<8x4xf32>
    %832 = arith.mulf %822, %831 : vector<8x4xf32>
    %833 = arith.addf %778, %832 : vector<8x4xf32>
    %c64 = arith.constant 64 : index
    %c0_164 = arith.constant 0 : index
    %834 = vector.load %arg2[%c64, %c0_164] : memref<112x4xf32, #tpu.memory_space<vmem>>, vector<8x4xf32>
    %835 = arith.mulf %819, %834 : vector<8x4xf32>
    %836 = arith.addf %833, %835 : vector<8x4xf32>
    %cst_165 = arith.constant dense<0.000000e+00> : vector<8x96xf32>
    %837 = tpu.matmul %836, %318, %cst_165 {dimension_numbers = #tpu.dot_dimension_numbers<[1], [0], [0], [1], [0, 0, 1, 1], [], []>} : vector<8x4xf32>, vector<4x96xf32>, vector<8x96xf32> -> vector<8x96xf32>
    %838 = arith.addf %837, %779 : vector<8x96xf32>
    %cst_166 = arith.constant 0.000000e+00 : f32
    %839 = vector.broadcast %cst_166 : f32 to vector<8x96xf32>
    %840 = arith.maximumf %838, %839 : vector<8x96xf32>
    %841 = vector.broadcast %cst_166 : f32 to vector<8x96xf32>
    %842 = arith.subf %838, %841 : vector<8x96xf32>
    %843 = arith.cmpf one, %842, %842 : vector<8x96xf32>
    %844 = vector.broadcast %cst_166 : f32 to vector<8x96xf32>
    %845 = arith.addf %838, %844 : vector<8x96xf32>
    %846 = math.absf %842 : vector<8x96xf32>
    %cst_167 = arith.constant 0.000000e+00 : f32
    %847 = vector.broadcast %cst_167 : f32 to vector<8x96xf32>
    %848 = arith.subf %847, %846 : vector<8x96xf32>
    %849 = math.exp %848 : vector<8x96xf32>
    %850 = math.log1p %849 : vector<8x96xf32>
    %851 = arith.addf %840, %850 : vector<8x96xf32>
    %852 = arith.select %843, %845, %851 : vector<8x96xi1>, vector<8x96xf32>
    %cst_168 = arith.constant dense<0.000000e+00> : vector<8x36xf32>
    %853 = tpu.matmul %852, %320, %cst_168 {dimension_numbers = #tpu.dot_dimension_numbers<[1], [0], [0], [1], [0, 0, 1, 1], [], []>} : vector<8x96xf32>, vector<96x36xf32>, vector<8x36xf32> -> vector<8x36xf32>
    %854 = arith.addf %853, %313 : vector<8x36xf32>
    %855 = vector.extract_strided_slice %854 {offsets = [0, 0], sizes = [8, 32], strides = [1, 1]} : vector<8x36xf32> to vector<8x32xf32>
    %cst_169 = arith.constant 0.000000e+00 : f32
    %856 = vector.broadcast %cst_169 : f32 to vector<8x32xf32>
    %857 = arith.maximumf %855, %856 : vector<8x32xf32>
    %858 = vector.broadcast %cst_169 : f32 to vector<8x32xf32>
    %859 = arith.subf %855, %858 : vector<8x32xf32>
    %860 = arith.cmpf one, %859, %859 : vector<8x32xf32>
    %861 = vector.broadcast %cst_169 : f32 to vector<8x32xf32>
    %862 = arith.addf %855, %861 : vector<8x32xf32>
    %863 = math.absf %859 : vector<8x32xf32>
    %cst_170 = arith.constant 0.000000e+00 : f32
    %864 = vector.broadcast %cst_170 : f32 to vector<8x32xf32>
    %865 = arith.subf %864, %863 : vector<8x32xf32>
    %866 = math.exp %865 : vector<8x32xf32>
    %867 = math.log1p %866 : vector<8x32xf32>
    %868 = arith.addf %857, %867 : vector<8x32xf32>
    %869 = arith.select %860, %862, %868 : vector<8x32xi1>, vector<8x32xf32>
    %870 = vector.extract_strided_slice %854 {offsets = [0, 32], sizes = [8, 4], strides = [1, 1]} : vector<8x36xf32> to vector<8x4xf32>
    %871 = arith.negf %870 : vector<8x4xf32>
    %872 = math.exp %871 : vector<8x4xf32>
    %cst_171 = arith.constant 1.000000e+00 : f32
    %873 = vector.broadcast %cst_171 : f32 to vector<8x4xf32>
    %874 = arith.addf %873, %872 : vector<8x4xf32>
    %875 = arith.divf %873, %874 : vector<8x4xf32>
    %cst_172 = arith.constant dense<0.000000e+00> : vector<8x8xf32>
    %876 = tpu.matmul %869, %321, %cst_172 {dimension_numbers = #tpu.dot_dimension_numbers<[1], [0], [0], [1], [0, 0, 1, 1], [], []>} : vector<8x32xf32>, vector<32x8xf32>, vector<8x8xf32> -> vector<8x8xf32>
    %877 = arith.addf %876, %316 : vector<8x8xf32>
    %878 = vector.extract_strided_slice %877 {offsets = [0, 0], sizes = [8, 4], strides = [1, 1]} : vector<8x8xf32> to vector<8x4xf32>
    %879 = vector.extract_strided_slice %877 {offsets = [0, 4], sizes = [8, 4], strides = [1, 1]} : vector<8x8xf32> to vector<8x4xf32>
    %880 = arith.subf %878, %879 : vector<8x4xf32>
    %881 = arith.divf %880, %875 : vector<8x4xf32>
    %cst_173 = arith.constant 5.000000e-01 : f32
    %882 = arith.mulf %cst_173, %780 : f32
    %883 = arith.mulf %881, %881 : vector<8x4xf32>
    %884 = vector.broadcast %882 : f32 to vector<8x4xf32>
    %885 = arith.mulf %884, %883 : vector<8x4xf32>
    %886 = arith.addf %830, %885 : vector<8x4xf32>
    %887 = vector.broadcast %780 : f32 to vector<8x4xf32>
    %888 = arith.mulf %878, %887 : vector<8x4xf32>
    %889 = arith.addf %836, %888 : vector<8x4xf32>
    %c72 = arith.constant 72 : index
    %c0_174 = arith.constant 0 : index
    %890 = vector.load %arg2[%c72, %c0_174] : memref<112x4xf32, #tpu.memory_space<vmem>>, vector<8x4xf32>
    %891 = arith.mulf %875, %890 : vector<8x4xf32>
    %892 = arith.addf %889, %891 : vector<8x4xf32>
    %893 = vector.extract_strided_slice %310 {offsets = [8, 0], sizes = [8, 96], strides = [1, 1]} : vector<64x96xf32> to vector<8x96xf32>
    %c5 = arith.constant 5 : index
    %894 = memref.load %arg3[%c5] : memref<7xf32, #tpu.memory_space<smem>>
    %cst_175 = arith.constant dense<0.000000e+00> : vector<8x96xf32>
    %895 = tpu.matmul %892, %318, %cst_175 {dimension_numbers = #tpu.dot_dimension_numbers<[1], [0], [0], [1], [0, 0, 1, 1], [], []>} : vector<8x4xf32>, vector<4x96xf32>, vector<8x96xf32> -> vector<8x96xf32>
    %896 = arith.addf %895, %893 : vector<8x96xf32>
    %cst_176 = arith.constant 0.000000e+00 : f32
    %897 = vector.broadcast %cst_176 : f32 to vector<8x96xf32>
    %898 = arith.maximumf %896, %897 : vector<8x96xf32>
    %899 = vector.broadcast %cst_176 : f32 to vector<8x96xf32>
    %900 = arith.subf %896, %899 : vector<8x96xf32>
    %901 = arith.cmpf one, %900, %900 : vector<8x96xf32>
    %902 = vector.broadcast %cst_176 : f32 to vector<8x96xf32>
    %903 = arith.addf %896, %902 : vector<8x96xf32>
    %904 = math.absf %900 : vector<8x96xf32>
    %cst_177 = arith.constant 0.000000e+00 : f32
    %905 = vector.broadcast %cst_177 : f32 to vector<8x96xf32>
    %906 = arith.subf %905, %904 : vector<8x96xf32>
    %907 = math.exp %906 : vector<8x96xf32>
    %908 = math.log1p %907 : vector<8x96xf32>
    %909 = arith.addf %898, %908 : vector<8x96xf32>
    %910 = arith.select %901, %903, %909 : vector<8x96xi1>, vector<8x96xf32>
    %cst_178 = arith.constant dense<0.000000e+00> : vector<8x36xf32>
    %911 = tpu.matmul %910, %320, %cst_178 {dimension_numbers = #tpu.dot_dimension_numbers<[1], [0], [0], [1], [0, 0, 1, 1], [], []>} : vector<8x96xf32>, vector<96x36xf32>, vector<8x36xf32> -> vector<8x36xf32>
    %912 = arith.addf %911, %313 : vector<8x36xf32>
    %913 = vector.extract_strided_slice %912 {offsets = [0, 0], sizes = [8, 32], strides = [1, 1]} : vector<8x36xf32> to vector<8x32xf32>
    %cst_179 = arith.constant 0.000000e+00 : f32
    %914 = vector.broadcast %cst_179 : f32 to vector<8x32xf32>
    %915 = arith.maximumf %913, %914 : vector<8x32xf32>
    %916 = vector.broadcast %cst_179 : f32 to vector<8x32xf32>
    %917 = arith.subf %913, %916 : vector<8x32xf32>
    %918 = arith.cmpf one, %917, %917 : vector<8x32xf32>
    %919 = vector.broadcast %cst_179 : f32 to vector<8x32xf32>
    %920 = arith.addf %913, %919 : vector<8x32xf32>
    %921 = math.absf %917 : vector<8x32xf32>
    %cst_180 = arith.constant 0.000000e+00 : f32
    %922 = vector.broadcast %cst_180 : f32 to vector<8x32xf32>
    %923 = arith.subf %922, %921 : vector<8x32xf32>
    %924 = math.exp %923 : vector<8x32xf32>
    %925 = math.log1p %924 : vector<8x32xf32>
    %926 = arith.addf %915, %925 : vector<8x32xf32>
    %927 = arith.select %918, %920, %926 : vector<8x32xi1>, vector<8x32xf32>
    %928 = vector.extract_strided_slice %912 {offsets = [0, 32], sizes = [8, 4], strides = [1, 1]} : vector<8x36xf32> to vector<8x4xf32>
    %929 = arith.negf %928 : vector<8x4xf32>
    %930 = math.exp %929 : vector<8x4xf32>
    %cst_181 = arith.constant 1.000000e+00 : f32
    %931 = vector.broadcast %cst_181 : f32 to vector<8x4xf32>
    %932 = arith.addf %931, %930 : vector<8x4xf32>
    %933 = arith.divf %931, %932 : vector<8x4xf32>
    %cst_182 = arith.constant dense<0.000000e+00> : vector<8x8xf32>
    %934 = tpu.matmul %927, %321, %cst_182 {dimension_numbers = #tpu.dot_dimension_numbers<[1], [0], [0], [1], [0, 0, 1, 1], [], []>} : vector<8x32xf32>, vector<32x8xf32>, vector<8x8xf32> -> vector<8x8xf32>
    %935 = arith.addf %934, %316 : vector<8x8xf32>
    %936 = vector.extract_strided_slice %935 {offsets = [0, 0], sizes = [8, 4], strides = [1, 1]} : vector<8x8xf32> to vector<8x4xf32>
    %937 = vector.extract_strided_slice %935 {offsets = [0, 4], sizes = [8, 4], strides = [1, 1]} : vector<8x8xf32> to vector<8x4xf32>
    %938 = arith.subf %936, %937 : vector<8x4xf32>
    %939 = arith.divf %938, %933 : vector<8x4xf32>
    %cst_183 = arith.constant 5.000000e-01 : f32
    %940 = arith.mulf %cst_183, %894 : f32
    %941 = arith.mulf %939, %939 : vector<8x4xf32>
    %942 = vector.broadcast %940 : f32 to vector<8x4xf32>
    %943 = arith.mulf %942, %941 : vector<8x4xf32>
    %944 = arith.addf %886, %943 : vector<8x4xf32>
    %945 = vector.broadcast %894 : f32 to vector<8x4xf32>
    %946 = arith.mulf %936, %945 : vector<8x4xf32>
    %947 = arith.addf %892, %946 : vector<8x4xf32>
    %c80 = arith.constant 80 : index
    %c0_184 = arith.constant 0 : index
    %948 = vector.load %arg2[%c80, %c0_184] : memref<112x4xf32, #tpu.memory_space<vmem>>, vector<8x4xf32>
    %949 = arith.mulf %933, %948 : vector<8x4xf32>
    %950 = arith.addf %947, %949 : vector<8x4xf32>
    %cst_185 = arith.constant dense<0.000000e+00> : vector<8x96xf32>
    %951 = tpu.matmul %950, %318, %cst_185 {dimension_numbers = #tpu.dot_dimension_numbers<[1], [0], [0], [1], [0, 0, 1, 1], [], []>} : vector<8x4xf32>, vector<4x96xf32>, vector<8x96xf32> -> vector<8x96xf32>
    %952 = arith.addf %951, %893 : vector<8x96xf32>
    %cst_186 = arith.constant 0.000000e+00 : f32
    %953 = vector.broadcast %cst_186 : f32 to vector<8x96xf32>
    %954 = arith.maximumf %952, %953 : vector<8x96xf32>
    %955 = vector.broadcast %cst_186 : f32 to vector<8x96xf32>
    %956 = arith.subf %952, %955 : vector<8x96xf32>
    %957 = arith.cmpf one, %956, %956 : vector<8x96xf32>
    %958 = vector.broadcast %cst_186 : f32 to vector<8x96xf32>
    %959 = arith.addf %952, %958 : vector<8x96xf32>
    %960 = math.absf %956 : vector<8x96xf32>
    %cst_187 = arith.constant 0.000000e+00 : f32
    %961 = vector.broadcast %cst_187 : f32 to vector<8x96xf32>
    %962 = arith.subf %961, %960 : vector<8x96xf32>
    %963 = math.exp %962 : vector<8x96xf32>
    %964 = math.log1p %963 : vector<8x96xf32>
    %965 = arith.addf %954, %964 : vector<8x96xf32>
    %966 = arith.select %957, %959, %965 : vector<8x96xi1>, vector<8x96xf32>
    %cst_188 = arith.constant dense<0.000000e+00> : vector<8x36xf32>
    %967 = tpu.matmul %966, %320, %cst_188 {dimension_numbers = #tpu.dot_dimension_numbers<[1], [0], [0], [1], [0, 0, 1, 1], [], []>} : vector<8x96xf32>, vector<96x36xf32>, vector<8x36xf32> -> vector<8x36xf32>
    %968 = arith.addf %967, %313 : vector<8x36xf32>
    %969 = vector.extract_strided_slice %968 {offsets = [0, 0], sizes = [8, 32], strides = [1, 1]} : vector<8x36xf32> to vector<8x32xf32>
    %cst_189 = arith.constant 0.000000e+00 : f32
    %970 = vector.broadcast %cst_189 : f32 to vector<8x32xf32>
    %971 = arith.maximumf %969, %970 : vector<8x32xf32>
    %972 = vector.broadcast %cst_189 : f32 to vector<8x32xf32>
    %973 = arith.subf %969, %972 : vector<8x32xf32>
    %974 = arith.cmpf one, %973, %973 : vector<8x32xf32>
    %975 = vector.broadcast %cst_189 : f32 to vector<8x32xf32>
    %976 = arith.addf %969, %975 : vector<8x32xf32>
    %977 = math.absf %973 : vector<8x32xf32>
    %cst_190 = arith.constant 0.000000e+00 : f32
    %978 = vector.broadcast %cst_190 : f32 to vector<8x32xf32>
    %979 = arith.subf %978, %977 : vector<8x32xf32>
    %980 = math.exp %979 : vector<8x32xf32>
    %981 = math.log1p %980 : vector<8x32xf32>
    %982 = arith.addf %971, %981 : vector<8x32xf32>
    %983 = arith.select %974, %976, %982 : vector<8x32xi1>, vector<8x32xf32>
    %984 = vector.extract_strided_slice %968 {offsets = [0, 32], sizes = [8, 4], strides = [1, 1]} : vector<8x36xf32> to vector<8x4xf32>
    %985 = arith.negf %984 : vector<8x4xf32>
    %986 = math.exp %985 : vector<8x4xf32>
    %cst_191 = arith.constant 1.000000e+00 : f32
    %987 = vector.broadcast %cst_191 : f32 to vector<8x4xf32>
    %988 = arith.addf %987, %986 : vector<8x4xf32>
    %989 = arith.divf %987, %988 : vector<8x4xf32>
    %cst_192 = arith.constant dense<0.000000e+00> : vector<8x8xf32>
    %990 = tpu.matmul %983, %321, %cst_192 {dimension_numbers = #tpu.dot_dimension_numbers<[1], [0], [0], [1], [0, 0, 1, 1], [], []>} : vector<8x32xf32>, vector<32x8xf32>, vector<8x8xf32> -> vector<8x8xf32>
    %991 = arith.addf %990, %316 : vector<8x8xf32>
    %992 = vector.extract_strided_slice %991 {offsets = [0, 0], sizes = [8, 4], strides = [1, 1]} : vector<8x8xf32> to vector<8x4xf32>
    %993 = vector.extract_strided_slice %991 {offsets = [0, 4], sizes = [8, 4], strides = [1, 1]} : vector<8x8xf32> to vector<8x4xf32>
    %994 = arith.subf %992, %993 : vector<8x4xf32>
    %995 = arith.divf %994, %989 : vector<8x4xf32>
    %cst_193 = arith.constant 5.000000e-01 : f32
    %996 = arith.mulf %cst_193, %894 : f32
    %997 = arith.mulf %995, %995 : vector<8x4xf32>
    %998 = vector.broadcast %996 : f32 to vector<8x4xf32>
    %999 = arith.mulf %998, %997 : vector<8x4xf32>
    %1000 = arith.addf %944, %999 : vector<8x4xf32>
    %1001 = vector.broadcast %894 : f32 to vector<8x4xf32>
    %1002 = arith.mulf %992, %1001 : vector<8x4xf32>
    %1003 = arith.addf %950, %1002 : vector<8x4xf32>
    %c88 = arith.constant 88 : index
    %c0_194 = arith.constant 0 : index
    %1004 = vector.load %arg2[%c88, %c0_194] : memref<112x4xf32, #tpu.memory_space<vmem>>, vector<8x4xf32>
    %1005 = arith.mulf %989, %1004 : vector<8x4xf32>
    %1006 = arith.addf %1003, %1005 : vector<8x4xf32>
    %1007 = vector.extract_strided_slice %310 {offsets = [0, 0], sizes = [8, 96], strides = [1, 1]} : vector<64x96xf32> to vector<8x96xf32>
    %c6 = arith.constant 6 : index
    %1008 = memref.load %arg3[%c6] : memref<7xf32, #tpu.memory_space<smem>>
    %cst_195 = arith.constant dense<0.000000e+00> : vector<8x96xf32>
    %1009 = tpu.matmul %1006, %318, %cst_195 {dimension_numbers = #tpu.dot_dimension_numbers<[1], [0], [0], [1], [0, 0, 1, 1], [], []>} : vector<8x4xf32>, vector<4x96xf32>, vector<8x96xf32> -> vector<8x96xf32>
    %1010 = arith.addf %1009, %1007 : vector<8x96xf32>
    %cst_196 = arith.constant 0.000000e+00 : f32
    %1011 = vector.broadcast %cst_196 : f32 to vector<8x96xf32>
    %1012 = arith.maximumf %1010, %1011 : vector<8x96xf32>
    %1013 = vector.broadcast %cst_196 : f32 to vector<8x96xf32>
    %1014 = arith.subf %1010, %1013 : vector<8x96xf32>
    %1015 = arith.cmpf one, %1014, %1014 : vector<8x96xf32>
    %1016 = vector.broadcast %cst_196 : f32 to vector<8x96xf32>
    %1017 = arith.addf %1010, %1016 : vector<8x96xf32>
    %1018 = math.absf %1014 : vector<8x96xf32>
    %cst_197 = arith.constant 0.000000e+00 : f32
    %1019 = vector.broadcast %cst_197 : f32 to vector<8x96xf32>
    %1020 = arith.subf %1019, %1018 : vector<8x96xf32>
    %1021 = math.exp %1020 : vector<8x96xf32>
    %1022 = math.log1p %1021 : vector<8x96xf32>
    %1023 = arith.addf %1012, %1022 : vector<8x96xf32>
    %1024 = arith.select %1015, %1017, %1023 : vector<8x96xi1>, vector<8x96xf32>
    %cst_198 = arith.constant dense<0.000000e+00> : vector<8x36xf32>
    %1025 = tpu.matmul %1024, %320, %cst_198 {dimension_numbers = #tpu.dot_dimension_numbers<[1], [0], [0], [1], [0, 0, 1, 1], [], []>} : vector<8x96xf32>, vector<96x36xf32>, vector<8x36xf32> -> vector<8x36xf32>
    %1026 = arith.addf %1025, %313 : vector<8x36xf32>
    %1027 = vector.extract_strided_slice %1026 {offsets = [0, 0], sizes = [8, 32], strides = [1, 1]} : vector<8x36xf32> to vector<8x32xf32>
    %cst_199 = arith.constant 0.000000e+00 : f32
    %1028 = vector.broadcast %cst_199 : f32 to vector<8x32xf32>
    %1029 = arith.maximumf %1027, %1028 : vector<8x32xf32>
    %1030 = vector.broadcast %cst_199 : f32 to vector<8x32xf32>
    %1031 = arith.subf %1027, %1030 : vector<8x32xf32>
    %1032 = arith.cmpf one, %1031, %1031 : vector<8x32xf32>
    %1033 = vector.broadcast %cst_199 : f32 to vector<8x32xf32>
    %1034 = arith.addf %1027, %1033 : vector<8x32xf32>
    %1035 = math.absf %1031 : vector<8x32xf32>
    %cst_200 = arith.constant 0.000000e+00 : f32
    %1036 = vector.broadcast %cst_200 : f32 to vector<8x32xf32>
    %1037 = arith.subf %1036, %1035 : vector<8x32xf32>
    %1038 = math.exp %1037 : vector<8x32xf32>
    %1039 = math.log1p %1038 : vector<8x32xf32>
    %1040 = arith.addf %1029, %1039 : vector<8x32xf32>
    %1041 = arith.select %1032, %1034, %1040 : vector<8x32xi1>, vector<8x32xf32>
    %1042 = vector.extract_strided_slice %1026 {offsets = [0, 32], sizes = [8, 4], strides = [1, 1]} : vector<8x36xf32> to vector<8x4xf32>
    %1043 = arith.negf %1042 : vector<8x4xf32>
    %1044 = math.exp %1043 : vector<8x4xf32>
    %cst_201 = arith.constant 1.000000e+00 : f32
    %1045 = vector.broadcast %cst_201 : f32 to vector<8x4xf32>
    %1046 = arith.addf %1045, %1044 : vector<8x4xf32>
    %1047 = arith.divf %1045, %1046 : vector<8x4xf32>
    %cst_202 = arith.constant dense<0.000000e+00> : vector<8x8xf32>
    %1048 = tpu.matmul %1041, %321, %cst_202 {dimension_numbers = #tpu.dot_dimension_numbers<[1], [0], [0], [1], [0, 0, 1, 1], [], []>} : vector<8x32xf32>, vector<32x8xf32>, vector<8x8xf32> -> vector<8x8xf32>
    %1049 = arith.addf %1048, %316 : vector<8x8xf32>
    %1050 = vector.extract_strided_slice %1049 {offsets = [0, 0], sizes = [8, 4], strides = [1, 1]} : vector<8x8xf32> to vector<8x4xf32>
    %1051 = vector.extract_strided_slice %1049 {offsets = [0, 4], sizes = [8, 4], strides = [1, 1]} : vector<8x8xf32> to vector<8x4xf32>
    %1052 = arith.subf %1050, %1051 : vector<8x4xf32>
    %1053 = arith.divf %1052, %1047 : vector<8x4xf32>
    %cst_203 = arith.constant 5.000000e-01 : f32
    %1054 = arith.mulf %cst_203, %1008 : f32
    %1055 = arith.mulf %1053, %1053 : vector<8x4xf32>
    %1056 = vector.broadcast %1054 : f32 to vector<8x4xf32>
    %1057 = arith.mulf %1056, %1055 : vector<8x4xf32>
    %1058 = arith.addf %1000, %1057 : vector<8x4xf32>
    %1059 = vector.broadcast %1008 : f32 to vector<8x4xf32>
    %1060 = arith.mulf %1050, %1059 : vector<8x4xf32>
    %1061 = arith.addf %1006, %1060 : vector<8x4xf32>
    %c96_204 = arith.constant 96 : index
    %c0_205 = arith.constant 0 : index
    %1062 = vector.load %arg2[%c96_204, %c0_205] : memref<112x4xf32, #tpu.memory_space<vmem>>, vector<8x4xf32>
    %1063 = arith.mulf %1047, %1062 : vector<8x4xf32>
    %1064 = arith.addf %1061, %1063 : vector<8x4xf32>
    %cst_206 = arith.constant dense<0.000000e+00> : vector<8x96xf32>
    %1065 = tpu.matmul %1064, %318, %cst_206 {dimension_numbers = #tpu.dot_dimension_numbers<[1], [0], [0], [1], [0, 0, 1, 1], [], []>} : vector<8x4xf32>, vector<4x96xf32>, vector<8x96xf32> -> vector<8x96xf32>
    %1066 = arith.addf %1065, %1007 : vector<8x96xf32>
    %cst_207 = arith.constant 0.000000e+00 : f32
    %1067 = vector.broadcast %cst_207 : f32 to vector<8x96xf32>
    %1068 = arith.maximumf %1066, %1067 : vector<8x96xf32>
    %1069 = vector.broadcast %cst_207 : f32 to vector<8x96xf32>
    %1070 = arith.subf %1066, %1069 : vector<8x96xf32>
    %1071 = arith.cmpf one, %1070, %1070 : vector<8x96xf32>
    %1072 = vector.broadcast %cst_207 : f32 to vector<8x96xf32>
    %1073 = arith.addf %1066, %1072 : vector<8x96xf32>
    %1074 = math.absf %1070 : vector<8x96xf32>
    %cst_208 = arith.constant 0.000000e+00 : f32
    %1075 = vector.broadcast %cst_208 : f32 to vector<8x96xf32>
    %1076 = arith.subf %1075, %1074 : vector<8x96xf32>
    %1077 = math.exp %1076 : vector<8x96xf32>
    %1078 = math.log1p %1077 : vector<8x96xf32>
    %1079 = arith.addf %1068, %1078 : vector<8x96xf32>
    %1080 = arith.select %1071, %1073, %1079 : vector<8x96xi1>, vector<8x96xf32>
    %cst_209 = arith.constant dense<0.000000e+00> : vector<8x36xf32>
    %1081 = tpu.matmul %1080, %320, %cst_209 {dimension_numbers = #tpu.dot_dimension_numbers<[1], [0], [0], [1], [0, 0, 1, 1], [], []>} : vector<8x96xf32>, vector<96x36xf32>, vector<8x36xf32> -> vector<8x36xf32>
    %1082 = arith.addf %1081, %313 : vector<8x36xf32>
    %1083 = vector.extract_strided_slice %1082 {offsets = [0, 0], sizes = [8, 32], strides = [1, 1]} : vector<8x36xf32> to vector<8x32xf32>
    %cst_210 = arith.constant 0.000000e+00 : f32
    %1084 = vector.broadcast %cst_210 : f32 to vector<8x32xf32>
    %1085 = arith.maximumf %1083, %1084 : vector<8x32xf32>
    %1086 = vector.broadcast %cst_210 : f32 to vector<8x32xf32>
    %1087 = arith.subf %1083, %1086 : vector<8x32xf32>
    %1088 = arith.cmpf one, %1087, %1087 : vector<8x32xf32>
    %1089 = vector.broadcast %cst_210 : f32 to vector<8x32xf32>
    %1090 = arith.addf %1083, %1089 : vector<8x32xf32>
    %1091 = math.absf %1087 : vector<8x32xf32>
    %cst_211 = arith.constant 0.000000e+00 : f32
    %1092 = vector.broadcast %cst_211 : f32 to vector<8x32xf32>
    %1093 = arith.subf %1092, %1091 : vector<8x32xf32>
    %1094 = math.exp %1093 : vector<8x32xf32>
    %1095 = math.log1p %1094 : vector<8x32xf32>
    %1096 = arith.addf %1085, %1095 : vector<8x32xf32>
    %1097 = arith.select %1088, %1090, %1096 : vector<8x32xi1>, vector<8x32xf32>
    %1098 = vector.extract_strided_slice %1082 {offsets = [0, 32], sizes = [8, 4], strides = [1, 1]} : vector<8x36xf32> to vector<8x4xf32>
    %1099 = arith.negf %1098 : vector<8x4xf32>
    %1100 = math.exp %1099 : vector<8x4xf32>
    %cst_212 = arith.constant 1.000000e+00 : f32
    %1101 = vector.broadcast %cst_212 : f32 to vector<8x4xf32>
    %1102 = arith.addf %1101, %1100 : vector<8x4xf32>
    %1103 = arith.divf %1101, %1102 : vector<8x4xf32>
    %cst_213 = arith.constant dense<0.000000e+00> : vector<8x8xf32>
    %1104 = tpu.matmul %1097, %321, %cst_213 {dimension_numbers = #tpu.dot_dimension_numbers<[1], [0], [0], [1], [0, 0, 1, 1], [], []>} : vector<8x32xf32>, vector<32x8xf32>, vector<8x8xf32> -> vector<8x8xf32>
    %1105 = arith.addf %1104, %316 : vector<8x8xf32>
    %1106 = vector.extract_strided_slice %1105 {offsets = [0, 0], sizes = [8, 4], strides = [1, 1]} : vector<8x8xf32> to vector<8x4xf32>
    %1107 = vector.extract_strided_slice %1105 {offsets = [0, 4], sizes = [8, 4], strides = [1, 1]} : vector<8x8xf32> to vector<8x4xf32>
    %1108 = arith.subf %1106, %1107 : vector<8x4xf32>
    %1109 = arith.divf %1108, %1103 : vector<8x4xf32>
    %cst_214 = arith.constant 5.000000e-01 : f32
    %1110 = arith.mulf %cst_214, %1008 : f32
    %1111 = arith.mulf %1109, %1109 : vector<8x4xf32>
    %1112 = vector.broadcast %1110 : f32 to vector<8x4xf32>
    %1113 = arith.mulf %1112, %1111 : vector<8x4xf32>
    %1114 = arith.addf %1058, %1113 : vector<8x4xf32>
    %1115 = vector.broadcast %1008 : f32 to vector<8x4xf32>
    %1116 = arith.mulf %1106, %1115 : vector<8x4xf32>
    %1117 = arith.addf %1064, %1116 : vector<8x4xf32>
    %c104_215 = arith.constant 104 : index
    %c0_216 = arith.constant 0 : index
    %1118 = vector.load %arg2[%c104_215, %c0_216] : memref<112x4xf32, #tpu.memory_space<vmem>>, vector<8x4xf32>
    %1119 = arith.mulf %1103, %1118 : vector<8x4xf32>
    %1120 = arith.addf %1117, %1119 : vector<8x4xf32>
    %1121 = tpu.concatenate %302, %436, %550, %664, %778, %892, %1006, %1120 in 0 : vector<8x4xf32>, vector<8x4xf32>, vector<8x4xf32>, vector<8x4xf32>, vector<8x4xf32>, vector<8x4xf32>, vector<8x4xf32>, vector<8x4xf32> -> vector<64x4xf32>
    %cst_217 = arith.constant dense<0.000000e+00> : vector<64x4xf32>
    %1122 = tpu.matmul %1121, %319, %cst_217 {dimension_numbers = #tpu.dot_dimension_numbers<[1], [0], [0], [1], [0, 0, 1, 1], [], []>} : vector<64x4xf32>, vector<4x4xf32>, vector<64x4xf32> -> vector<64x4xf32>
    %c0_218 = arith.constant 0 : index
    %c252 = arith.constant 252 : index
    %1123 = vector.load %arg10[%c0_218, %c252] : memref<1x264xf32, #tpu.memory_space<vmem>>, vector<1x4xf32>
    %1124 = vector.broadcast %1123 : vector<1x4xf32> to vector<64x4xf32>
    %1125 = arith.addf %1122, %1124 : vector<64x4xf32>
    %1126 = arith.subf %0, %1125 : vector<64x4xf32>
    %1127 = arith.mulf %1126, %1126 : vector<64x4xf32>
    %cst_219 = arith.constant -5.000000e+01 : f32
    %1128 = vector.broadcast %cst_219 : f32 to vector<64x4xf32>
    %1129 = arith.mulf %1128, %1127 : vector<64x4xf32>
    %cst_220 = arith.constant 1.38364661 : f32
    %1130 = vector.broadcast %cst_220 : f32 to vector<64x4xf32>
    %1131 = arith.addf %1129, %1130 : vector<64x4xf32>
    %1132 = vector.broadcast %1 : vector<64x1xf32> to vector<64x4xf32>
    %1133 = arith.mulf %1131, %1132 : vector<64x4xf32>
    %1134 = vector.shape_cast %1133 : vector<64x4xf32> to vector<1x64x4xf32>
    %cst_221 = arith.constant dense<0.000000e+00> : vector<1xf32>
    %1135 = vector.multi_reduction <add>, %1134, %cst_221 [1, 2] : vector<1x64x4xf32> to vector<1xf32>
    %1136 = vector.shape_cast %1135 : vector<1xf32> to vector<1x1x1xf32>
    %1137 = vector.extract %1136[0, 0, 0] : f32 from vector<1x1x1xf32>
    %cst_222 = arith.constant 1.250000e-01 : f32
    %1138 = arith.mulf %1137, %cst_222 : f32
    %c0_223 = arith.constant 0 : index
    %c256 = arith.constant 256 : index
    %1139 = vector.load %arg10[%c0_223, %c256] : memref<1x264xf32, #tpu.memory_space<vmem>>, vector<1x4xf32>
    %c0_224 = arith.constant 0 : index
    %c260 = arith.constant 260 : index
    %1140 = vector.load %arg10[%c0_224, %c260] : memref<1x264xf32, #tpu.memory_space<vmem>>, vector<1x4xf32>
    %1141 = vector.broadcast %1140 : vector<1x4xf32> to vector<8x4xf32>
    %1142 = arith.subf %298, %1141 : vector<8x4xf32>
    %cst_225 = arith.constant 2.000000e+00 : f32
    %1143 = vector.broadcast %cst_225 : f32 to vector<8x4xf32>
    %1144 = arith.mulf %1143, %1142 : vector<8x4xf32>
    %1145 = math.exp %1144 : vector<8x4xf32>
    %1146 = vector.broadcast %1139 : vector<1x4xf32> to vector<8x4xf32>
    %1147 = arith.subf %297, %1146 : vector<8x4xf32>
    %1148 = arith.mulf %1147, %1147 : vector<8x4xf32>
    %cst_226 = arith.constant -2.000000e+00 : f32
    %1149 = vector.broadcast %cst_226 : f32 to vector<1x4xf32>
    %1150 = arith.mulf %1149, %1140 : vector<1x4xf32>
    %1151 = math.exp %1150 : vector<1x4xf32>
    %1152 = vector.broadcast %1151 : vector<1x4xf32> to vector<8x4xf32>
    %1153 = arith.mulf %1148, %1152 : vector<8x4xf32>
    %1154 = arith.addf %1145, %1153 : vector<8x4xf32>
    %cst_227 = arith.constant 1.000000e+00 : f32
    %1155 = vector.broadcast %cst_227 : f32 to vector<8x4xf32>
    %1156 = arith.subf %1154, %1155 : vector<8x4xf32>
    %cst_228 = arith.constant 5.000000e-01 : f32
    %1157 = vector.broadcast %cst_228 : f32 to vector<8x4xf32>
    %1158 = arith.mulf %1157, %1156 : vector<8x4xf32>
    %1159 = vector.broadcast %1140 : vector<1x4xf32> to vector<8x4xf32>
    %1160 = arith.subf %298, %1159 : vector<8x4xf32>
    %1161 = arith.subf %1158, %1160 : vector<8x4xf32>
    %1162 = vector.shape_cast %1161 : vector<8x4xf32> to vector<1x8x4xf32>
    %cst_229 = arith.constant dense<0.000000e+00> : vector<1xf32>
    %1163 = vector.multi_reduction <add>, %1162, %cst_229 [1, 2] : vector<1x8x4xf32> to vector<1xf32>
    %1164 = vector.shape_cast %1163 : vector<1xf32> to vector<1x1x1xf32>
    %1165 = vector.extract %1164[0, 0, 0] : f32 from vector<1x1x1xf32>
    %1166 = vector.shape_cast %1114 : vector<8x4xf32> to vector<1x8x4xf32>
    %cst_230 = arith.constant dense<0.000000e+00> : vector<1xf32>
    %1167 = vector.multi_reduction <add>, %1166, %cst_230 [1, 2] : vector<1x8x4xf32> to vector<1xf32>
    %1168 = vector.shape_cast %1167 : vector<1xf32> to vector<1x1x1xf32>
    %1169 = vector.extract %1168[0, 0, 0] : f32 from vector<1x1x1xf32>
    %1170 = arith.addf %1165, %1169 : f32
    %cst_231 = arith.constant 1.250000e-01 : f32
    %1171 = arith.mulf %1170, %cst_231 : f32
    %1172 = vector.broadcast %1138 : f32 to vector<1x1xf32>
    %1173 = vector.broadcast %1171 : f32 to vector<1x1xf32>
    %1174 = tpu.concatenate %1172, %1173 in 1 : vector<1x1xf32>, vector<1x1xf32> -> vector<1x2xf32>
    %c0_232 = arith.constant 0 : index
    %c0_233 = arith.constant 0 : index
    %1175 = vector.load %arg11[%c0_232, %c0_233] : memref<1x2xf32, #tpu.memory_space<vmem>>, vector<1x2xf32>
    tpu.vector_store %arg11[%c0_232, %c0_233], %1174 {strides = array<i32>} : memref<1x2xf32, #tpu.memory_space<vmem>>, vector<1x2xf32>,
    return
  }
}

</mosaic_0001>

<llo_original>
// kernel: latent_sde_forward.3
$region0: #{latent_sde_forward.3}
  #allocation0 [shape = 'u32[]', space=smem, size = 0x4, offset = 0x4, fixed_abs, tag = 'smem constant byte address 0x4 - core index']
  #allocation1 [shape = 'u32[72,128]{1,0:T(1,128)}', space=vmem, size = 0x9000, scoped, tag = 'internal scratch']
  %s0 = inlined_call_operand.vmem [shape: f32[64,5], index: 0, kind: input, shape index: {}]
  %s1 = inlined_call_operand.vmem [shape: f32[8,4], index: 1, kind: input, shape index: {}]
  %s2 = inlined_call_operand.vmem [shape: f32[112,4], index: 2, kind: input, shape index: {}]
  %s3 = inlined_call_operand.vmem [shape: f32[7], index: 3, kind: input, shape index: {}]
  %s4 = inlined_call_operand.vmem [shape: f32[4,48], index: 4, kind: input, shape index: {}]
  %s5 = inlined_call_operand.vmem [shape: f32[16,56], index: 5, kind: input, shape index: {}]
  %s6 = inlined_call_operand.vmem [shape: f32[8,40], index: 6, kind: input, shape index: {}]
  %s7 = inlined_call_operand.vmem [shape: f32[4,100], index: 7, kind: input, shape index: {}]
  %s8 = inlined_call_operand.vmem [shape: f32[96,36], index: 8, kind: input, shape index: {}]
  %s9 = inlined_call_operand.vmem [shape: f32[32,8], index: 9, kind: input, shape index: {}]
  %s10 = inlined_call_operand.vmem [shape: f32[1,264], index: 10, kind: input, shape index: {}]
  %s11 = inlined_call_operand.vmem [shape: f32[1,2], index: 11, kind: output, shape index: {}]
  %s12 = sld [smem:[#allocation0]]
  $region58: #{latent_sde_forward.3} parent=0
    _
  %s14 = ssub.s32 1, %s12
  %s15 = scalar_select 0, %s14, %s12
  $region1: #{latent_sde_forward.3} parent=0
    #allocation2 [shape = 'u8[512]{0}', space=smem, size = 0x200, scoped, tag = 'input window, operand 3, single buffered']
    #allocation3 [shape = 's32[1]{0}', space=sflag, size = 0x4, scoped, tag = 'scoped memory for latent_sde_forward.3']
    %16 = vsyncpa [#allocation3], 0
    // Predicated region
    $region2: #{latent_sde_forward.3} parent=1 // pred_check
      _
    $region3: #{latent_sde_forward.3} parent=1 // pred_check_branch
      %18 = sbr.rel (0) target = $region5
    $region4: #{latent_sde_forward.3} parent=1 // pred_region
      _
    $region5: #{latent_sde_forward.3} parent=1 // pred_fallthru
      _
    // Predicated region
    $region6: #{latent_sde_forward.3} parent=1 // pred_check
      _
    $region7: #{latent_sde_forward.3} parent=1 // pred_check_branch
      %20 = sbr.rel (0) target = $region9
    $region8: #{latent_sde_forward.3} parent=1 // pred_region
      _
    $region9: #{latent_sde_forward.3} parent=1 // pred_fallthru
      _
    // Predicated region
    $region10: #{latent_sde_forward.3} parent=1 // pred_check
      _
    $region11: #{latent_sde_forward.3} parent=1 // pred_check_branch
      %22 = sbr.rel (0) target = $region13
    $region12: #{latent_sde_forward.3} parent=1 // pred_region
      _
    $region13: #{latent_sde_forward.3} parent=1 // pred_fallthru
      _
    // Predicated region
    $region14: #{latent_sde_forward.3} parent=1 // pred_check
      _
    $region15: #{latent_sde_forward.3} parent=1 // pred_check_branch
      %24 = sbr.rel (0) target = $region17
    $region16: #{latent_sde_forward.3} parent=1 // pred_region
      %26 = vsyncadd [#allocation3], 0
      %s28 = sshll.u32 %s3, 4
      %s29 = int_to_ptr.vmem [resolvable:$true] %s28
      %31 = dma.vmem_to_smem %s29, 16, [#allocation2], [#allocation3]
    $region17: #{latent_sde_forward.3} parent=1 // pred_fallthru
      _
    // Predicated region
    $region18: #{latent_sde_forward.3} parent=1 // pred_check
      _
    $region19: #{latent_sde_forward.3} parent=1 // pred_check_branch
      %33 = sbr.rel (0) target = $region21
    $region20: #{latent_sde_forward.3} parent=1 // pred_region
      _
    $region21: #{latent_sde_forward.3} parent=1 // pred_fallthru
      _
    // Predicated region
    $region22: #{latent_sde_forward.3} parent=1 // pred_check
      _
    $region23: #{latent_sde_forward.3} parent=1 // pred_check_branch
      %35 = sbr.rel (0) target = $region25
    $region24: #{latent_sde_forward.3} parent=1 // pred_region
      _
    $region25: #{latent_sde_forward.3} parent=1 // pred_fallthru
      _
    // Predicated region
    $region26: #{latent_sde_forward.3} parent=1 // pred_check
      _
    $region27: #{latent_sde_forward.3} parent=1 // pred_check_branch
      %37 = sbr.rel (0) target = $region29
    $region28: #{latent_sde_forward.3} parent=1 // pred_region
      _
    $region29: #{latent_sde_forward.3} parent=1 // pred_fallthru
      _
    // Predicated region
    $region30: #{latent_sde_forward.3} parent=1 // pred_check
      _
    $region31: #{latent_sde_forward.3} parent=1 // pred_check_branch
      %39 = sbr.rel (0) target = $region33
    $region32: #{latent_sde_forward.3} parent=1 // pred_region
      _
    $region33: #{latent_sde_forward.3} parent=1 // pred_fallthru
      _
    // Predicated region
    $region34: #{latent_sde_forward.3} parent=1 // pred_check
      _
    $region35: #{latent_sde_forward.3} parent=1 // pred_check_branch
      %41 = sbr.rel (0) target = $region37
    $region36: #{latent_sde_forward.3} parent=1 // pred_region
      _
    $region37: #{latent_sde_forward.3} parent=1 // pred_fallthru
      _
    // Predicated region
    $region38: #{latent_sde_forward.3} parent=1 // pred_check
      _
    $region39: #{latent_sde_forward.3} parent=1 // pred_check_branch
      %43 = sbr.rel (0) target = $region41
    $region40: #{latent_sde_forward.3} parent=1 // pred_region
      _
    $region41: #{latent_sde_forward.3} parent=1 // pred_fallthru
      _
    // Predicated region
    $region42: #{latent_sde_forward.3} parent=1 // pred_check
      _
    $region43: #{latent_sde_forward.3} parent=1 // pred_check_branch
      %45 = sbr.rel (0) target = $region45
    $region44: #{latent_sde_forward.3} parent=1 // pred_region
      _
    $region45: #{latent_sde_forward.3} parent=1 // pred_fallthru
      _
    // Predicated region
    $region46: #{latent_sde_forward.3} parent=1 // pred_check
      _
    $region47: #{latent_sde_forward.3} parent=1 // pred_check_branch
      %47 = sbr.rel (0) target = $region49
    $region48: #{latent_sde_forward.3} parent=1 // pred_region
      %49 = dma.done [#allocation3], 16
    $region49: #{latent_sde_forward.3} parent=1 // pred_fallthru
      _
    %50 = sfence
    %v51 = vld [vmem:[%s0] sm:$0xff]
    %v52 = vld [vmem:[%s0 + $0x8] sm:$0xff]
    %v53 = vld [vmem:[%s0 + $0x10] sm:$0xff]
    %v54 = vld [vmem:[%s0 + $0x18] sm:$0xff]
    %v55 = vld [vmem:[%s0 + $0x20] sm:$0xff]
    %v56 = vld [vmem:[%s0 + $0x28] sm:$0xff]
    %v57 = vld [vmem:[%s0 + $0x30] sm:$0xff]
    %v58 = vld [vmem:[%s0 + $0x38] sm:$0xff]
    %v59 = vadd.f32 %v51, 0.0
    %v60 = vadd.f32 %v59, %v52
    %v61 = vadd.f32 %v60, %v53
    %v62 = vadd.f32 %v61, %v54
    %v63 = vadd.f32 %v62, %v55
    %v64 = vadd.f32 %v63, %v56
    %v65 = vadd.f32 %v64, %v57
    %v66 = vadd.f32 %v65, %v58
    %v67 = vld [vmem:[%s4] sm:$0xf]
    %v68 = vld [vmem:[%s10] sm:$0x1]
    %v70 = vperm.slane %v68, 0
    %vm72 = vcmask 31744
    %v74 = vsel %vm72, %v51, 0
    %v77 = vsel %vm72, %v52, 0
    %v80 = vsel %vm72, %v53, 0
    %v83 = vsel %vm72, %v54, 0
    %v86 = vsel %vm72, %v55, 0
    %v89 = vsel %vm72, %v56, 0
    %v92 = vsel %vm72, %v57, 0
    %v95 = vsel %vm72, %v58, 0
    %vm97 = vcmask 1043456
    %v99 = vsel %vm97, %v67, 0
    %101 = vmatpush.msra.mxu0 0.0
    %102 = vmatpush.msra.mxu0 0.0
    %103 = vmatpush.msra.mxu0 0.0
    %104 = vmatpush.msra.mxu0 0.0
    %105 = vmatpush.msra.mxu0 0.0
    %106 = vmatpush.msra.mxu0 0.0
    %107 = vmatpush.msra.mxu0 0.0
    %108 = vmatpush.msra.mxu0 0.0
    %109 = vmatpush.msra.mxu0 0.0
    %110 = vmatpush.msra.mxu0 0.0
    %111 = vmatpush.msra.mxu0 0.0
    %112 = vmatpush.msra.mxu0 0.0
    %113 = vmatpush.msra.mxu0 0.0
    %114 = vmatpush.msra.mxu0 0.0
    %115 = vmatpush.msra.mxu0 0.0
    %116 = vmatpush.msra.mxu0 %v99
    %117 = vmatmul.f32.gmra.mxu0 %v74
    %v118 = vpop.f32.mrf.mxu0
    %v119 = vadd.f32 %v70, %v118
    %120 = vmatmul.f32.gmra.mxu0 %v77
    %v121 = vpop.f32.mrf.mxu0
    %v122 = vadd.f32 %v70, %v121
    %123 = vmatmul.f32.gmra.mxu0 %v80
    %v124 = vpop.f32.mrf.mxu0
    %v125 = vadd.f32 %v70, %v124
    %126 = vmatmul.f32.gmra.mxu0 %v83
    %v127 = vpop.f32.mrf.mxu0
    %v128 = vadd.f32 %v70, %v127
    %129 = vmatmul.f32.gmra.mxu0 %v86
    %v130 = vpop.f32.mrf.mxu0
    %v131 = vadd.f32 %v70, %v130
    %132 = vmatmul.f32.gmra.mxu0 %v89
    %v133 = vpop.f32.mrf.mxu0
    %v134 = vadd.f32 %v70, %v133
    %135 = vmatmul.f32.gmra.mxu0 %v92
    %v136 = vpop.f32.mrf.mxu0
    %v137 = vadd.f32 %v70, %v136
    %138 = vmatmul.f32.gmra.mxu0 %v95
    %v139 = vpop.f32.mrf.mxu0
    %v140 = vadd.f32 %v70, %v139
    %141 = vdwg.mxu0
    %v142 = vld [vmem:[%s5] sm:$0xff]
    %v143 = vld [vmem:[%s5 + $0x8] sm:$0xff]
    %144 = vrot.lane.b32.xlu0 %v70, 80
    %v145 = vpop.permute.xlu0 %144
    %vm147 = vcmask 130048
    %v149 = vsel %vm147, 0.0, 0
    %151 = vmatpush.msra.mxu0 0.0
    %152 = vmatpush.msra.mxu0 0.0
    %153 = vmatpush.msra.mxu0 0.0
    %154 = vmatpush.msra.mxu0 0.0
    %155 = vmatpush.msra.mxu0 0.0
    %156 = vmatpush.msra.mxu0 0.0
    %157 = vmatpush.msra.mxu0 0.0
    %158 = vmatpush.msra.mxu0 0.0
    %159 = vmatpush.msra.mxu0 0.0
    %160 = vmatpush.msra.mxu0 0.0
    %161 = vmatpush.msra.mxu0 0.0
    %162 = vmatpush.msra.mxu0 0.0
    %163 = vmatpush.msra.mxu0 0.0
    %164 = vmatpush.msra.mxu0 0.0
    %165 = vmatpush.msra.mxu0 %v143
    %166 = vmatpush.msra.mxu0 %v142
    %167 = vmatmul.f32.gmra.mxu0 %v149
    %v168 = vpop.f32.mrf.mxu0
    %v169 = vadd.f32 %v145, %v168
    %170 = vdwg.mxu0
    %v171 = vadd.f32 %v140, %v169
    %v172 = vxor.u32 %v171, 2147483648
    %v173 = vmul.f32 %v172, 1.442695
    %v174 = vpow.pop %v173
    %v175 = vadd.f32 %v174, 1.0
    %v176 = vrcp.pop %v175
    %v177 = vmul.f32 %v175, %v176
    %v178 = vsub.f32 1.0, %v177
    %v179 = vmul.f32 %v176, %v178
    %v180 = vadd.f32 %v176, %v179
    %vm181 = vweird.f32 %v175
    %vm182 = vweird.f32 %v176
    %vm183 = vmor %vm181, %vm182
    %v184 = vsel %vm183, %v176, %v180
    %v185 = vand.u32 2147483647, %v175
    %vm186 = vcmp.eq.f32.partialorder %v185, 8.507059e+37
    %v187 = vand.u32 %v175, 2147483648
    %v188 = vor.u32 1.1754944e-38, %v187
    %v189 = vsel %vm186, %v188, %v184
    %v190 = vmul.f32 1.0, %v189
    %192 = vrot.lane.b32.xlu0 %v169, 96
    %v193 = vpop.permute.xlu0 %192
    %v195 = vmul.f32 %v190, %v193
    %197 = vrot.lane.b32.xlu0 %v195, 32
    %v198 = vpop.permute.xlu0 %197
    %v200 = vadd.f32 %v140, %v198
    %v201 = vtanh.pop %v200
    %v202 = vsub.f32 1.0, %v190
    %204 = vrot.lane.b32.xlu0 %v201, 112
    %v205 = vpop.permute.xlu0 %204
    %v207 = vmul.f32 %v202, %v205
    %v208 = vmul.f32 %v190, 0.0
    %v209 = vadd.f32 %v207, %v208
    %vm210 = vcmp.gt.f32.partialorder %v66, 0.0
    %v211 = vsel %vm210, 1, 0
    %212 = vset.pattern.permute.xlu0 4
    %213 = vperm.xlu0 %212, %v211
    %v214 = vpop.permute.xlu0 %213
    %vm215 = vcmp.eq.s32.totalorder %v214, 1
    %v216 = vsel %vm215, %v209, 0.0
    %218 = vrot.lane.b32.xlu0 %v216, 112
    %v219 = vpop.permute.xlu0 %218
    %v220 = vsel %vm147, %v219, 0
    %222 = vmatpush.msra.mxu0 0.0
    %223 = vmatpush.msra.mxu0 0.0
    %224 = vmatpush.msra.mxu0 0.0
    %225 = vmatpush.msra.mxu0 0.0
    %226 = vmatpush.msra.mxu0 0.0
    %227 = vmatpush.msra.mxu0 0.0
    %228 = vmatpush.msra.mxu0 0.0
    %229 = vmatpush.msra.mxu0 0.0
    %230 = vmatpush.msra.mxu0 0.0
    %231 = vmatpush.msra.mxu0 0.0
    %232 = vmatpush.msra.mxu0 0.0
    %233 = vmatpush.msra.mxu0 0.0
    %234 = vmatpush.msra.mxu0 0.0
    %235 = vmatpush.msra.mxu0 0.0
    %236 = vmatpush.msra.mxu0 %v143
    %237 = vmatpush.msra.mxu0 %v142
    %238 = vmatmul.f32.gmra.mxu0 %v220
    %v239 = vpop.f32.mrf.mxu0
    %v240 = vadd.f32 %v145, %v239
    %241 = vdwg.mxu0
    %v242 = vadd.f32 %v137, %v240
    %v243 = vxor.u32 %v242, 2147483648
    %v244 = vmul.f32 %v243, 1.442695
    %v245 = vpow.pop %v244
    %v246 = vadd.f32 %v245, 1.0
    %v247 = vrcp.pop %v246
    %v248 = vmul.f32 %v246, %v247
    %v249 = vsub.f32 1.0, %v248
    %v250 = vmul.f32 %v247, %v249
    %v251 = vadd.f32 %v247, %v250
    %vm252 = vweird.f32 %v246
    %vm253 = vweird.f32 %v247
    %vm254 = vmor %vm252, %vm253
    %v255 = vsel %vm254, %v247, %v251
    %v256 = vand.u32 2147483647, %v246
    %vm257 = vcmp.eq.f32.partialorder %v256, 8.507059e+37
    %v258 = vand.u32 %v246, 2147483648
    %v259 = vor.u32 1.1754944e-38, %v258
    %v260 = vsel %vm257, %v259, %v255
    %v261 = vmul.f32 1.0, %v260
    %263 = vrot.lane.b32.xlu0 %v240, 96
    %v264 = vpop.permute.xlu0 %263
    %v266 = vmul.f32 %v261, %v264
    %268 = vrot.lane.b32.xlu0 %v266, 32
    %v269 = vpop.permute.xlu0 %268
    %v271 = vadd.f32 %v137, %v269
    %v272 = vtanh.pop %v271
    %v273 = vsub.f32 1.0, %v261
    %275 = vrot.lane.b32.xlu0 %v272, 112
    %v276 = vpop.permute.xlu0 %275
    %v278 = vmul.f32 %v273, %v276
    %v279 = vmul.f32 %v261, %v216
    %v280 = vadd.f32 %v278, %v279
    %vm281 = vcmp.gt.f32.partialorder %v66, 1.0
    %v282 = vsel %vm281, 1, 0
    %283 = vset.pattern.permute.xlu0 4
    %284 = vperm.xlu0 %283, %v282
    %v285 = vpop.permute.xlu0 %284
    %vm286 = vcmp.eq.s32.totalorder %v285, 1
    %v287 = vsel %vm286, %v280, %v216
    %v288 = vsel %vm286, %v280, 0.0
    %290 = vrot.lane.b32.xlu0 %v287, 112
    %v291 = vpop.permute.xlu0 %290
    %v292 = vsel %vm147, %v291, 0
    %294 = vmatpush.msra.mxu0 0.0
    %295 = vmatpush.msra.mxu0 0.0
    %296 = vmatpush.msra.mxu0 0.0
    %297 = vmatpush.msra.mxu0 0.0
    %298 = vmatpush.msra.mxu0 0.0
    %299 = vmatpush.msra.mxu0 0.0
    %300 = vmatpush.msra.mxu0 0.0
    %301 = vmatpush.msra.mxu0 0.0
    %302 = vmatpush.msra.mxu0 0.0
    %303 = vmatpush.msra.mxu0 0.0
    %304 = vmatpush.msra.mxu0 0.0
    %305 = vmatpush.msra.mxu0 0.0
    %306 = vmatpush.msra.mxu0 0.0
    %307 = vmatpush.msra.mxu0 0.0
    %308 = vmatpush.msra.mxu0 %v143
    %309 = vmatpush.msra.mxu0 %v142
    %310 = vmatmul.f32.gmra.mxu0 %v292
    %v311 = vpop.f32.mrf.mxu0
    %v312 = vadd.f32 %v145, %v311
    %313 = vdwg.mxu0
    %v314 = vadd.f32 %v134, %v312
    %v315 = vxor.u32 %v314, 2147483648
    %v316 = vmul.f32 %v315, 1.442695
    %v317 = vpow.pop %v316
    %v318 = vadd.f32 %v317, 1.0
    %v319 = vrcp.pop %v318
    %v320 = vmul.f32 %v318, %v319
    %v321 = vsub.f32 1.0, %v320
    %v322 = vmul.f32 %v319, %v321
    %v323 = vadd.f32 %v319, %v322
    %vm324 = vweird.f32 %v318
    %vm325 = vweird.f32 %v319
    %vm326 = vmor %vm324, %vm325
    %v327 = vsel %vm326, %v319, %v323
    %v328 = vand.u32 2147483647, %v318
    %vm329 = vcmp.eq.f32.partialorder %v328, 8.507059e+37
    %v330 = vand.u32 %v318, 2147483648
    %v331 = vor.u32 1.1754944e-38, %v330
    %v332 = vsel %vm329, %v331, %v327
    %v333 = vmul.f32 1.0, %v332
    %335 = vrot.lane.b32.xlu0 %v312, 96
    %v336 = vpop.permute.xlu0 %335
    %v338 = vmul.f32 %v333, %v336
    %340 = vrot.lane.b32.xlu0 %v338, 32
    %v341 = vpop.permute.xlu0 %340
    %v343 = vadd.f32 %v134, %v341
    %v344 = vtanh.pop %v343
    %v345 = vsub.f32 1.0, %v333
    %347 = vrot.lane.b32.xlu0 %v344, 112
    %v348 = vpop.permute.xlu0 %347
    %v350 = vmul.f32 %v345, %v348
    %v351 = vmul.f32 %v333, %v287
    %v352 = vadd.f32 %v350, %v351
    %vm353 = vcmp.gt.f32.partialorder %v66, 2.0
    %v354 = vsel %vm353, 1, 0
    %355 = vset.pattern.permute.xlu0 4
    %356 = vperm.xlu0 %355, %v354
    %v357 = vpop.permute.xlu0 %356
    %vm358 = vcmp.eq.s32.totalorder %v357, 1
    %v359 = vsel %vm358, %v352, %v287
    %v360 = vsel %vm358, %v352, 0.0
    %362 = vrot.lane.b32.xlu0 %v359, 112
    %v363 = vpop.permute.xlu0 %362
    %v364 = vsel %vm147, %v363, 0
    %366 = vmatpush.msra.mxu0 0.0
    %367 = vmatpush.msra.mxu0 0.0
    %368 = vmatpush.msra.mxu0 0.0
    %369 = vmatpush.msra.mxu0 0.0
    %370 = vmatpush.msra.mxu0 0.0
    %371 = vmatpush.msra.mxu0 0.0
    %372 = vmatpush.msra.mxu0 0.0
    %373 = vmatpush.msra.mxu0 0.0
    %374 = vmatpush.msra.mxu0 0.0
    %375 = vmatpush.msra.mxu0 0.0
    %376 = vmatpush.msra.mxu0 0.0
    %377 = vmatpush.msra.mxu0 0.0
    %378 = vmatpush.msra.mxu0 0.0
    %379 = vmatpush.msra.mxu0 0.0
    %380 = vmatpush.msra.mxu0 %v143
    %381 = vmatpush.msra.mxu0 %v142
    %382 = vmatmul.f32.gmra.mxu0 %v364
    %v383 = vpop.f32.mrf.mxu0
    %v384 = vadd.f32 %v145, %v383
    %385 = vdwg.mxu0
    %v386 = vadd.f32 %v131, %v384
    %v387 = vxor.u32 %v386, 2147483648
    %v388 = vmul.f32 %v387, 1.442695
    %v389 = vpow.pop %v388
    %v390 = vadd.f32 %v389, 1.0
    %v391 = vrcp.pop %v390
    %v392 = vmul.f32 %v390, %v391
    %v393 = vsub.f32 1.0, %v392
    %v394 = vmul.f32 %v391, %v393
    %v395 = vadd.f32 %v391, %v394
    %vm396 = vweird.f32 %v390
    %vm397 = vweird.f32 %v391
    %vm398 = vmor %vm396, %vm397
    %v399 = vsel %vm398, %v391, %v395
    %v400 = vand.u32 2147483647, %v390
    %vm401 = vcmp.eq.f32.partialorder %v400, 8.507059e+37
    %v402 = vand.u32 %v390, 2147483648
    %v403 = vor.u32 1.1754944e-38, %v402
    %v404 = vsel %vm401, %v403, %v399
    %v405 = vmul.f32 1.0, %v404
    %407 = vrot.lane.b32.xlu0 %v384, 96
    %v408 = vpop.permute.xlu0 %407
    %v410 = vmul.f32 %v405, %v408
    %412 = vrot.lane.b32.xlu0 %v410, 32
    %v413 = vpop.permute.xlu0 %412
    %v415 = vadd.f32 %v131, %v413
    %v416 = vtanh.pop %v415
    %v417 = vsub.f32 1.0, %v405
    %419 = vrot.lane.b32.xlu0 %v416, 112
    %v420 = vpop.permute.xlu0 %419
    %v422 = vmul.f32 %v417, %v420
    %v423 = vmul.f32 %v405, %v359
    %v424 = vadd.f32 %v422, %v423
    %vm425 = vcmp.gt.f32.partialorder %v66, 3.0
    %v426 = vsel %vm425, 1, 0
    %427 = vset.pattern.permute.xlu0 4
    %428 = vperm.xlu0 %427, %v426
    %v429 = vpop.permute.xlu0 %428
    %vm430 = vcmp.eq.s32.totalorder %v429, 1
    %v431 = vsel %vm430, %v424, %v359
    %v432 = vsel %vm430, %v424, 0.0
    %434 = vrot.lane.b32.xlu0 %v431, 112
    %v435 = vpop.permute.xlu0 %434
    %v436 = vsel %vm147, %v435, 0
    %438 = vmatpush.msra.mxu0 0.0
    %439 = vmatpush.msra.mxu0 0.0
    %440 = vmatpush.msra.mxu0 0.0
    %441 = vmatpush.msra.mxu0 0.0
    %442 = vmatpush.msra.mxu0 0.0
    %443 = vmatpush.msra.mxu0 0.0
    %444 = vmatpush.msra.mxu0 0.0
    %445 = vmatpush.msra.mxu0 0.0
    %446 = vmatpush.msra.mxu0 0.0
    %447 = vmatpush.msra.mxu0 0.0
    %448 = vmatpush.msra.mxu0 0.0
    %449 = vmatpush.msra.mxu0 0.0
    %450 = vmatpush.msra.mxu0 0.0
    %451 = vmatpush.msra.mxu0 0.0
    %452 = vmatpush.msra.mxu0 %v143
    %453 = vmatpush.msra.mxu0 %v142
    %454 = vmatmul.f32.gmra.mxu0 %v436
    %v455 = vpop.f32.mrf.mxu0
    %v456 = vadd.f32 %v145, %v455
    %457 = vdwg.mxu0
    %v458 = vadd.f32 %v128, %v456
    %v459 = vxor.u32 %v458, 2147483648
    %v460 = vmul.f32 %v459, 1.442695
    %v461 = vpow.pop %v460
    %v462 = vadd.f32 %v461, 1.0
    %v463 = vrcp.pop %v462
    %v464 = vmul.f32 %v462, %v463
    %v465 = vsub.f32 1.0, %v464
    %v466 = vmul.f32 %v463, %v465
    %v467 = vadd.f32 %v463, %v466
    %vm468 = vweird.f32 %v462
    %vm469 = vweird.f32 %v463
    %vm470 = vmor %vm468, %vm469
    %v471 = vsel %vm470, %v463, %v467
    %v472 = vand.u32 2147483647, %v462
    %vm473 = vcmp.eq.f32.partialorder %v472, 8.507059e+37
    %v474 = vand.u32 %v462, 2147483648
    %v475 = vor.u32 1.1754944e-38, %v474
    %v476 = vsel %vm473, %v475, %v471
    %v477 = vmul.f32 1.0, %v476
    %479 = vrot.lane.b32.xlu0 %v456, 96
    %v480 = vpop.permute.xlu0 %479
    %v482 = vmul.f32 %v477, %v480
    %484 = vrot.lane.b32.xlu0 %v482, 32
    %v485 = vpop.permute.xlu0 %484
    %v487 = vadd.f32 %v128, %v485
    %v488 = vtanh.pop %v487
    %v489 = vsub.f32 1.0, %v477
    %491 = vrot.lane.b32.xlu0 %v488, 112
    %v492 = vpop.permute.xlu0 %491
    %v494 = vmul.f32 %v489, %v492
    %v495 = vmul.f32 %v477, %v431
    %v496 = vadd.f32 %v494, %v495
    %vm497 = vcmp.gt.f32.partialorder %v66, 4.0
    %v498 = vsel %vm497, 1, 0
    %499 = vset.pattern.permute.xlu0 4
    %500 = vperm.xlu0 %499, %v498
    %v501 = vpop.permute.xlu0 %500
    %vm502 = vcmp.eq.s32.totalorder %v501, 1
    %v503 = vsel %vm502, %v496, %v431
    %v504 = vsel %vm502, %v496, 0.0
    %506 = vrot.lane.b32.xlu0 %v503, 112
    %v507 = vpop.permute.xlu0 %506
    %v508 = vsel %vm147, %v507, 0
    %510 = vmatpush.msra.mxu0 0.0
    %511 = vmatpush.msra.mxu0 0.0
    %512 = vmatpush.msra.mxu0 0.0
    %513 = vmatpush.msra.mxu0 0.0
    %514 = vmatpush.msra.mxu0 0.0
    %515 = vmatpush.msra.mxu0 0.0
    %516 = vmatpush.msra.mxu0 0.0
    %517 = vmatpush.msra.mxu0 0.0
    %518 = vmatpush.msra.mxu0 0.0
    %519 = vmatpush.msra.mxu0 0.0
    %520 = vmatpush.msra.mxu0 0.0
    %521 = vmatpush.msra.mxu0 0.0
    %522 = vmatpush.msra.mxu0 0.0
    %523 = vmatpush.msra.mxu0 0.0
    %524 = vmatpush.msra.mxu0 %v143
    %525 = vmatpush.msra.mxu0 %v142
    %526 = vmatmul.f32.gmra.mxu0 %v508
    %v527 = vpop.f32.mrf.mxu0
    %v528 = vadd.f32 %v145, %v527
    %529 = vdwg.mxu0
    %v530 = vadd.f32 %v125, %v528
    %v531 = vxor.u32 %v530, 2147483648
    %v532 = vmul.f32 %v531, 1.442695
    %v533 = vpow.pop %v532
    %v534 = vadd.f32 %v533, 1.0
    %v535 = vrcp.pop %v534
    %v536 = vmul.f32 %v534, %v535
    %v537 = vsub.f32 1.0, %v536
    %v538 = vmul.f32 %v535, %v537
    %v539 = vadd.f32 %v535, %v538
    %vm540 = vweird.f32 %v534
    %vm541 = vweird.f32 %v535
    %vm542 = vmor %vm540, %vm541
    %v543 = vsel %vm542, %v535, %v539
    %v544 = vand.u32 2147483647, %v534
    %vm545 = vcmp.eq.f32.partialorder %v544, 8.507059e+37
    %v546 = vand.u32 %v534, 2147483648
    %v547 = vor.u32 1.1754944e-38, %v546
    %v548 = vsel %vm545, %v547, %v543
    %v549 = vmul.f32 1.0, %v548
    %551 = vrot.lane.b32.xlu0 %v528, 96
    %v552 = vpop.permute.xlu0 %551
    %v554 = vmul.f32 %v549, %v552
    %556 = vrot.lane.b32.xlu0 %v554, 32
    %v557 = vpop.permute.xlu0 %556
    %v559 = vadd.f32 %v125, %v557
    %v560 = vtanh.pop %v559
    %v561 = vsub.f32 1.0, %v549
    %563 = vrot.lane.b32.xlu0 %v560, 112
    %v564 = vpop.permute.xlu0 %563
    %v566 = vmul.f32 %v561, %v564
    %v567 = vmul.f32 %v549, %v503
    %v568 = vadd.f32 %v566, %v567
    %vm569 = vcmp.gt.f32.partialorder %v66, 5.0
    %v570 = vsel %vm569, 1, 0
    %571 = vset.pattern.permute.xlu0 4
    %572 = vperm.xlu0 %571, %v570
    %v573 = vpop.permute.xlu0 %572
    %vm574 = vcmp.eq.s32.totalorder %v573, 1
    %v575 = vsel %vm574, %v568, %v503
    %v576 = vsel %vm574, %v568, 0.0
    %578 = vrot.lane.b32.xlu0 %v575, 112
    %v579 = vpop.permute.xlu0 %578
    %v580 = vsel %vm147, %v579, 0
    %582 = vmatpush.msra.mxu0 0.0
    %583 = vmatpush.msra.mxu0 0.0
    %584 = vmatpush.msra.mxu0 0.0
    %585 = vmatpush.msra.mxu0 0.0
    %586 = vmatpush.msra.mxu0 0.0
    %587 = vmatpush.msra.mxu0 0.0
    %588 = vmatpush.msra.mxu0 0.0
    %589 = vmatpush.msra.mxu0 0.0
    %590 = vmatpush.msra.mxu0 0.0
    %591 = vmatpush.msra.mxu0 0.0
    %592 = vmatpush.msra.mxu0 0.0
    %593 = vmatpush.msra.mxu0 0.0
    %594 = vmatpush.msra.mxu0 0.0
    %595 = vmatpush.msra.mxu0 0.0
    %596 = vmatpush.msra.mxu0 %v143
    %597 = vmatpush.msra.mxu0 %v142
    %598 = vmatmul.f32.gmra.mxu0 %v580
    %v599 = vpop.f32.mrf.mxu0
    %v600 = vadd.f32 %v145, %v599
    %601 = vdwg.mxu0
    %v602 = vadd.f32 %v122, %v600
    %v603 = vxor.u32 %v602, 2147483648
    %v604 = vmul.f32 %v603, 1.442695
    %v605 = vpow.pop %v604
    %v606 = vadd.f32 %v605, 1.0
    %v607 = vrcp.pop %v606
    %v608 = vmul.f32 %v606, %v607
    %v609 = vsub.f32 1.0, %v608
    %v610 = vmul.f32 %v607, %v609
    %v611 = vadd.f32 %v607, %v610
    %vm612 = vweird.f32 %v606
    %vm613 = vweird.f32 %v607
    %vm614 = vmor %vm612, %vm613
    %v615 = vsel %vm614, %v607, %v611
    %v616 = vand.u32 2147483647, %v606
    %vm617 = vcmp.eq.f32.partialorder %v616, 8.507059e+37
    %v618 = vand.u32 %v606, 2147483648
    %v619 = vor.u32 1.1754944e-38, %v618
    %v620 = vsel %vm617, %v619, %v615
    %v621 = vmul.f32 1.0, %v620
    %623 = vrot.lane.b32.xlu0 %v600, 96
    %v624 = vpop.permute.xlu0 %623
    %v626 = vmul.f32 %v621, %v624
    %628 = vrot.lane.b32.xlu0 %v626, 32
    %v629 = vpop.permute.xlu0 %628
    %v631 = vadd.f32 %v122, %v629
    %v632 = vtanh.pop %v631
    %v633 = vsub.f32 1.0, %v621
    %635 = vrot.lane.b32.xlu0 %v632, 112
    %v636 = vpop.permute.xlu0 %635
    %v638 = vmul.f32 %v633, %v636
    %v639 = vmul.f32 %v621, %v575
    %v640 = vadd.f32 %v638, %v639
    %vm641 = vcmp.gt.f32.partialorder %v66, 6.0
    %v642 = vsel %vm641, 1, 0
    %643 = vset.pattern.permute.xlu0 4
    %644 = vperm.xlu0 %643, %v642
    %v645 = vpop.permute.xlu0 %644
    %vm646 = vcmp.eq.s32.totalorder %v645, 1
    %v647 = vsel %vm646, %v640, %v575
    %v648 = vsel %vm646, %v640, 0.0
    %650 = vrot.lane.b32.xlu0 %v647, 112
    %v651 = vpop.permute.xlu0 %650
    %v652 = vsel %vm147, %v651, 0
    %654 = vmatpush.msra.mxu0 0.0
    %655 = vmatpush.msra.mxu0 0.0
    %656 = vmatpush.msra.mxu0 0.0
    %657 = vmatpush.msra.mxu0 0.0
    %658 = vmatpush.msra.mxu0 0.0
    %659 = vmatpush.msra.mxu0 0.0
    %660 = vmatpush.msra.mxu0 0.0
    %661 = vmatpush.msra.mxu0 0.0
    %662 = vmatpush.msra.mxu0 0.0
    %663 = vmatpush.msra.mxu0 0.0
    %664 = vmatpush.msra.mxu0 0.0
    %665 = vmatpush.msra.mxu0 0.0
    %666 = vmatpush.msra.mxu0 0.0
    %667 = vmatpush.msra.mxu0 0.0
    %668 = vmatpush.msra.mxu0 %v143
    %669 = vmatpush.msra.mxu0 %v142
    %670 = vmatmul.f32.gmra.mxu0 %v652
    %v671 = vpop.f32.mrf.mxu0
    %v672 = vadd.f32 %v145, %v671
    %673 = vdwg.mxu0
    %v674 = vadd.f32 %v119, %v672
    %v675 = vxor.u32 %v674, 2147483648
    %v676 = vmul.f32 %v675, 1.442695
    %v677 = vpow.pop %v676
    %v678 = vadd.f32 %v677, 1.0
    %v679 = vrcp.pop %v678
    %v680 = vmul.f32 %v678, %v679
    %v681 = vsub.f32 1.0, %v680
    %v682 = vmul.f32 %v679, %v681
    %v683 = vadd.f32 %v679, %v682
    %vm684 = vweird.f32 %v678
    %vm685 = vweird.f32 %v679
    %vm686 = vmor %vm684, %vm685
    %v687 = vsel %vm686, %v679, %v683
    %v688 = vand.u32 2147483647, %v678
    %vm689 = vcmp.eq.f32.partialorder %v688, 8.507059e+37
    %v690 = vand.u32 %v678, 2147483648
    %v691 = vor.u32 1.1754944e-38, %v690
    %v692 = vsel %vm689, %v691, %v687
    %v693 = vmul.f32 1.0, %v692
    %695 = vrot.lane.b32.xlu0 %v672, 96
    %v696 = vpop.permute.xlu0 %695
    %v698 = vmul.f32 %v693, %v696
    %700 = vrot.lane.b32.xlu0 %v698, 32
    %v701 = vpop.permute.xlu0 %700
    %v703 = vadd.f32 %v119, %v701
    %v704 = vtanh.pop %v703
    %v705 = vsub.f32 1.0, %v693
    %707 = vrot.lane.b32.xlu0 %v704, 112
    %v708 = vpop.permute.xlu0 %707
    %v710 = vmul.f32 %v705, %v708
    %v711 = vmul.f32 %v693, %v647
    %v712 = vadd.f32 %v710, %v711
    %vm713 = vcmp.gt.f32.partialorder %v66, 7.0
    %v714 = vsel %vm713, 1, 0
    %715 = vset.pattern.permute.xlu0 4
    %716 = vperm.xlu0 %715, %v714
    %v717 = vpop.permute.xlu0 %716
    %vm718 = vcmp.eq.s32.totalorder %v717, 1
    %v719 = vsel %vm718, %v712, 0.0
    %727 = vrot.lane.b32.xlu0 %v288, 112
    %v728 = vpop.permute.xlu0 %727
    %729 = vrot.lane.b32.xlu0 %v360, 112
    %v730 = vpop.permute.xlu0 %729
    %731 = vrot.lane.b32.xlu0 %v432, 112
    %v732 = vpop.permute.xlu0 %731
    %733 = vrot.lane.b32.xlu0 %v504, 112
    %v734 = vpop.permute.xlu0 %733
    %735 = vrot.lane.b32.xlu0 %v576, 112
    %v736 = vpop.permute.xlu0 %735
    %737 = vrot.lane.b32.xlu0 %v648, 112
    %v738 = vpop.permute.xlu0 %737
    %739 = vrot.lane.b32.xlu0 %v719, 112
    %v740 = vpop.permute.xlu0 %739
    %743 = vrot.lane.b32.xlu0 %v142, 80
    %v744 = vpop.permute.xlu0 %743
    %745 = vrot.lane.b32.xlu0 %v143, 80
    %v746 = vpop.permute.xlu0 %745
    %749 = vrot.lane.b32.xlu0 %v70, 32
    %v750 = vpop.permute.xlu0 %749
    %v752 = vsel %vm147, %v728, 0
    %v754 = vsel %vm147, %v730, 0
    %v756 = vsel %vm147, %v732, 0
    %v758 = vsel %vm147, %v734, 0
    %v760 = vsel %vm147, %v736, 0
    %v762 = vsel %vm147, %v738, 0
    %v764 = vsel %vm147, %v740, 0
    %766 = vmatpush.msra.mxu0 0.0
    %767 = vmatpush.msra.mxu0 0.0
    %768 = vmatpush.msra.mxu0 0.0
    %769 = vmatpush.msra.mxu0 0.0
    %770 = vmatpush.msra.mxu0 0.0
    %771 = vmatpush.msra.mxu0 0.0
    %772 = vmatpush.msra.mxu0 0.0
    %773 = vmatpush.msra.mxu0 0.0
    %774 = vmatpush.msra.mxu0 0.0
    %775 = vmatpush.msra.mxu0 0.0
    %776 = vmatpush.msra.mxu0 0.0
    %777 = vmatpush.msra.mxu0 0.0
    %778 = vmatpush.msra.mxu0 0.0
    %779 = vmatpush.msra.mxu0 0.0
    %780 = vmatpush.msra.mxu0 %v746
    %781 = vmatpush.msra.mxu0 %v744
    %782 = vmatmul.f32.gmra.mxu0 %v220
    %v783 = vpop.f32.mrf.mxu0
    %v784 = vadd.f32 %v750, %v783
    %785 = vmatmul.f32.gmra.mxu0 %v752
    %v786 = vpop.f32.mrf.mxu0
    %v787 = vadd.f32 %v750, %v786
    %788 = vmatmul.f32.gmra.mxu0 %v754
    %v789 = vpop.f32.mrf.mxu0
    %v790 = vadd.f32 %v750, %v789
    %791 = vmatmul.f32.gmra.mxu0 %v756
    %v792 = vpop.f32.mrf.mxu0
    %v793 = vadd.f32 %v750, %v792
    %794 = vmatmul.f32.gmra.mxu0 %v758
    %v795 = vpop.f32.mrf.mxu0
    %v796 = vadd.f32 %v750, %v795
    %797 = vmatmul.f32.gmra.mxu0 %v760
    %v798 = vpop.f32.mrf.mxu0
    %v799 = vadd.f32 %v750, %v798
    %800 = vmatmul.f32.gmra.mxu0 %v762
    %v801 = vpop.f32.mrf.mxu0
    %v802 = vadd.f32 %v750, %v801
    %803 = vmatmul.f32.gmra.mxu0 %v764
    %v804 = vpop.f32.mrf.mxu0
    %v805 = vadd.f32 %v750, %v804
    %806 = vdwg.mxu0
    %v807 = vld [vmem:[%s6] sm:$0xff]
    %808 = vrot.lane.b32.xlu0 %v70, 24
    %v809 = vpop.permute.xlu0 %808
    %vm811 = vcmask 64512
    %v813 = vsel %vm811, %v805, 0
    %815 = vmatpush.msra.mxu0 0.0
    %816 = vmatpush.msra.mxu0 0.0
    %817 = vmatpush.msra.mxu0 0.0
    %818 = vmatpush.msra.mxu0 0.0
    %819 = vmatpush.msra.mxu0 0.0
    %820 = vmatpush.msra.mxu0 0.0
    %821 = vmatpush.msra.mxu0 0.0
    %822 = vmatpush.msra.mxu0 0.0
    %823 = vmatpush.msra.mxu0 0.0
    %824 = vmatpush.msra.mxu0 0.0
    %825 = vmatpush.msra.mxu0 0.0
    %826 = vmatpush.msra.mxu0 0.0
    %827 = vmatpush.msra.mxu0 0.0
    %828 = vmatpush.msra.mxu0 0.0
    %829 = vmatpush.msra.mxu0 0.0
    %830 = vmatpush.msra.mxu0 %v807
    %831 = vmatmul.f32.gmra.mxu0 %v813
    %v832 = vpop.f32.mrf.mxu0
    %v833 = vadd.f32 %v809, %v832
    %834 = vdwg.mxu0
    %v835 = vmul.f32 %v833, 1.442695
    %v836 = vpow.pop %v835
    %v837 = vld [vmem:[%s1] sm:$0xff]
    %839 = vrot.lane.b32.xlu0 %v837, 4
    %v840 = vpop.permute.xlu0 %839
    %v842 = vmul.f32 %v836, %v840
    %844 = vrot.lane.b32.xlu0 %v842, 124
    %v845 = vpop.permute.xlu0 %844
    %v847 = vadd.f32 %v833, %v845
    %v848 = vld [vmem:[%s10] sm:$0x3]
    %v850 = vperm.slane %v848, 0
    %v851 = vperm.slane %v848, 1
    %853 = vrot.lane.b32.xlu0 %v807, 120
    %v854 = vpop.permute.xlu0 %853
    %856 = vrot.lane.b32.xlu0 %v850, 16
    %v857 = vpop.permute.xlu0 %856
    %858 = vrot.lane.b32.xlu0 %v851, 16
    %v859 = vpop.permute.xlu0 %858
    %v860 = vsel %vm147, %v857, %v859
    %v863 = vsel %vm811, %v784, 0
    %v866 = vsel %vm811, %v787, 0
    %v869 = vsel %vm811, %v790, 0
    %v872 = vsel %vm811, %v793, 0
    %v875 = vsel %vm811, %v796, 0
    %v878 = vsel %vm811, %v799, 0
    %v881 = vsel %vm811, %v802, 0
    %883 = vmatpush.msra.mxu0 0.0
    %884 = vmatpush.msra.mxu0 0.0
    %885 = vmatpush.msra.mxu0 0.0
    %886 = vmatpush.msra.mxu0 0.0
    %887 = vmatpush.msra.mxu0 0.0
    %888 = vmatpush.msra.mxu0 0.0
    %889 = vmatpush.msra.mxu0 0.0
    %890 = vmatpush.msra.mxu0 0.0
    %891 = vmatpush.msra.mxu0 0.0
    %892 = vmatpush.msra.mxu0 0.0
    %893 = vmatpush.msra.mxu0 0.0
    %894 = vmatpush.msra.mxu0 0.0
    %895 = vmatpush.msra.mxu0 0.0
    %896 = vmatpush.msra.mxu0 0.0
    %897 = vmatpush.msra.mxu0 0.0
    %898 = vmatpush.msra.mxu0 %v854
    %899 = vmatmul.f32.gmra.mxu0 %v863
    %v900 = vpop.f32.mrf.mxu0
    %v901 = vadd.f32 %v860, %v900
    %902 = vmatmul.f32.gmra.mxu0 %v866
    %v903 = vpop.f32.mrf.mxu0
    %v904 = vadd.f32 %v860, %v903
    %905 = vmatmul.f32.gmra.mxu0 %v869
    %v906 = vpop.f32.mrf.mxu0
    %v907 = vadd.f32 %v860, %v906
    %908 = vmatmul.f32.gmra.mxu0 %v872
    %v909 = vpop.f32.mrf.mxu0
    %v910 = vadd.f32 %v860, %v909
    %911 = vmatmul.f32.gmra.mxu0 %v875
    %v912 = vpop.f32.mrf.mxu0
    %v913 = vadd.f32 %v860, %v912
    %914 = vmatmul.f32.gmra.mxu0 %v878
    %v915 = vpop.f32.mrf.mxu0
    %v916 = vadd.f32 %v860, %v915
    %917 = vmatmul.f32.gmra.mxu0 %v881
    %v918 = vpop.f32.mrf.mxu0
    %v919 = vadd.f32 %v860, %v918
    %920 = vmatmul.f32.gmra.mxu0 %v813
    %v921 = vpop.f32.mrf.mxu0
    %922 = vdwg.mxu0
    %v923 = vld [vmem:[%s10 + $0x1] sm:$0x1]
    %v925 = vperm.slane %v923, 0
    %926 = vrot.lane.b32.xlu0 %v925, 16
    %v927 = vpop.permute.xlu0 %926
    %vm929 = vcmask 261120
    %v930 = vsel %vm929, %v901, %v927
    %v931 = vsel %vm929, %v904, %v927
    %v932 = vsel %vm929, %v907, %v927
    %v933 = vsel %vm929, %v910, %v927
    %v934 = vsel %vm929, %v913, %v927
    %v935 = vsel %vm929, %v916, %v927
    %v936 = vsel %vm929, %v919, %v927
    %v937 = vld [vmem:[%s7] sm:$0xf]
    %v938 = vld [vmem:[%s8] sm:$0xff]
    %v939 = vld [vmem:[%s8 + $0x8] sm:$0xff]
    %v940 = vld [vmem:[%s8 + $0x10] sm:$0xff]
    %v941 = vld [vmem:[%s8 + $0x18] sm:$0xff]
    %v942 = vld [vmem:[%s8 + $0x20] sm:$0xff]
    %v943 = vld [vmem:[%s8 + $0x28] sm:$0xff]
    %v944 = vld [vmem:[%s8 + $0x30] sm:$0xff]
    %v945 = vld [vmem:[%s8 + $0x38] sm:$0xff]
    %v946 = vld [vmem:[%s8 + $0x40] sm:$0xff]
    %v947 = vld [vmem:[%s8 + $0x48] sm:$0xff]
    %v948 = vld [vmem:[%s8 + $0x50] sm:$0xff]
    %v949 = vld [vmem:[%s8 + $0x58] sm:$0xff]
    %v950 = vld [vmem:[%s9] sm:$0xff]
    %v951 = vld [vmem:[%s9 + $0x8] sm:$0xff]
    %v952 = vld [vmem:[%s9 + $0x10] sm:$0xff]
    %v953 = vld [vmem:[%s9 + $0x18] sm:$0xff]
    %s954 = sld [smem:[#allocation2]]
    %v956 = vsel %vm72, %v847, 0
    %v959 = vsel %vm97, %v937, 0
    %961 = vmatpush.msra.mxu0 0.0
    %962 = vmatpush.msra.mxu0 0.0
    %963 = vmatpush.msra.mxu0 0.0
    %964 = vmatpush.msra.mxu0 0.0
    %965 = vmatpush.msra.mxu0 0.0
    %966 = vmatpush.msra.mxu0 0.0
    %967 = vmatpush.msra.mxu0 0.0
    %968 = vmatpush.msra.mxu0 0.0
    %969 = vmatpush.msra.mxu0 0.0
    %970 = vmatpush.msra.mxu0 0.0
    %971 = vmatpush.msra.mxu0 0.0
    %972 = vmatpush.msra.mxu0 0.0
    %973 = vmatpush.msra.mxu0 0.0
    %974 = vmatpush.msra.mxu0 0.0
    %975 = vmatpush.msra.mxu0 0.0
    %976 = vmatpush.msra.mxu0 %v959
    %977 = vmatmul.f32.gmra.mxu0 %v956
    %v978 = vpop.f32.mrf.mxu0
    %v979 = vadd.f32 %v936, %v978
    %980 = vdwg.mxu0
    %v981 = vmax.f32 %v979, 0.0
    %vm982 = vcmp.ne.f32.partialorder %v979, %v979
    %v983 = vadd.f32 %v979, 0.0
    %v984 = vand.u32 2147483647, %v979
    %v985 = vsub.f32 0.0, %v984
    %v986 = vmul.f32 %v985, 1.442695
    %v987 = vpow.pop %v986
    %v988 = vadd.f32 %v987, 1.0
    %v989 = vlog2.pop %v988
    %v990 = vmul.f32 %v989, 0.6931472
    %v991 = vmul.f32 -0.5, %v987
    %v992 = vadd.f32 %v991, 1.0
    %v993 = vmul.f32 %v992, %v987
    %v994 = vand.u32 2147483647, %v987
    %vm995 = vcmp.lt.f32.partialorder %v994, 0.0004427343
    %v996 = vsel %vm995, %v993, %v990
    %v997 = vadd.f32 %v981, %v996
    %v998 = vsel %vm982, %v983, %v997
    %999 = vrot.lane.b32.xlu0 %v925, 48
    %v1000 = vpop.permute.xlu0 %999
    %vm1002 = vcmask 785408
    %v1004 = vsel %vm1002, %v998, 0
    %1006 = vmatpush.msra.mxu0 0.0
    %1007 = vmatpush.msra.mxu0 0.0
    %1008 = vmatpush.msra.mxu0 0.0
    %1009 = vmatpush.msra.mxu0 0.0
    %1010 = vmatpush.msra.mxu0 %v949
    %1011 = vmatpush.msra.mxu0 %v948
    %1012 = vmatpush.msra.mxu0 %v947
    %1013 = vmatpush.msra.mxu0 %v946
    %1014 = vmatpush.msra.mxu0 %v945
    %1015 = vmatpush.msra.mxu0 %v944
    %1016 = vmatpush.msra.mxu0 %v943
    %1017 = vmatpush.msra.mxu0 %v942
    %1018 = vmatpush.msra.mxu0 %v941
    %1019 = vmatpush.msra.mxu0 %v940
    %1020 = vmatpush.msra.mxu0 %v939
    %1021 = vmatpush.msra.mxu0 %v938
    %1022 = vmatmul.f32.gmra.mxu0 %v1004
    %v1023 = vpop.f32.mrf.mxu0
    %v1024 = vadd.f32 %v1000, %v1023
    %1025 = vdwg.mxu0
    %v1026 = vmax.f32 %v1024, 0.0
    %vm1027 = vcmp.ne.f32.partialorder %v1024, %v1024
    %v1028 = vadd.f32 %v1024, 0.0
    %v1029 = vand.u32 2147483647, %v1024
    %v1030 = vsub.f32 0.0, %v1029
    %v1031 = vmul.f32 %v1030, 1.442695
    %v1032 = vpow.pop %v1031
    %v1033 = vadd.f32 %v1032, 1.0
    %v1034 = vlog2.pop %v1033
    %v1035 = vmul.f32 %v1034, 0.6931472
    %v1036 = vmul.f32 -0.5, %v1032
    %v1037 = vadd.f32 %v1036, 1.0
    %v1038 = vmul.f32 %v1037, %v1032
    %v1039 = vand.u32 2147483647, %v1032
    %vm1040 = vcmp.lt.f32.partialorder %v1039, 0.0004427343
    %v1041 = vsel %vm1040, %v1038, %v1035
    %v1042 = vadd.f32 %v1026, %v1041
    %v1043 = vsel %vm1027, %v1028, %v1042
    %v1044 = vxor.u32 %v1024, 2147483648
    %v1045 = vmul.f32 %v1044, 1.442695
    %v1046 = vpow.pop %v1045
    %v1047 = vadd.f32 %v1046, 1.0
    %v1048 = vrcp.pop %v1047
    %v1049 = vmul.f32 %v1047, %v1048
    %v1050 = vsub.f32 1.0, %v1049
    %v1051 = vmul.f32 %v1048, %v1050
    %v1052 = vadd.f32 %v1048, %v1051
    %vm1053 = vweird.f32 %v1047
    %vm1054 = vweird.f32 %v1048
    %vm1055 = vmor %vm1053, %vm1054
    %v1056 = vsel %vm1055, %v1048, %v1052
    %v1057 = vand.u32 2147483647, %v1047
    %vm1058 = vcmp.eq.f32.partialorder %v1057, 8.507059e+37
    %v1059 = vand.u32 %v1047, 2147483648
    %v1060 = vor.u32 1.1754944e-38, %v1059
    %v1061 = vsel %vm1058, %v1060, %v1056
    %v1062 = vmul.f32 1.0, %v1061
    %1063 = vrot.lane.b32.xlu0 %v925, 12
    %v1064 = vpop.permute.xlu0 %1063
    %v1067 = vsel %vm929, %v1043, 0
    %1069 = vmatpush.msra.mxu0 0.0
    %1070 = vmatpush.msra.mxu0 0.0
    %1071 = vmatpush.msra.mxu0 0.0
    %1072 = vmatpush.msra.mxu0 0.0
    %1073 = vmatpush.msra.mxu0 0.0
    %1074 = vmatpush.msra.mxu0 0.0
    %1075 = vmatpush.msra.mxu0 0.0
    %1076 = vmatpush.msra.mxu0 0.0
    %1077 = vmatpush.msra.mxu0 0.0
    %1078 = vmatpush.msra.mxu0 0.0
    %1079 = vmatpush.msra.mxu0 0.0
    %1080 = vmatpush.msra.mxu0 0.0
    %1081 = vmatpush.msra.mxu0 %v953
    %1082 = vmatpush.msra.mxu0 %v952
    %1083 = vmatpush.msra.mxu0 %v951
    %1084 = vmatpush.msra.mxu0 %v950
    %1085 = vmatmul.f32.gmra.mxu0 %v1067
    %v1086 = vpop.f32.mrf.mxu0
    %v1087 = vadd.f32 %v1064, %v1086
    %1088 = vdwg.mxu0
    %1090 = vrot.lane.b32.xlu0 %v1087, 124
    %v1091 = vpop.permute.xlu0 %1090
    %v1093 = vsub.f32 %v1087, %v1091
    %1095 = vrot.lane.b32.xlu0 %v1062, 96
    %v1096 = vpop.permute.xlu0 %1095
    %v1098 = vrcp.pop %v1096
    %v1099 = vmul.f32 %v1096, %v1098
    %v1100 = vsub.f32 1.0, %v1099
    %v1101 = vmul.f32 %v1098, %v1100
    %v1102 = vadd.f32 %v1098, %v1101
    %vm1103 = vweird.f32 %v1096
    %vm1104 = vweird.f32 %v1098
    %vm1105 = vmor %vm1103, %vm1104
    %v1106 = vsel %vm1105, %v1098, %v1102
    %v1107 = vand.u32 2147483647, %v1096
    %vm1108 = vcmp.eq.f32.partialorder %v1107, 8.507059e+37
    %v1109 = vand.u32 %v1096, 2147483648
    %v1110 = vor.u32 1.1754944e-38, %v1109
    %v1111 = vsel %vm1108, %v1110, %v1106
    %v1112 = vmul.f32 %v1093, %v1111
    %s1113 = smul.f32 %s954, 0.5
    %v1114 = vmul.f32 %v1112, %v1112
    %v1115 = vstv %s1113
    %v1116 = vmul.f32 %v1115, %v1114
    %v1117 = vadd.f32 %v1116, 0.0
    %v1118 = vstv %s954
    %v1119 = vmul.f32 %v1087, %v1118
    %v1120 = vadd.f32 %v847, %v1119
    %v1121 = vld [vmem:[%s2] sm:$0xff]
    %1123 = vrot.lane.b32.xlu0 %v1121, 32
    %v1124 = vpop.permute.xlu0 %1123
    %v1126 = vmul.f32 %v1062, %v1124
    %1128 = vrot.lane.b32.xlu0 %v1126, 96
    %v1129 = vpop.permute.xlu0 %1128
    %v1131 = vadd.f32 %v1120, %v1129
    %v1133 = vsel %vm72, %v1131, 0
    %1135 = vmatpush.msra.mxu0 0.0
    %1136 = vmatpush.msra.mxu0 0.0
    %1137 = vmatpush.msra.mxu0 0.0
    %1138 = vmatpush.msra.mxu0 0.0
    %1139 = vmatpush.msra.mxu0 0.0
    %1140 = vmatpush.msra.mxu0 0.0
    %1141 = vmatpush.msra.mxu0 0.0
    %1142 = vmatpush.msra.mxu0 0.0
    %1143 = vmatpush.msra.mxu0 0.0
    %1144 = vmatpush.msra.mxu0 0.0
    %1145 = vmatpush.msra.mxu0 0.0
    %1146 = vmatpush.msra.mxu0 0.0
    %1147 = vmatpush.msra.mxu0 0.0
    %1148 = vmatpush.msra.mxu0 0.0
    %1149 = vmatpush.msra.mxu0 0.0
    %1150 = vmatpush.msra.mxu0 %v959
    %1151 = vmatmul.f32.gmra.mxu0 %v1133
    %v1152 = vpop.f32.mrf.mxu0
    %v1153 = vadd.f32 %v936, %v1152
    %1154 = vdwg.mxu0
    %v1155 = vmax.f32 %v1153, 0.0
    %vm1156 = vcmp.ne.f32.partialorder %v1153, %v1153
    %v1157 = vadd.f32 %v1153, 0.0
    %v1158 = vand.u32 2147483647, %v1153
    %v1159 = vsub.f32 0.0, %v1158
    %v1160 = vmul.f32 %v1159, 1.442695
    %v1161 = vpow.pop %v1160
    %v1162 = vadd.f32 %v1161, 1.0
    %v1163 = vlog2.pop %v1162
    %v1164 = vmul.f32 %v1163, 0.6931472
    %v1165 = vmul.f32 -0.5, %v1161
    %v1166 = vadd.f32 %v1165, 1.0
    %v1167 = vmul.f32 %v1166, %v1161
    %v1168 = vand.u32 2147483647, %v1161
    %vm1169 = vcmp.lt.f32.partialorder %v1168, 0.0004427343
    %v1170 = vsel %vm1169, %v1167, %v1164
    %v1171 = vadd.f32 %v1155, %v1170
    %v1172 = vsel %vm1156, %v1157, %v1171
    %v1174 = vsel %vm1002, %v1172, 0
    %1176 = vmatpush.msra.mxu0 0.0
    %1177 = vmatpush.msra.mxu0 0.0
    %1178 = vmatpush.msra.mxu0 0.0
    %1179 = vmatpush.msra.mxu0 0.0
    %1180 = vmatpush.msra.mxu0 %v949
    %1181 = vmatpush.msra.mxu0 %v948
    %1182 = vmatpush.msra.mxu0 %v947
    %1183 = vmatpush.msra.mxu0 %v946
    %1184 = vmatpush.msra.mxu0 %v945
    %1185 = vmatpush.msra.mxu0 %v944
    %1186 = vmatpush.msra.mxu0 %v943
    %1187 = vmatpush.msra.mxu0 %v942
    %1188 = vmatpush.msra.mxu0 %v941
    %1189 = vmatpush.msra.mxu0 %v940
    %1190 = vmatpush.msra.mxu0 %v939
    %1191 = vmatpush.msra.mxu0 %v938
    %1192 = vmatmul.f32.gmra.mxu0 %v1174
    %v1193 = vpop.f32.mrf.mxu0
    %v1194 = vadd.f32 %v1000, %v1193
    %1195 = vdwg.mxu0
    %v1196 = vmax.f32 %v1194, 0.0
    %vm1197 = vcmp.ne.f32.partialorder %v1194, %v1194
    %v1198 = vadd.f32 %v1194, 0.0
    %v1199 = vand.u32 2147483647, %v1194
    %v1200 = vsub.f32 0.0, %v1199
    %v1201 = vmul.f32 %v1200, 1.442695
    %v1202 = vpow.pop %v1201
    %v1203 = vadd.f32 %v1202, 1.0
    %v1204 = vlog2.pop %v1203
    %v1205 = vmul.f32 %v1204, 0.6931472
    %v1206 = vmul.f32 -0.5, %v1202
    %v1207 = vadd.f32 %v1206, 1.0
    %v1208 = vmul.f32 %v1207, %v1202
    %v1209 = vand.u32 2147483647, %v1202
    %vm1210 = vcmp.lt.f32.partialorder %v1209, 0.0004427343
    %v1211 = vsel %vm1210, %v1208, %v1205
    %v1212 = vadd.f32 %v1196, %v1211
    %v1213 = vsel %vm1197, %v1198, %v1212
    %v1214 = vxor.u32 %v1194, 2147483648
    %v1215 = vmul.f32 %v1214, 1.442695
    %v1216 = vpow.pop %v1215
    %v1217 = vadd.f32 %v1216, 1.0
    %v1218 = vrcp.pop %v1217
    %v1219 = vmul.f32 %v1217, %v1218
    %v1220 = vsub.f32 1.0, %v1219
    %v1221 = vmul.f32 %v1218, %v1220
    %v1222 = vadd.f32 %v1218, %v1221
    %vm1223 = vweird.f32 %v1217
    %vm1224 = vweird.f32 %v1218
    %vm1225 = vmor %vm1223, %vm1224
    %v1226 = vsel %vm1225, %v1218, %v1222
    %v1227 = vand.u32 2147483647, %v1217
    %vm1228 = vcmp.eq.f32.partialorder %v1227, 8.507059e+37
    %v1229 = vand.u32 %v1217, 2147483648
    %v1230 = vor.u32 1.1754944e-38, %v1229
    %v1231 = vsel %vm1228, %v1230, %v1226
    %v1232 = vmul.f32 1.0, %v1231
    %v1234 = vsel %vm929, %v1213, 0
    %1236 = vmatpush.msra.mxu0 0.0
    %1237 = vmatpush.msra.mxu0 0.0
    %1238 = vmatpush.msra.mxu0 0.0
    %1239 = vmatpush.msra.mxu0 0.0
    %1240 = vmatpush.msra.mxu0 0.0
    %1241 = vmatpush.msra.mxu0 0.0
    %1242 = vmatpush.msra.mxu0 0.0
    %1243 = vmatpush.msra.mxu0 0.0
    %1244 = vmatpush.msra.mxu0 0.0
    %1245 = vmatpush.msra.mxu0 0.0
    %1246 = vmatpush.msra.mxu0 0.0
    %1247 = vmatpush.msra.mxu0 0.0
    %1248 = vmatpush.msra.mxu0 %v953
    %1249 = vmatpush.msra.mxu0 %v952
    %1250 = vmatpush.msra.mxu0 %v951
    %1251 = vmatpush.msra.mxu0 %v950
    %1252 = vmatmul.f32.gmra.mxu0 %v1234
    %v1253 = vpop.f32.mrf.mxu0
    %v1254 = vadd.f32 %v1064, %v1253
    %1255 = vdwg.mxu0
    %1257 = vrot.lane.b32.xlu0 %v1254, 124
    %v1258 = vpop.permute.xlu0 %1257
    %v1260 = vsub.f32 %v1254, %v1258
    %1262 = vrot.lane.b32.xlu0 %v1232, 96
    %v1263 = vpop.permute.xlu0 %1262
    %v1265 = vrcp.pop %v1263
    %v1266 = vmul.f32 %v1263, %v1265
    %v1267 = vsub.f32 1.0, %v1266
    %v1268 = vmul.f32 %v1265, %v1267
    %v1269 = vadd.f32 %v1265, %v1268
    %vm1270 = vweird.f32 %v1263
    %vm1271 = vweird.f32 %v1265
    %vm1272 = vmor %vm1270, %vm1271
    %v1273 = vsel %vm1272, %v1265, %v1269
    %v1274 = vand.u32 2147483647, %v1263
    %vm1275 = vcmp.eq.f32.partialorder %v1274, 8.507059e+37
    %v1276 = vand.u32 %v1263, 2147483648
    %v1277 = vor.u32 1.1754944e-38, %v1276
    %v1278 = vsel %vm1275, %v1277, %v1273
    %v1279 = vmul.f32 %v1260, %v1278
    %v1280 = vmul.f32 %v1279, %v1279
    %v1281 = vmul.f32 %v1115, %v1280
    %v1282 = vadd.f32 %v1117, %v1281
    %v1283 = vmul.f32 %v1254, %v1118
    %v1284 = vadd.f32 %v1131, %v1283
    %v1285 = vld [vmem:[%s2 + $0x8] sm:$0xff]
    %1287 = vrot.lane.b32.xlu0 %v1285, 32
    %v1288 = vpop.permute.xlu0 %1287
    %v1290 = vmul.f32 %v1232, %v1288
    %1292 = vrot.lane.b32.xlu0 %v1290, 96
    %v1293 = vpop.permute.xlu0 %1292
    %v1295 = vadd.f32 %v1284, %v1293
    %s1296 = sld [smem:[#allocation2 + $0x1]]
    %v1298 = vsel %vm72, %v1295, 0
    %1300 = vmatpush.msra.mxu0 0.0
    %1301 = vmatpush.msra.mxu0 0.0
    %1302 = vmatpush.msra.mxu0 0.0
    %1303 = vmatpush.msra.mxu0 0.0
    %1304 = vmatpush.msra.mxu0 0.0
    %1305 = vmatpush.msra.mxu0 0.0
    %1306 = vmatpush.msra.mxu0 0.0
    %1307 = vmatpush.msra.mxu0 0.0
    %1308 = vmatpush.msra.mxu0 0.0
    %1309 = vmatpush.msra.mxu0 0.0
    %1310 = vmatpush.msra.mxu0 0.0
    %1311 = vmatpush.msra.mxu0 0.0
    %1312 = vmatpush.msra.mxu0 0.0
    %1313 = vmatpush.msra.mxu0 0.0
    %1314 = vmatpush.msra.mxu0 0.0
    %1315 = vmatpush.msra.mxu0 %v959
    %1316 = vmatmul.f32.gmra.mxu0 %v1298
    %v1317 = vpop.f32.mrf.mxu0
    %v1318 = vadd.f32 %v935, %v1317
    %1319 = vdwg.mxu0
    %v1320 = vmax.f32 %v1318, 0.0
    %vm1321 = vcmp.ne.f32.partialorder %v1318, %v1318
    %v1322 = vadd.f32 %v1318, 0.0
    %v1323 = vand.u32 2147483647, %v1318
    %v1324 = vsub.f32 0.0, %v1323
    %v1325 = vmul.f32 %v1324, 1.442695
    %v1326 = vpow.pop %v1325
    %v1327 = vadd.f32 %v1326, 1.0
    %v1328 = vlog2.pop %v1327
    %v1329 = vmul.f32 %v1328, 0.6931472
    %v1330 = vmul.f32 -0.5, %v1326
    %v1331 = vadd.f32 %v1330, 1.0
    %v1332 = vmul.f32 %v1331, %v1326
    %v1333 = vand.u32 2147483647, %v1326
    %vm1334 = vcmp.lt.f32.partialorder %v1333, 0.0004427343
    %v1335 = vsel %vm1334, %v1332, %v1329
    %v1336 = vadd.f32 %v1320, %v1335
    %v1337 = vsel %vm1321, %v1322, %v1336
    %v1339 = vsel %vm1002, %v1337, 0
    %1341 = vmatpush.msra.mxu0 0.0
    %1342 = vmatpush.msra.mxu0 0.0
    %1343 = vmatpush.msra.mxu0 0.0
    %1344 = vmatpush.msra.mxu0 0.0
    %1345 = vmatpush.msra.mxu0 %v949
    %1346 = vmatpush.msra.mxu0 %v948
    %1347 = vmatpush.msra.mxu0 %v947
    %1348 = vmatpush.msra.mxu0 %v946
    %1349 = vmatpush.msra.mxu0 %v945
    %1350 = vmatpush.msra.mxu0 %v944
    %1351 = vmatpush.msra.mxu0 %v943
    %1352 = vmatpush.msra.mxu0 %v942
    %1353 = vmatpush.msra.mxu0 %v941
    %1354 = vmatpush.msra.mxu0 %v940
    %1355 = vmatpush.msra.mxu0 %v939
    %1356 = vmatpush.msra.mxu0 %v938
    %1357 = vmatmul.f32.gmra.mxu0 %v1339
    %v1358 = vpop.f32.mrf.mxu0
    %v1359 = vadd.f32 %v1000, %v1358
    %1360 = vdwg.mxu0
    %v1361 = vmax.f32 %v1359, 0.0
    %vm1362 = vcmp.ne.f32.partialorder %v1359, %v1359
    %v1363 = vadd.f32 %v1359, 0.0
    %v1364 = vand.u32 2147483647, %v1359
    %v1365 = vsub.f32 0.0, %v1364
    %v1366 = vmul.f32 %v1365, 1.442695
    %v1367 = vpow.pop %v1366
    %v1368 = vadd.f32 %v1367, 1.0
    %v1369 = vlog2.pop %v1368
    %v1370 = vmul.f32 %v1369, 0.6931472
    %v1371 = vmul.f32 -0.5, %v1367
    %v1372 = vadd.f32 %v1371, 1.0
    %v1373 = vmul.f32 %v1372, %v1367
    %v1374 = vand.u32 2147483647, %v1367
    %vm1375 = vcmp.lt.f32.partialorder %v1374, 0.0004427343
    %v1376 = vsel %vm1375, %v1373, %v1370
    %v1377 = vadd.f32 %v1361, %v1376
    %v1378 = vsel %vm1362, %v1363, %v1377
    %v1379 = vxor.u32 %v1359, 2147483648
    %v1380 = vmul.f32 %v1379, 1.442695
    %v1381 = vpow.pop %v1380
    %v1382 = vadd.f32 %v1381, 1.0
    %v1383 = vrcp.pop %v1382
    %v1384 = vmul.f32 %v1382, %v1383
    %v1385 = vsub.f32 1.0, %v1384
    %v1386 = vmul.f32 %v1383, %v1385
    %v1387 = vadd.f32 %v1383, %v1386
    %vm1388 = vweird.f32 %v1382
    %vm1389 = vweird.f32 %v1383
    %vm1390 = vmor %vm1388, %vm1389
    %v1391 = vsel %vm1390, %v1383, %v1387
    %v1392 = vand.u32 2147483647, %v1382
    %vm1393 = vcmp.eq.f32.partialorder %v1392, 8.507059e+37
    %v1394 = vand.u32 %v1382, 2147483648
    %v1395 = vor.u32 1.1754944e-38, %v1394
    %v1396 = vsel %vm1393, %v1395, %v1391
    %v1397 = vmul.f32 1.0, %v1396
    %v1399 = vsel %vm929, %v1378, 0
    %1401 = vmatpush.msra.mxu0 0.0
    %1402 = vmatpush.msra.mxu0 0.0
    %1403 = vmatpush.msra.mxu0 0.0
    %1404 = vmatpush.msra.mxu0 0.0
    %1405 = vmatpush.msra.mxu0 0.0
    %1406 = vmatpush.msra.mxu0 0.0
    %1407 = vmatpush.msra.mxu0 0.0
    %1408 = vmatpush.msra.mxu0 0.0
    %1409 = vmatpush.msra.mxu0 0.0
    %1410 = vmatpush.msra.mxu0 0.0
    %1411 = vmatpush.msra.mxu0 0.0
    %1412 = vmatpush.msra.mxu0 0.0
    %1413 = vmatpush.msra.mxu0 %v953
    %1414 = vmatpush.msra.mxu0 %v952
    %1415 = vmatpush.msra.mxu0 %v951
    %1416 = vmatpush.msra.mxu0 %v950
    %1417 = vmatmul.f32.gmra.mxu0 %v1399
    %v1418 = vpop.f32.mrf.mxu0
    %v1419 = vadd.f32 %v1064, %v1418
    %1420 = vdwg.mxu0
    %1422 = vrot.lane.b32.xlu0 %v1419, 124
    %v1423 = vpop.permute.xlu0 %1422
    %v1425 = vsub.f32 %v1419, %v1423
    %1427 = vrot.lane.b32.xlu0 %v1397, 96
    %v1428 = vpop.permute.xlu0 %1427
    %v1430 = vrcp.pop %v1428
    %v1431 = vmul.f32 %v1428, %v1430
    %v1432 = vsub.f32 1.0, %v1431
    %v1433 = vmul.f32 %v1430, %v1432
    %v1434 = vadd.f32 %v1430, %v1433
    %vm1435 = vweird.f32 %v1428
    %vm1436 = vweird.f32 %v1430
    %vm1437 = vmor %vm1435, %vm1436
    %v1438 = vsel %vm1437, %v1430, %v1434
    %v1439 = vand.u32 2147483647, %v1428
    %vm1440 = vcmp.eq.f32.partialorder %v1439, 8.507059e+37
    %v1441 = vand.u32 %v1428, 2147483648
    %v1442 = vor.u32 1.1754944e-38, %v1441
    %v1443 = vsel %vm1440, %v1442, %v1438
    %v1444 = vmul.f32 %v1425, %v1443
    %s1445 = smul.f32 %s1296, 0.5
    %v1446 = vmul.f32 %v1444, %v1444
    %v1447 = vstv %s1445
    %v1448 = vmul.f32 %v1447, %v1446
    %v1449 = vadd.f32 %v1282, %v1448
    %v1450 = vstv %s1296
    %v1451 = vmul.f32 %v1419, %v1450
    %v1452 = vadd.f32 %v1295, %v1451
    %v1453 = vld [vmem:[%s2 + $0x10] sm:$0xff]
    %1455 = vrot.lane.b32.xlu0 %v1453, 32
    %v1456 = vpop.permute.xlu0 %1455
    %v1458 = vmul.f32 %v1397, %v1456
    %1460 = vrot.lane.b32.xlu0 %v1458, 96
    %v1461 = vpop.permute.xlu0 %1460
    %v1463 = vadd.f32 %v1452, %v1461
    %v1465 = vsel %vm72, %v1463, 0
    %1467 = vmatpush.msra.mxu0 0.0
    %1468 = vmatpush.msra.mxu0 0.0
    %1469 = vmatpush.msra.mxu0 0.0
    %1470 = vmatpush.msra.mxu0 0.0
    %1471 = vmatpush.msra.mxu0 0.0
    %1472 = vmatpush.msra.mxu0 0.0
    %1473 = vmatpush.msra.mxu0 0.0
    %1474 = vmatpush.msra.mxu0 0.0
    %1475 = vmatpush.msra.mxu0 0.0
    %1476 = vmatpush.msra.mxu0 0.0
    %1477 = vmatpush.msra.mxu0 0.0
    %1478 = vmatpush.msra.mxu0 0.0
    %1479 = vmatpush.msra.mxu0 0.0
    %1480 = vmatpush.msra.mxu0 0.0
    %1481 = vmatpush.msra.mxu0 0.0
    %1482 = vmatpush.msra.mxu0 %v959
    %1483 = vmatmul.f32.gmra.mxu0 %v1465
    %v1484 = vpop.f32.mrf.mxu0
    %v1485 = vadd.f32 %v935, %v1484
    %1486 = vdwg.mxu0
    %v1487 = vmax.f32 %v1485, 0.0
    %vm1488 = vcmp.ne.f32.partialorder %v1485, %v1485
    %v1489 = vadd.f32 %v1485, 0.0
    %v1490 = vand.u32 2147483647, %v1485
    %v1491 = vsub.f32 0.0, %v1490
    %v1492 = vmul.f32 %v1491, 1.442695
    %v1493 = vpow.pop %v1492
    %v1494 = vadd.f32 %v1493, 1.0
    %v1495 = vlog2.pop %v1494
    %v1496 = vmul.f32 %v1495, 0.6931472
    %v1497 = vmul.f32 -0.5, %v1493
    %v1498 = vadd.f32 %v1497, 1.0
    %v1499 = vmul.f32 %v1498, %v1493
    %v1500 = vand.u32 2147483647, %v1493
    %vm1501 = vcmp.lt.f32.partialorder %v1500, 0.0004427343
    %v1502 = vsel %vm1501, %v1499, %v1496
    %v1503 = vadd.f32 %v1487, %v1502
    %v1504 = vsel %vm1488, %v1489, %v1503
    %v1506 = vsel %vm1002, %v1504, 0
    %1508 = vmatpush.msra.mxu0 0.0
    %1509 = vmatpush.msra.mxu0 0.0
    %1510 = vmatpush.msra.mxu0 0.0
    %1511 = vmatpush.msra.mxu0 0.0
    %1512 = vmatpush.msra.mxu0 %v949
    %1513 = vmatpush.msra.mxu0 %v948
    %1514 = vmatpush.msra.mxu0 %v947
    %1515 = vmatpush.msra.mxu0 %v946
    %1516 = vmatpush.msra.mxu0 %v945
    %1517 = vmatpush.msra.mxu0 %v944
    %1518 = vmatpush.msra.mxu0 %v943
    %1519 = vmatpush.msra.mxu0 %v942
    %1520 = vmatpush.msra.mxu0 %v941
    %1521 = vmatpush.msra.mxu0 %v940
    %1522 = vmatpush.msra.mxu0 %v939
    %1523 = vmatpush.msra.mxu0 %v938
    %1524 = vmatmul.f32.gmra.mxu0 %v1506
    %v1525 = vpop.f32.mrf.mxu0
    %v1526 = vadd.f32 %v1000, %v1525
    %1527 = vdwg.mxu0
    %v1528 = vmax.f32 %v1526, 0.0
    %vm1529 = vcmp.ne.f32.partialorder %v1526, %v1526
    %v1530 = vadd.f32 %v1526, 0.0
    %v1531 = vand.u32 2147483647, %v1526
    %v1532 = vsub.f32 0.0, %v1531
    %v1533 = vmul.f32 %v1532, 1.442695
    %v1534 = vpow.pop %v1533
    %v1535 = vadd.f32 %v1534, 1.0
    %v1536 = vlog2.pop %v1535
    %v1537 = vmul.f32 %v1536, 0.6931472
    %v1538 = vmul.f32 -0.5, %v1534
    %v1539 = vadd.f32 %v1538, 1.0
    %v1540 = vmul.f32 %v1539, %v1534
    %v1541 = vand.u32 2147483647, %v1534
    %vm1542 = vcmp.lt.f32.partialorder %v1541, 0.0004427343
    %v1543 = vsel %vm1542, %v1540, %v1537
    %v1544 = vadd.f32 %v1528, %v1543
    %v1545 = vsel %vm1529, %v1530, %v1544
    %v1546 = vxor.u32 %v1526, 2147483648
    %v1547 = vmul.f32 %v1546, 1.442695
    %v1548 = vpow.pop %v1547
    %v1549 = vadd.f32 %v1548, 1.0
    %v1550 = vrcp.pop %v1549
    %v1551 = vmul.f32 %v1549, %v1550
    %v1552 = vsub.f32 1.0, %v1551
    %v1553 = vmul.f32 %v1550, %v1552
    %v1554 = vadd.f32 %v1550, %v1553
    %vm1555 = vweird.f32 %v1549
    %vm1556 = vweird.f32 %v1550
    %vm1557 = vmor %vm1555, %vm1556
    %v1558 = vsel %vm1557, %v1550, %v1554
    %v1559 = vand.u32 2147483647, %v1549
    %vm1560 = vcmp.eq.f32.partialorder %v1559, 8.507059e+37
    %v1561 = vand.u32 %v1549, 2147483648
    %v1562 = vor.u32 1.1754944e-38, %v1561
    %v1563 = vsel %vm1560, %v1562, %v1558
    %v1564 = vmul.f32 1.0, %v1563
    %v1566 = vsel %vm929, %v1545, 0
    %1568 = vmatpush.msra.mxu0 0.0
    %1569 = vmatpush.msra.mxu0 0.0
    %1570 = vmatpush.msra.mxu0 0.0
    %1571 = vmatpush.msra.mxu0 0.0
    %1572 = vmatpush.msra.mxu0 0.0
    %1573 = vmatpush.msra.mxu0 0.0
    %1574 = vmatpush.msra.mxu0 0.0
    %1575 = vmatpush.msra.mxu0 0.0
    %1576 = vmatpush.msra.mxu0 0.0
    %1577 = vmatpush.msra.mxu0 0.0
    %1578 = vmatpush.msra.mxu0 0.0
    %1579 = vmatpush.msra.mxu0 0.0
    %1580 = vmatpush.msra.mxu0 %v953
    %1581 = vmatpush.msra.mxu0 %v952
    %1582 = vmatpush.msra.mxu0 %v951
    %1583 = vmatpush.msra.mxu0 %v950
    %1584 = vmatmul.f32.gmra.mxu0 %v1566
    %v1585 = vpop.f32.mrf.mxu0
    %v1586 = vadd.f32 %v1064, %v1585
    %1587 = vdwg.mxu0
    %1589 = vrot.lane.b32.xlu0 %v1586, 124
    %v1590 = vpop.permute.xlu0 %1589
    %v1592 = vsub.f32 %v1586, %v1590
    %1594 = vrot.lane.b32.xlu0 %v1564, 96
    %v1595 = vpop.permute.xlu0 %1594
    %v1597 = vrcp.pop %v1595
    %v1598 = vmul.f32 %v1595, %v1597
    %v1599 = vsub.f32 1.0, %v1598
    %v1600 = vmul.f32 %v1597, %v1599
    %v1601 = vadd.f32 %v1597, %v1600
    %vm1602 = vweird.f32 %v1595
    %vm1603 = vweird.f32 %v1597
    %vm1604 = vmor %vm1602, %vm1603
    %v1605 = vsel %vm1604, %v1597, %v1601
    %v1606 = vand.u32 2147483647, %v1595
    %vm1607 = vcmp.eq.f32.partialorder %v1606, 8.507059e+37
    %v1608 = vand.u32 %v1595, 2147483648
    %v1609 = vor.u32 1.1754944e-38, %v1608
    %v1610 = vsel %vm1607, %v1609, %v1605
    %v1611 = vmul.f32 %v1592, %v1610
    %v1612 = vmul.f32 %v1611, %v1611
    %v1613 = vmul.f32 %v1447, %v1612
    %v1614 = vadd.f32 %v1449, %v1613
    %v1615 = vmul.f32 %v1586, %v1450
    %v1616 = vadd.f32 %v1463, %v1615
    %v1617 = vld [vmem:[%s2 + $0x18] sm:$0xff]
    %1619 = vrot.lane.b32.xlu0 %v1617, 32
    %v1620 = vpop.permute.xlu0 %1619
    %v1622 = vmul.f32 %v1564, %v1620
    %1624 = vrot.lane.b32.xlu0 %v1622, 96
    %v1625 = vpop.permute.xlu0 %1624
    %v1627 = vadd.f32 %v1616, %v1625
    %s1628 = sld [smem:[#allocation2 + $0x2]]
    %v1630 = vsel %vm72, %v1627, 0
    %1632 = vmatpush.msra.mxu0 0.0
    %1633 = vmatpush.msra.mxu0 0.0
    %1634 = vmatpush.msra.mxu0 0.0
    %1635 = vmatpush.msra.mxu0 0.0
    %1636 = vmatpush.msra.mxu0 0.0
    %1637 = vmatpush.msra.mxu0 0.0
    %1638 = vmatpush.msra.mxu0 0.0
    %1639 = vmatpush.msra.mxu0 0.0
    %1640 = vmatpush.msra.mxu0 0.0
    %1641 = vmatpush.msra.mxu0 0.0
    %1642 = vmatpush.msra.mxu0 0.0
    %1643 = vmatpush.msra.mxu0 0.0
    %1644 = vmatpush.msra.mxu0 0.0
    %1645 = vmatpush.msra.mxu0 0.0
    %1646 = vmatpush.msra.mxu0 0.0
    %1647 = vmatpush.msra.mxu0 %v959
    %1648 = vmatmul.f32.gmra.mxu0 %v1630
    %v1649 = vpop.f32.mrf.mxu0
    %v1650 = vadd.f32 %v934, %v1649
    %1651 = vdwg.mxu0
    %v1652 = vmax.f32 %v1650, 0.0
    %vm1653 = vcmp.ne.f32.partialorder %v1650, %v1650
    %v1654 = vadd.f32 %v1650, 0.0
    %v1655 = vand.u32 2147483647, %v1650
    %v1656 = vsub.f32 0.0, %v1655
    %v1657 = vmul.f32 %v1656, 1.442695
    %v1658 = vpow.pop %v1657
    %v1659 = vadd.f32 %v1658, 1.0
    %v1660 = vlog2.pop %v1659
    %v1661 = vmul.f32 %v1660, 0.6931472
    %v1662 = vmul.f32 -0.5, %v1658
    %v1663 = vadd.f32 %v1662, 1.0
    %v1664 = vmul.f32 %v1663, %v1658
    %v1665 = vand.u32 2147483647, %v1658
    %vm1666 = vcmp.lt.f32.partialorder %v1665, 0.0004427343
    %v1667 = vsel %vm1666, %v1664, %v1661
    %v1668 = vadd.f32 %v1652, %v1667
    %v1669 = vsel %vm1653, %v1654, %v1668
    %v1671 = vsel %vm1002, %v1669, 0
    %1673 = vmatpush.msra.mxu0 0.0
    %1674 = vmatpush.msra.mxu0 0.0
    %1675 = vmatpush.msra.mxu0 0.0
    %1676 = vmatpush.msra.mxu0 0.0
    %1677 = vmatpush.msra.mxu0 %v949
    %1678 = vmatpush.msra.mxu0 %v948
    %1679 = vmatpush.msra.mxu0 %v947
    %1680 = vmatpush.msra.mxu0 %v946
    %1681 = vmatpush.msra.mxu0 %v945
    %1682 = vmatpush.msra.mxu0 %v944
    %1683 = vmatpush.msra.mxu0 %v943
    %1684 = vmatpush.msra.mxu0 %v942
    %1685 = vmatpush.msra.mxu0 %v941
    %1686 = vmatpush.msra.mxu0 %v940
    %1687 = vmatpush.msra.mxu0 %v939
    %1688 = vmatpush.msra.mxu0 %v938
    %1689 = vmatmul.f32.gmra.mxu0 %v1671
    %v1690 = vpop.f32.mrf.mxu0
    %v1691 = vadd.f32 %v1000, %v1690
    %1692 = vdwg.mxu0
    %v1693 = vmax.f32 %v1691, 0.0
    %vm1694 = vcmp.ne.f32.partialorder %v1691, %v1691
    %v1695 = vadd.f32 %v1691, 0.0
    %v1696 = vand.u32 2147483647, %v1691
    %v1697 = vsub.f32 0.0, %v1696
    %v1698 = vmul.f32 %v1697, 1.442695
    %v1699 = vpow.pop %v1698
    %v1700 = vadd.f32 %v1699, 1.0
    %v1701 = vlog2.pop %v1700
    %v1702 = vmul.f32 %v1701, 0.6931472
    %v1703 = vmul.f32 -0.5, %v1699
    %v1704 = vadd.f32 %v1703, 1.0
    %v1705 = vmul.f32 %v1704, %v1699
    %v1706 = vand.u32 2147483647, %v1699
    %vm1707 = vcmp.lt.f32.partialorder %v1706, 0.0004427343
    %v1708 = vsel %vm1707, %v1705, %v1702
    %v1709 = vadd.f32 %v1693, %v1708
    %v1710 = vsel %vm1694, %v1695, %v1709
    %v1711 = vxor.u32 %v1691, 2147483648
    %v1712 = vmul.f32 %v1711, 1.442695
    %v1713 = vpow.pop %v1712
    %v1714 = vadd.f32 %v1713, 1.0
    %v1715 = vrcp.pop %v1714
    %v1716 = vmul.f32 %v1714, %v1715
    %v1717 = vsub.f32 1.0, %v1716
    %v1718 = vmul.f32 %v1715, %v1717
    %v1719 = vadd.f32 %v1715, %v1718
    %vm1720 = vweird.f32 %v1714
    %vm1721 = vweird.f32 %v1715
    %vm1722 = vmor %vm1720, %vm1721
    %v1723 = vsel %vm1722, %v1715, %v1719
    %v1724 = vand.u32 2147483647, %v1714
    %vm1725 = vcmp.eq.f32.partialorder %v1724, 8.507059e+37
    %v1726 = vand.u32 %v1714, 2147483648
    %v1727 = vor.u32 1.1754944e-38, %v1726
    %v1728 = vsel %vm1725, %v1727, %v1723
    %v1729 = vmul.f32 1.0, %v1728
    %v1731 = vsel %vm929, %v1710, 0
    %1733 = vmatpush.msra.mxu0 0.0
    %1734 = vmatpush.msra.mxu0 0.0
    %1735 = vmatpush.msra.mxu0 0.0
    %1736 = vmatpush.msra.mxu0 0.0
    %1737 = vmatpush.msra.mxu0 0.0
    %1738 = vmatpush.msra.mxu0 0.0
    %1739 = vmatpush.msra.mxu0 0.0
    %1740 = vmatpush.msra.mxu0 0.0
    %1741 = vmatpush.msra.mxu0 0.0
    %1742 = vmatpush.msra.mxu0 0.0
    %1743 = vmatpush.msra.mxu0 0.0
    %1744 = vmatpush.msra.mxu0 0.0
    %1745 = vmatpush.msra.mxu0 %v953
    %1746 = vmatpush.msra.mxu0 %v952
    %1747 = vmatpush.msra.mxu0 %v951
    %1748 = vmatpush.msra.mxu0 %v950
    %1749 = vmatmul.f32.gmra.mxu0 %v1731
    %v1750 = vpop.f32.mrf.mxu0
    %v1751 = vadd.f32 %v1064, %v1750
    %1752 = vdwg.mxu0
    %1754 = vrot.lane.b32.xlu0 %v1751, 124
    %v1755 = vpop.permute.xlu0 %1754
    %v1757 = vsub.f32 %v1751, %v1755
    %1759 = vrot.lane.b32.xlu0 %v1729, 96
    %v1760 = vpop.permute.xlu0 %1759
    %v1762 = vrcp.pop %v1760
    %v1763 = vmul.f32 %v1760, %v1762
    %v1764 = vsub.f32 1.0, %v1763
    %v1765 = vmul.f32 %v1762, %v1764
    %v1766 = vadd.f32 %v1762, %v1765
    %vm1767 = vweird.f32 %v1760
    %vm1768 = vweird.f32 %v1762
    %vm1769 = vmor %vm1767, %vm1768
    %v1770 = vsel %vm1769, %v1762, %v1766
    %v1771 = vand.u32 2147483647, %v1760
    %vm1772 = vcmp.eq.f32.partialorder %v1771, 8.507059e+37
    %v1773 = vand.u32 %v1760, 2147483648
    %v1774 = vor.u32 1.1754944e-38, %v1773
    %v1775 = vsel %vm1772, %v1774, %v1770
    %v1776 = vmul.f32 %v1757, %v1775
    %s1777 = smul.f32 %s1628, 0.5
    %v1778 = vmul.f32 %v1776, %v1776
    %v1779 = vstv %s1777
    %v1780 = vmul.f32 %v1779, %v1778
    %v1781 = vadd.f32 %v1614, %v1780
    %v1782 = vstv %s1628
    %v1783 = vmul.f32 %v1751, %v1782
    %v1784 = vadd.f32 %v1627, %v1783
    %v1785 = vld [vmem:[%s2 + $0x20] sm:$0xff]
    %1787 = vrot.lane.b32.xlu0 %v1785, 32
    %v1788 = vpop.permute.xlu0 %1787
    %v1790 = vmul.f32 %v1729, %v1788
    %1792 = vrot.lane.b32.xlu0 %v1790, 96
    %v1793 = vpop.permute.xlu0 %1792
    %v1795 = vadd.f32 %v1784, %v1793
    %v1797 = vsel %vm72, %v1795, 0
    %1799 = vmatpush.msra.mxu0 0.0
    %1800 = vmatpush.msra.mxu0 0.0
    %1801 = vmatpush.msra.mxu0 0.0
    %1802 = vmatpush.msra.mxu0 0.0
    %1803 = vmatpush.msra.mxu0 0.0
    %1804 = vmatpush.msra.mxu0 0.0
    %1805 = vmatpush.msra.mxu0 0.0
    %1806 = vmatpush.msra.mxu0 0.0
    %1807 = vmatpush.msra.mxu0 0.0
    %1808 = vmatpush.msra.mxu0 0.0
    %1809 = vmatpush.msra.mxu0 0.0
    %1810 = vmatpush.msra.mxu0 0.0
    %1811 = vmatpush.msra.mxu0 0.0
    %1812 = vmatpush.msra.mxu0 0.0
    %1813 = vmatpush.msra.mxu0 0.0
    %1814 = vmatpush.msra.mxu0 %v959
    %1815 = vmatmul.f32.gmra.mxu0 %v1797
    %v1816 = vpop.f32.mrf.mxu0
    %v1817 = vadd.f32 %v934, %v1816
    %1818 = vdwg.mxu0
    %v1819 = vmax.f32 %v1817, 0.0
    %vm1820 = vcmp.ne.f32.partialorder %v1817, %v1817
    %v1821 = vadd.f32 %v1817, 0.0
    %v1822 = vand.u32 2147483647, %v1817
    %v1823 = vsub.f32 0.0, %v1822
    %v1824 = vmul.f32 %v1823, 1.442695
    %v1825 = vpow.pop %v1824
    %v1826 = vadd.f32 %v1825, 1.0
    %v1827 = vlog2.pop %v1826
    %v1828 = vmul.f32 %v1827, 0.6931472
    %v1829 = vmul.f32 -0.5, %v1825
    %v1830 = vadd.f32 %v1829, 1.0
    %v1831 = vmul.f32 %v1830, %v1825
    %v1832 = vand.u32 2147483647, %v1825
    %vm1833 = vcmp.lt.f32.partialorder %v1832, 0.0004427343
    %v1834 = vsel %vm1833, %v1831, %v1828
    %v1835 = vadd.f32 %v1819, %v1834
    %v1836 = vsel %vm1820, %v1821, %v1835
    %v1838 = vsel %vm1002, %v1836, 0
    %1840 = vmatpush.msra.mxu0 0.0
    %1841 = vmatpush.msra.mxu0 0.0
    %1842 = vmatpush.msra.mxu0 0.0
    %1843 = vmatpush.msra.mxu0 0.0
    %1844 = vmatpush.msra.mxu0 %v949
    %1845 = vmatpush.msra.mxu0 %v948
    %1846 = vmatpush.msra.mxu0 %v947
    %1847 = vmatpush.msra.mxu0 %v946
    %1848 = vmatpush.msra.mxu0 %v945
    %1849 = vmatpush.msra.mxu0 %v944
    %1850 = vmatpush.msra.mxu0 %v943
    %1851 = vmatpush.msra.mxu0 %v942
    %1852 = vmatpush.msra.mxu0 %v941
    %1853 = vmatpush.msra.mxu0 %v940
    %1854 = vmatpush.msra.mxu0 %v939
    %1855 = vmatpush.msra.mxu0 %v938
    %1856 = vmatmul.f32.gmra.mxu0 %v1838
    %v1857 = vpop.f32.mrf.mxu0
    %v1858 = vadd.f32 %v1000, %v1857
    %1859 = vdwg.mxu0
    %v1860 = vmax.f32 %v1858, 0.0
    %vm1861 = vcmp.ne.f32.partialorder %v1858, %v1858
    %v1862 = vadd.f32 %v1858, 0.0
    %v1863 = vand.u32 2147483647, %v1858
    %v1864 = vsub.f32 0.0, %v1863
    %v1865 = vmul.f32 %v1864, 1.442695
    %v1866 = vpow.pop %v1865
    %v1867 = vadd.f32 %v1866, 1.0
    %v1868 = vlog2.pop %v1867
    %v1869 = vmul.f32 %v1868, 0.6931472
    %v1870 = vmul.f32 -0.5, %v1866
    %v1871 = vadd.f32 %v1870, 1.0
    %v1872 = vmul.f32 %v1871, %v1866
    %v1873 = vand.u32 2147483647, %v1866
    %vm1874 = vcmp.lt.f32.partialorder %v1873, 0.0004427343
    %v1875 = vsel %vm1874, %v1872, %v1869
    %v1876 = vadd.f32 %v1860, %v1875
    %v1877 = vsel %vm1861, %v1862, %v1876
    %v1878 = vxor.u32 %v1858, 2147483648
    %v1879 = vmul.f32 %v1878, 1.442695
    %v1880 = vpow.pop %v1879
    %v1881 = vadd.f32 %v1880, 1.0
    %v1882 = vrcp.pop %v1881
    %v1883 = vmul.f32 %v1881, %v1882
    %v1884 = vsub.f32 1.0, %v1883
    %v1885 = vmul.f32 %v1882, %v1884
    %v1886 = vadd.f32 %v1882, %v1885
    %vm1887 = vweird.f32 %v1881
    %vm1888 = vweird.f32 %v1882
    %vm1889 = vmor %vm1887, %vm1888
    %v1890 = vsel %vm1889, %v1882, %v1886
    %v1891 = vand.u32 2147483647, %v1881
    %vm1892 = vcmp.eq.f32.partialorder %v1891, 8.507059e+37
    %v1893 = vand.u32 %v1881, 2147483648
    %v1894 = vor.u32 1.1754944e-38, %v1893
    %v1895 = vsel %vm1892, %v1894, %v1890
    %v1896 = vmul.f32 1.0, %v1895
    %v1898 = vsel %vm929, %v1877, 0
    %1900 = vmatpush.msra.mxu0 0.0
    %1901 = vmatpush.msra.mxu0 0.0
    %1902 = vmatpush.msra.mxu0 0.0
    %1903 = vmatpush.msra.mxu0 0.0
    %1904 = vmatpush.msra.mxu0 0.0
    %1905 = vmatpush.msra.mxu0 0.0
    %1906 = vmatpush.msra.mxu0 0.0
    %1907 = vmatpush.msra.mxu0 0.0
    %1908 = vmatpush.msra.mxu0 0.0
    %1909 = vmatpush.msra.mxu0 0.0
    %1910 = vmatpush.msra.mxu0 0.0
    %1911 = vmatpush.msra.mxu0 0.0
    %1912 = vmatpush.msra.mxu0 %v953
    %1913 = vmatpush.msra.mxu0 %v952
    %1914 = vmatpush.msra.mxu0 %v951
    %1915 = vmatpush.msra.mxu0 %v950
    %1916 = vmatmul.f32.gmra.mxu0 %v1898
    %v1917 = vpop.f32.mrf.mxu0
    %v1918 = vadd.f32 %v1064, %v1917
    %1919 = vdwg.mxu0
    %1921 = vrot.lane.b32.xlu0 %v1918, 124
    %v1922 = vpop.permute.xlu0 %1921
    %v1924 = vsub.f32 %v1918, %v1922
    %1926 = vrot.lane.b32.xlu0 %v1896, 96
    %v1927 = vpop.permute.xlu0 %1926
    %v1929 = vrcp.pop %v1927
    %v1930 = vmul.f32 %v1927, %v1929
    %v1931 = vsub.f32 1.0, %v1930
    %v1932 = vmul.f32 %v1929, %v1931
    %v1933 = vadd.f32 %v1929, %v1932
    %vm1934 = vweird.f32 %v1927
    %vm1935 = vweird.f32 %v1929
    %vm1936 = vmor %vm1934, %vm1935
    %v1937 = vsel %vm1936, %v1929, %v1933
    %v1938 = vand.u32 2147483647, %v1927
    %vm1939 = vcmp.eq.f32.partialorder %v1938, 8.507059e+37
    %v1940 = vand.u32 %v1927, 2147483648
    %v1941 = vor.u32 1.1754944e-38, %v1940
    %v1942 = vsel %vm1939, %v1941, %v1937
    %v1943 = vmul.f32 %v1924, %v1942
    %v1944 = vmul.f32 %v1943, %v1943
    %v1945 = vmul.f32 %v1779, %v1944
    %v1946 = vadd.f32 %v1781, %v1945
    %v1947 = vmul.f32 %v1918, %v1782
    %v1948 = vadd.f32 %v1795, %v1947
    %v1949 = vld [vmem:[%s2 + $0x28] sm:$0xff]
    %1951 = vrot.lane.b32.xlu0 %v1949, 32
    %v1952 = vpop.permute.xlu0 %1951
    %v1954 = vmul.f32 %v1896, %v1952
    %1956 = vrot.lane.b32.xlu0 %v1954, 96
    %v1957 = vpop.permute.xlu0 %1956
    %v1959 = vadd.f32 %v1948, %v1957
    %s1960 = sld [smem:[#allocation2 + $0x3]]
    %v1962 = vsel %vm72, %v1959, 0
    %1964 = vmatpush.msra.mxu0 0.0
    %1965 = vmatpush.msra.mxu0 0.0
    %1966 = vmatpush.msra.mxu0 0.0
    %1967 = vmatpush.msra.mxu0 0.0
    %1968 = vmatpush.msra.mxu0 0.0
    %1969 = vmatpush.msra.mxu0 0.0
    %1970 = vmatpush.msra.mxu0 0.0
    %1971 = vmatpush.msra.mxu0 0.0
    %1972 = vmatpush.msra.mxu0 0.0
    %1973 = vmatpush.msra.mxu0 0.0
    %1974 = vmatpush.msra.mxu0 0.0
    %1975 = vmatpush.msra.mxu0 0.0
    %1976 = vmatpush.msra.mxu0 0.0
    %1977 = vmatpush.msra.mxu0 0.0
    %1978 = vmatpush.msra.mxu0 0.0
    %1979 = vmatpush.msra.mxu0 %v959
    %1980 = vmatmul.f32.gmra.mxu0 %v1962
    %v1981 = vpop.f32.mrf.mxu0
    %v1982 = vadd.f32 %v933, %v1981
    %1983 = vdwg.mxu0
    %v1984 = vmax.f32 %v1982, 0.0
    %vm1985 = vcmp.ne.f32.partialorder %v1982, %v1982
    %v1986 = vadd.f32 %v1982, 0.0
    %v1987 = vand.u32 2147483647, %v1982
    %v1988 = vsub.f32 0.0, %v1987
    %v1989 = vmul.f32 %v1988, 1.442695
    %v1990 = vpow.pop %v1989
    %v1991 = vadd.f32 %v1990, 1.0
    %v1992 = vlog2.pop %v1991
    %v1993 = vmul.f32 %v1992, 0.6931472
    %v1994 = vmul.f32 -0.5, %v1990
    %v1995 = vadd.f32 %v1994, 1.0
    %v1996 = vmul.f32 %v1995, %v1990
    %v1997 = vand.u32 2147483647, %v1990
    %vm1998 = vcmp.lt.f32.partialorder %v1997, 0.0004427343
    %v1999 = vsel %vm1998, %v1996, %v1993
    %v2000 = vadd.f32 %v1984, %v1999
    %v2001 = vsel %vm1985, %v1986, %v2000
    %v2003 = vsel %vm1002, %v2001, 0
    %2005 = vmatpush.msra.mxu0 0.0
    %2006 = vmatpush.msra.mxu0 0.0
    %2007 = vmatpush.msra.mxu0 0.0
    %2008 = vmatpush.msra.mxu0 0.0
    %2009 = vmatpush.msra.mxu0 %v949
    %2010 = vmatpush.msra.mxu0 %v948
    %2011 = vmatpush.msra.mxu0 %v947
    %2012 = vmatpush.msra.mxu0 %v946
    %2013 = vmatpush.msra.mxu0 %v945
    %2014 = vmatpush.msra.mxu0 %v944
    %2015 = vmatpush.msra.mxu0 %v943
    %2016 = vmatpush.msra.mxu0 %v942
    %2017 = vmatpush.msra.mxu0 %v941
    %2018 = vmatpush.msra.mxu0 %v940
    %2019 = vmatpush.msra.mxu0 %v939
    %2020 = vmatpush.msra.mxu0 %v938
    %2021 = vmatmul.f32.gmra.mxu0 %v2003
    %v2022 = vpop.f32.mrf.mxu0
    %v2023 = vadd.f32 %v1000, %v2022
    %2024 = vdwg.mxu0
    %v2025 = vmax.f32 %v2023, 0.0
    %vm2026 = vcmp.ne.f32.partialorder %v2023, %v2023
    %v2027 = vadd.f32 %v2023, 0.0
    %v2028 = vand.u32 2147483647, %v2023
    %v2029 = vsub.f32 0.0, %v2028
    %v2030 = vmul.f32 %v2029, 1.442695
    %v2031 = vpow.pop %v2030
    %v2032 = vadd.f32 %v2031, 1.0
    %v2033 = vlog2.pop %v2032
    %v2034 = vmul.f32 %v2033, 0.6931472
    %v2035 = vmul.f32 -0.5, %v2031
    %v2036 = vadd.f32 %v2035, 1.0
    %v2037 = vmul.f32 %v2036, %v2031
    %v2038 = vand.u32 2147483647, %v2031
    %vm2039 = vcmp.lt.f32.partialorder %v2038, 0.0004427343
    %v2040 = vsel %vm2039, %v2037, %v2034
    %v2041 = vadd.f32 %v2025, %v2040
    %v2042 = vsel %vm2026, %v2027, %v2041
    %v2043 = vxor.u32 %v2023, 2147483648
    %v2044 = vmul.f32 %v2043, 1.442695
    %v2045 = vpow.pop %v2044
    %v2046 = vadd.f32 %v2045, 1.0
    %v2047 = vrcp.pop %v2046
    %v2048 = vmul.f32 %v2046, %v2047
    %v2049 = vsub.f32 1.0, %v2048
    %v2050 = vmul.f32 %v2047, %v2049
    %v2051 = vadd.f32 %v2047, %v2050
    %vm2052 = vweird.f32 %v2046
    %vm2053 = vweird.f32 %v2047
    %vm2054 = vmor %vm2052, %vm2053
    %v2055 = vsel %vm2054, %v2047, %v2051
    %v2056 = vand.u32 2147483647, %v2046
    %vm2057 = vcmp.eq.f32.partialorder %v2056, 8.507059e+37
    %v2058 = vand.u32 %v2046, 2147483648
    %v2059 = vor.u32 1.1754944e-38, %v2058
    %v2060 = vsel %vm2057, %v2059, %v2055
    %v2061 = vmul.f32 1.0, %v2060
    %v2063 = vsel %vm929, %v2042, 0
    %2065 = vmatpush.msra.mxu0 0.0
    %2066 = vmatpush.msra.mxu0 0.0
    %2067 = vmatpush.msra.mxu0 0.0
    %2068 = vmatpush.msra.mxu0 0.0
    %2069 = vmatpush.msra.mxu0 0.0
    %2070 = vmatpush.msra.mxu0 0.0
    %2071 = vmatpush.msra.mxu0 0.0
    %2072 = vmatpush.msra.mxu0 0.0
    %2073 = vmatpush.msra.mxu0 0.0
    %2074 = vmatpush.msra.mxu0 0.0
    %2075 = vmatpush.msra.mxu0 0.0
    %2076 = vmatpush.msra.mxu0 0.0
    %2077 = vmatpush.msra.mxu0 %v953
    %2078 = vmatpush.msra.mxu0 %v952
    %2079 = vmatpush.msra.mxu0 %v951
    %2080 = vmatpush.msra.mxu0 %v950
    %2081 = vmatmul.f32.gmra.mxu0 %v2063
    %v2082 = vpop.f32.mrf.mxu0
    %v2083 = vadd.f32 %v1064, %v2082
    %2084 = vdwg.mxu0
    %2086 = vrot.lane.b32.xlu0 %v2083, 124
    %v2087 = vpop.permute.xlu0 %2086
    %v2089 = vsub.f32 %v2083, %v2087
    %2091 = vrot.lane.b32.xlu0 %v2061, 96
    %v2092 = vpop.permute.xlu0 %2091
    %v2094 = vrcp.pop %v2092
    %v2095 = vmul.f32 %v2092, %v2094
    %v2096 = vsub.f32 1.0, %v2095
    %v2097 = vmul.f32 %v2094, %v2096
    %v2098 = vadd.f32 %v2094, %v2097
    %vm2099 = vweird.f32 %v2092
    %vm2100 = vweird.f32 %v2094
    %vm2101 = vmor %vm2099, %vm2100
    %v2102 = vsel %vm2101, %v2094, %v2098
    %v2103 = vand.u32 2147483647, %v2092
    %vm2104 = vcmp.eq.f32.partialorder %v2103, 8.507059e+37
    %v2105 = vand.u32 %v2092, 2147483648
    %v2106 = vor.u32 1.1754944e-38, %v2105
    %v2107 = vsel %vm2104, %v2106, %v2102
    %v2108 = vmul.f32 %v2089, %v2107
    %s2109 = smul.f32 %s1960, 0.5
    %v2110 = vmul.f32 %v2108, %v2108
    %v2111 = vstv %s2109
    %v2112 = vmul.f32 %v2111, %v2110
    %v2113 = vadd.f32 %v1946, %v2112
    %v2114 = vstv %s1960
    %v2115 = vmul.f32 %v2083, %v2114
    %v2116 = vadd.f32 %v1959, %v2115
    %v2117 = vld [vmem:[%s2 + $0x30] sm:$0xff]
    %2119 = vrot.lane.b32.xlu0 %v2117, 32
    %v2120 = vpop.permute.xlu0 %2119
    %v2122 = vmul.f32 %v2061, %v2120
    %2124 = vrot.lane.b32.xlu0 %v2122, 96
    %v2125 = vpop.permute.xlu0 %2124
    %v2127 = vadd.f32 %v2116, %v2125
    %v2129 = vsel %vm72, %v2127, 0
    %2131 = vmatpush.msra.mxu0 0.0
    %2132 = vmatpush.msra.mxu0 0.0
    %2133 = vmatpush.msra.mxu0 0.0
    %2134 = vmatpush.msra.mxu0 0.0
    %2135 = vmatpush.msra.mxu0 0.0
    %2136 = vmatpush.msra.mxu0 0.0
    %2137 = vmatpush.msra.mxu0 0.0
    %2138 = vmatpush.msra.mxu0 0.0
    %2139 = vmatpush.msra.mxu0 0.0
    %2140 = vmatpush.msra.mxu0 0.0
    %2141 = vmatpush.msra.mxu0 0.0
    %2142 = vmatpush.msra.mxu0 0.0
    %2143 = vmatpush.msra.mxu0 0.0
    %2144 = vmatpush.msra.mxu0 0.0
    %2145 = vmatpush.msra.mxu0 0.0
    %2146 = vmatpush.msra.mxu0 %v959
    %2147 = vmatmul.f32.gmra.mxu0 %v2129
    %v2148 = vpop.f32.mrf.mxu0
    %v2149 = vadd.f32 %v933, %v2148
    %2150 = vdwg.mxu0
    %v2151 = vmax.f32 %v2149, 0.0
    %vm2152 = vcmp.ne.f32.partialorder %v2149, %v2149
    %v2153 = vadd.f32 %v2149, 0.0
    %v2154 = vand.u32 2147483647, %v2149
    %v2155 = vsub.f32 0.0, %v2154
    %v2156 = vmul.f32 %v2155, 1.442695
    %v2157 = vpow.pop %v2156
    %v2158 = vadd.f32 %v2157, 1.0
    %v2159 = vlog2.pop %v2158
    %v2160 = vmul.f32 %v2159, 0.6931472
    %v2161 = vmul.f32 -0.5, %v2157
    %v2162 = vadd.f32 %v2161, 1.0
    %v2163 = vmul.f32 %v2162, %v2157
    %v2164 = vand.u32 2147483647, %v2157
    %vm2165 = vcmp.lt.f32.partialorder %v2164, 0.0004427343
    %v2166 = vsel %vm2165, %v2163, %v2160
    %v2167 = vadd.f32 %v2151, %v2166
    %v2168 = vsel %vm2152, %v2153, %v2167
    %v2170 = vsel %vm1002, %v2168, 0
    %2172 = vmatpush.msra.mxu0 0.0
    %2173 = vmatpush.msra.mxu0 0.0
    %2174 = vmatpush.msra.mxu0 0.0
    %2175 = vmatpush.msra.mxu0 0.0
    %2176 = vmatpush.msra.mxu0 %v949
    %2177 = vmatpush.msra.mxu0 %v948
    %2178 = vmatpush.msra.mxu0 %v947
    %2179 = vmatpush.msra.mxu0 %v946
    %2180 = vmatpush.msra.mxu0 %v945
    %2181 = vmatpush.msra.mxu0 %v944
    %2182 = vmatpush.msra.mxu0 %v943
    %2183 = vmatpush.msra.mxu0 %v942
    %2184 = vmatpush.msra.mxu0 %v941
    %2185 = vmatpush.msra.mxu0 %v940
    %2186 = vmatpush.msra.mxu0 %v939
    %2187 = vmatpush.msra.mxu0 %v938
    %2188 = vmatmul.f32.gmra.mxu0 %v2170
    %v2189 = vpop.f32.mrf.mxu0
    %v2190 = vadd.f32 %v1000, %v2189
    %2191 = vdwg.mxu0
    %v2192 = vmax.f32 %v2190, 0.0
    %vm2193 = vcmp.ne.f32.partialorder %v2190, %v2190
    %v2194 = vadd.f32 %v2190, 0.0
    %v2195 = vand.u32 2147483647, %v2190
    %v2196 = vsub.f32 0.0, %v2195
    %v2197 = vmul.f32 %v2196, 1.442695
    %v2198 = vpow.pop %v2197
    %v2199 = vadd.f32 %v2198, 1.0
    %v2200 = vlog2.pop %v2199
    %v2201 = vmul.f32 %v2200, 0.6931472
    %v2202 = vmul.f32 -0.5, %v2198
    %v2203 = vadd.f32 %v2202, 1.0
    %v2204 = vmul.f32 %v2203, %v2198
    %v2205 = vand.u32 2147483647, %v2198
    %vm2206 = vcmp.lt.f32.partialorder %v2205, 0.0004427343
    %v2207 = vsel %vm2206, %v2204, %v2201
    %v2208 = vadd.f32 %v2192, %v2207
    %v2209 = vsel %vm2193, %v2194, %v2208
    %v2210 = vxor.u32 %v2190, 2147483648
    %v2211 = vmul.f32 %v2210, 1.442695
    %v2212 = vpow.pop %v2211
    %v2213 = vadd.f32 %v2212, 1.0
    %v2214 = vrcp.pop %v2213
    %v2215 = vmul.f32 %v2213, %v2214
    %v2216 = vsub.f32 1.0, %v2215
    %v2217 = vmul.f32 %v2214, %v2216
    %v2218 = vadd.f32 %v2214, %v2217
    %vm2219 = vweird.f32 %v2213
    %vm2220 = vweird.f32 %v2214
    %vm2221 = vmor %vm2219, %vm2220
    %v2222 = vsel %vm2221, %v2214, %v2218
    %v2223 = vand.u32 2147483647, %v2213
    %vm2224 = vcmp.eq.f32.partialorder %v2223, 8.507059e+37
    %v2225 = vand.u32 %v2213, 2147483648
    %v2226 = vor.u32 1.1754944e-38, %v2225
    %v2227 = vsel %vm2224, %v2226, %v2222
    %v2228 = vmul.f32 1.0, %v2227
    %v2230 = vsel %vm929, %v2209, 0
    %2232 = vmatpush.msra.mxu0 0.0
    %2233 = vmatpush.msra.mxu0 0.0
    %2234 = vmatpush.msra.mxu0 0.0
    %2235 = vmatpush.msra.mxu0 0.0
    %2236 = vmatpush.msra.mxu0 0.0
    %2237 = vmatpush.msra.mxu0 0.0
    %2238 = vmatpush.msra.mxu0 0.0
    %2239 = vmatpush.msra.mxu0 0.0
    %2240 = vmatpush.msra.mxu0 0.0
    %2241 = vmatpush.msra.mxu0 0.0
    %2242 = vmatpush.msra.mxu0 0.0
    %2243 = vmatpush.msra.mxu0 0.0
    %2244 = vmatpush.msra.mxu0 %v953
    %2245 = vmatpush.msra.mxu0 %v952
    %2246 = vmatpush.msra.mxu0 %v951
    %2247 = vmatpush.msra.mxu0 %v950
    %2248 = vmatmul.f32.gmra.mxu0 %v2230
    %v2249 = vpop.f32.mrf.mxu0
    %v2250 = vadd.f32 %v1064, %v2249
    %2251 = vdwg.mxu0
    %2253 = vrot.lane.b32.xlu0 %v2250, 124
    %v2254 = vpop.permute.xlu0 %2253
    %v2256 = vsub.f32 %v2250, %v2254
    %2258 = vrot.lane.b32.xlu0 %v2228, 96
    %v2259 = vpop.permute.xlu0 %2258
    %v2261 = vrcp.pop %v2259
    %v2262 = vmul.f32 %v2259, %v2261
    %v2263 = vsub.f32 1.0, %v2262
    %v2264 = vmul.f32 %v2261, %v2263
    %v2265 = vadd.f32 %v2261, %v2264
    %vm2266 = vweird.f32 %v2259
    %vm2267 = vweird.f32 %v2261
    %vm2268 = vmor %vm2266, %vm2267
    %v2269 = vsel %vm2268, %v2261, %v2265
    %v2270 = vand.u32 2147483647, %v2259
    %vm2271 = vcmp.eq.f32.partialorder %v2270, 8.507059e+37
    %v2272 = vand.u32 %v2259, 2147483648
    %v2273 = vor.u32 1.1754944e-38, %v2272
    %v2274 = vsel %vm2271, %v2273, %v2269
    %v2275 = vmul.f32 %v2256, %v2274
    %v2276 = vmul.f32 %v2275, %v2275
    %v2277 = vmul.f32 %v2111, %v2276
    %v2278 = vadd.f32 %v2113, %v2277
    %v2279 = vmul.f32 %v2250, %v2114
    %v2280 = vadd.f32 %v2127, %v2279
    %v2281 = vld [vmem:[%s2 + $0x38] sm:$0xff]
    %2283 = vrot.lane.b32.xlu0 %v2281, 32
    %v2284 = vpop.permute.xlu0 %2283
    %v2286 = vmul.f32 %v2228, %v2284
    %2288 = vrot.lane.b32.xlu0 %v2286, 96
    %v2289 = vpop.permute.xlu0 %2288
    %v2291 = vadd.f32 %v2280, %v2289
    %s2292 = sld [smem:[#allocation2 + $0x4]]
    %v2294 = vsel %vm72, %v2291, 0
    %2296 = vmatpush.msra.mxu0 0.0
    %2297 = vmatpush.msra.mxu0 0.0
    %2298 = vmatpush.msra.mxu0 0.0
    %2299 = vmatpush.msra.mxu0 0.0
    %2300 = vmatpush.msra.mxu0 0.0
    %2301 = vmatpush.msra.mxu0 0.0
    %2302 = vmatpush.msra.mxu0 0.0
    %2303 = vmatpush.msra.mxu0 0.0
    %2304 = vmatpush.msra.mxu0 0.0
    %2305 = vmatpush.msra.mxu0 0.0
    %2306 = vmatpush.msra.mxu0 0.0
    %2307 = vmatpush.msra.mxu0 0.0
    %2308 = vmatpush.msra.mxu0 0.0
    %2309 = vmatpush.msra.mxu0 0.0
    %2310 = vmatpush.msra.mxu0 0.0
    %2311 = vmatpush.msra.mxu0 %v959
    %2312 = vmatmul.f32.gmra.mxu0 %v2294
    %v2313 = vpop.f32.mrf.mxu0
    %v2314 = vadd.f32 %v932, %v2313
    %2315 = vdwg.mxu0
    %v2316 = vmax.f32 %v2314, 0.0
    %vm2317 = vcmp.ne.f32.partialorder %v2314, %v2314
    %v2318 = vadd.f32 %v2314, 0.0
    %v2319 = vand.u32 2147483647, %v2314
    %v2320 = vsub.f32 0.0, %v2319
    %v2321 = vmul.f32 %v2320, 1.442695
    %v2322 = vpow.pop %v2321
    %v2323 = vadd.f32 %v2322, 1.0
    %v2324 = vlog2.pop %v2323
    %v2325 = vmul.f32 %v2324, 0.6931472
    %v2326 = vmul.f32 -0.5, %v2322
    %v2327 = vadd.f32 %v2326, 1.0
    %v2328 = vmul.f32 %v2327, %v2322
    %v2329 = vand.u32 2147483647, %v2322
    %vm2330 = vcmp.lt.f32.partialorder %v2329, 0.0004427343
    %v2331 = vsel %vm2330, %v2328, %v2325
    %v2332 = vadd.f32 %v2316, %v2331
    %v2333 = vsel %vm2317, %v2318, %v2332
    %v2335 = vsel %vm1002, %v2333, 0
    %2337 = vmatpush.msra.mxu0 0.0
    %2338 = vmatpush.msra.mxu0 0.0
    %2339 = vmatpush.msra.mxu0 0.0
    %2340 = vmatpush.msra.mxu0 0.0
    %2341 = vmatpush.msra.mxu0 %v949
    %2342 = vmatpush.msra.mxu0 %v948
    %2343 = vmatpush.msra.mxu0 %v947
    %2344 = vmatpush.msra.mxu0 %v946
    %2345 = vmatpush.msra.mxu0 %v945
    %2346 = vmatpush.msra.mxu0 %v944
    %2347 = vmatpush.msra.mxu0 %v943
    %2348 = vmatpush.msra.mxu0 %v942
    %2349 = vmatpush.msra.mxu0 %v941
    %2350 = vmatpush.msra.mxu0 %v940
    %2351 = vmatpush.msra.mxu0 %v939
    %2352 = vmatpush.msra.mxu0 %v938
    %2353 = vmatmul.f32.gmra.mxu0 %v2335
    %v2354 = vpop.f32.mrf.mxu0
    %v2355 = vadd.f32 %v1000, %v2354
    %2356 = vdwg.mxu0
    %v2357 = vmax.f32 %v2355, 0.0
    %vm2358 = vcmp.ne.f32.partialorder %v2355, %v2355
    %v2359 = vadd.f32 %v2355, 0.0
    %v2360 = vand.u32 2147483647, %v2355
    %v2361 = vsub.f32 0.0, %v2360
    %v2362 = vmul.f32 %v2361, 1.442695
    %v2363 = vpow.pop %v2362
    %v2364 = vadd.f32 %v2363, 1.0
    %v2365 = vlog2.pop %v2364
    %v2366 = vmul.f32 %v2365, 0.6931472
    %v2367 = vmul.f32 -0.5, %v2363
    %v2368 = vadd.f32 %v2367, 1.0
    %v2369 = vmul.f32 %v2368, %v2363
    %v2370 = vand.u32 2147483647, %v2363
    %vm2371 = vcmp.lt.f32.partialorder %v2370, 0.0004427343
    %v2372 = vsel %vm2371, %v2369, %v2366
    %v2373 = vadd.f32 %v2357, %v2372
    %v2374 = vsel %vm2358, %v2359, %v2373
    %v2375 = vxor.u32 %v2355, 2147483648
    %v2376 = vmul.f32 %v2375, 1.442695
    %v2377 = vpow.pop %v2376
    %v2378 = vadd.f32 %v2377, 1.0
    %v2379 = vrcp.pop %v2378
    %v2380 = vmul.f32 %v2378, %v2379
    %v2381 = vsub.f32 1.0, %v2380
    %v2382 = vmul.f32 %v2379, %v2381
    %v2383 = vadd.f32 %v2379, %v2382
    %vm2384 = vweird.f32 %v2378
    %vm2385 = vweird.f32 %v2379
    %vm2386 = vmor %vm2384, %vm2385
    %v2387 = vsel %vm2386, %v2379, %v2383
    %v2388 = vand.u32 2147483647, %v2378
    %vm2389 = vcmp.eq.f32.partialorder %v2388, 8.507059e+37
    %v2390 = vand.u32 %v2378, 2147483648
    %v2391 = vor.u32 1.1754944e-38, %v2390
    %v2392 = vsel %vm2389, %v2391, %v2387
    %v2393 = vmul.f32 1.0, %v2392
    %v2395 = vsel %vm929, %v2374, 0
    %2397 = vmatpush.msra.mxu0 0.0
    %2398 = vmatpush.msra.mxu0 0.0
    %2399 = vmatpush.msra.mxu0 0.0
    %2400 = vmatpush.msra.mxu0 0.0
    %2401 = vmatpush.msra.mxu0 0.0
    %2402 = vmatpush.msra.mxu0 0.0
    %2403 = vmatpush.msra.mxu0 0.0
    %2404 = vmatpush.msra.mxu0 0.0
    %2405 = vmatpush.msra.mxu0 0.0
    %2406 = vmatpush.msra.mxu0 0.0
    %2407 = vmatpush.msra.mxu0 0.0
    %2408 = vmatpush.msra.mxu0 0.0
    %2409 = vmatpush.msra.mxu0 %v953
    %2410 = vmatpush.msra.mxu0 %v952
    %2411 = vmatpush.msra.mxu0 %v951
    %2412 = vmatpush.msra.mxu0 %v950
    %2413 = vmatmul.f32.gmra.mxu0 %v2395
    %v2414 = vpop.f32.mrf.mxu0
    %v2415 = vadd.f32 %v1064, %v2414
    %2416 = vdwg.mxu0
    %2418 = vrot.lane.b32.xlu0 %v2415, 124
    %v2419 = vpop.permute.xlu0 %2418
    %v2421 = vsub.f32 %v2415, %v2419
    %2423 = vrot.lane.b32.xlu0 %v2393, 96
    %v2424 = vpop.permute.xlu0 %2423
    %v2426 = vrcp.pop %v2424
    %v2427 = vmul.f32 %v2424, %v2426
    %v2428 = vsub.f32 1.0, %v2427
    %v2429 = vmul.f32 %v2426, %v2428
    %v2430 = vadd.f32 %v2426, %v2429
    %vm2431 = vweird.f32 %v2424
    %vm2432 = vweird.f32 %v2426
    %vm2433 = vmor %vm2431, %vm2432
    %v2434 = vsel %vm2433, %v2426, %v2430
    %v2435 = vand.u32 2147483647, %v2424
    %vm2436 = vcmp.eq.f32.partialorder %v2435, 8.507059e+37
    %v2437 = vand.u32 %v2424, 2147483648
    %v2438 = vor.u32 1.1754944e-38, %v2437
    %v2439 = vsel %vm2436, %v2438, %v2434
    %v2440 = vmul.f32 %v2421, %v2439
    %s2441 = smul.f32 %s2292, 0.5
    %v2442 = vmul.f32 %v2440, %v2440
    %v2443 = vstv %s2441
    %v2444 = vmul.f32 %v2443, %v2442
    %v2445 = vadd.f32 %v2278, %v2444
    %v2446 = vstv %s2292
    %v2447 = vmul.f32 %v2415, %v2446
    %v2448 = vadd.f32 %v2291, %v2447
    %v2449 = vld [vmem:[%s2 + $0x40] sm:$0xff]
    %2451 = vrot.lane.b32.xlu0 %v2449, 32
    %v2452 = vpop.permute.xlu0 %2451
    %v2454 = vmul.f32 %v2393, %v2452
    %2456 = vrot.lane.b32.xlu0 %v2454, 96
    %v2457 = vpop.permute.xlu0 %2456
    %v2459 = vadd.f32 %v2448, %v2457
    %v2461 = vsel %vm72, %v2459, 0
    %2463 = vmatpush.msra.mxu0 0.0
    %2464 = vmatpush.msra.mxu0 0.0
    %2465 = vmatpush.msra.mxu0 0.0
    %2466 = vmatpush.msra.mxu0 0.0
    %2467 = vmatpush.msra.mxu0 0.0
    %2468 = vmatpush.msra.mxu0 0.0
    %2469 = vmatpush.msra.mxu0 0.0
    %2470 = vmatpush.msra.mxu0 0.0
    %2471 = vmatpush.msra.mxu0 0.0
    %2472 = vmatpush.msra.mxu0 0.0
    %2473 = vmatpush.msra.mxu0 0.0
    %2474 = vmatpush.msra.mxu0 0.0
    %2475 = vmatpush.msra.mxu0 0.0
    %2476 = vmatpush.msra.mxu0 0.0
    %2477 = vmatpush.msra.mxu0 0.0
    %2478 = vmatpush.msra.mxu0 %v959
    %2479 = vmatmul.f32.gmra.mxu0 %v2461
    %v2480 = vpop.f32.mrf.mxu0
    %v2481 = vadd.f32 %v932, %v2480
    %2482 = vdwg.mxu0
    %v2483 = vmax.f32 %v2481, 0.0
    %vm2484 = vcmp.ne.f32.partialorder %v2481, %v2481
    %v2485 = vadd.f32 %v2481, 0.0
    %v2486 = vand.u32 2147483647, %v2481
    %v2487 = vsub.f32 0.0, %v2486
    %v2488 = vmul.f32 %v2487, 1.442695
    %v2489 = vpow.pop %v2488
    %v2490 = vadd.f32 %v2489, 1.0
    %v2491 = vlog2.pop %v2490
    %v2492 = vmul.f32 %v2491, 0.6931472
    %v2493 = vmul.f32 -0.5, %v2489
    %v2494 = vadd.f32 %v2493, 1.0
    %v2495 = vmul.f32 %v2494, %v2489
    %v2496 = vand.u32 2147483647, %v2489
    %vm2497 = vcmp.lt.f32.partialorder %v2496, 0.0004427343
    %v2498 = vsel %vm2497, %v2495, %v2492
    %v2499 = vadd.f32 %v2483, %v2498
    %v2500 = vsel %vm2484, %v2485, %v2499
    %v2502 = vsel %vm1002, %v2500, 0
    %2504 = vmatpush.msra.mxu0 0.0
    %2505 = vmatpush.msra.mxu0 0.0
    %2506 = vmatpush.msra.mxu0 0.0
    %2507 = vmatpush.msra.mxu0 0.0
    %2508 = vmatpush.msra.mxu0 %v949
    %2509 = vmatpush.msra.mxu0 %v948
    %2510 = vmatpush.msra.mxu0 %v947
    %2511 = vmatpush.msra.mxu0 %v946
    %2512 = vmatpush.msra.mxu0 %v945
    %2513 = vmatpush.msra.mxu0 %v944
    %2514 = vmatpush.msra.mxu0 %v943
    %2515 = vmatpush.msra.mxu0 %v942
    %2516 = vmatpush.msra.mxu0 %v941
    %2517 = vmatpush.msra.mxu0 %v940
    %2518 = vmatpush.msra.mxu0 %v939
    %2519 = vmatpush.msra.mxu0 %v938
    %2520 = vmatmul.f32.gmra.mxu0 %v2502
    %v2521 = vpop.f32.mrf.mxu0
    %v2522 = vadd.f32 %v1000, %v2521
    %2523 = vdwg.mxu0
    %v2524 = vmax.f32 %v2522, 0.0
    %vm2525 = vcmp.ne.f32.partialorder %v2522, %v2522
    %v2526 = vadd.f32 %v2522, 0.0
    %v2527 = vand.u32 2147483647, %v2522
    %v2528 = vsub.f32 0.0, %v2527
    %v2529 = vmul.f32 %v2528, 1.442695
    %v2530 = vpow.pop %v2529
    %v2531 = vadd.f32 %v2530, 1.0
    %v2532 = vlog2.pop %v2531
    %v2533 = vmul.f32 %v2532, 0.6931472
    %v2534 = vmul.f32 -0.5, %v2530
    %v2535 = vadd.f32 %v2534, 1.0
    %v2536 = vmul.f32 %v2535, %v2530
    %v2537 = vand.u32 2147483647, %v2530
    %vm2538 = vcmp.lt.f32.partialorder %v2537, 0.0004427343
    %v2539 = vsel %vm2538, %v2536, %v2533
    %v2540 = vadd.f32 %v2524, %v2539
    %v2541 = vsel %vm2525, %v2526, %v2540
    %v2542 = vxor.u32 %v2522, 2147483648
    %v2543 = vmul.f32 %v2542, 1.442695
    %v2544 = vpow.pop %v2543
    %v2545 = vadd.f32 %v2544, 1.0
    %v2546 = vrcp.pop %v2545
    %v2547 = vmul.f32 %v2545, %v2546
    %v2548 = vsub.f32 1.0, %v2547
    %v2549 = vmul.f32 %v2546, %v2548
    %v2550 = vadd.f32 %v2546, %v2549
    %vm2551 = vweird.f32 %v2545
    %vm2552 = vweird.f32 %v2546
    %vm2553 = vmor %vm2551, %vm2552
    %v2554 = vsel %vm2553, %v2546, %v2550
    %v2555 = vand.u32 2147483647, %v2545
    %vm2556 = vcmp.eq.f32.partialorder %v2555, 8.507059e+37
    %v2557 = vand.u32 %v2545, 2147483648
    %v2558 = vor.u32 1.1754944e-38, %v2557
    %v2559 = vsel %vm2556, %v2558, %v2554
    %v2560 = vmul.f32 1.0, %v2559
    %v2562 = vsel %vm929, %v2541, 0
    %2564 = vmatpush.msra.mxu0 0.0
    %2565 = vmatpush.msra.mxu0 0.0
    %2566 = vmatpush.msra.mxu0 0.0
    %2567 = vmatpush.msra.mxu0 0.0
    %2568 = vmatpush.msra.mxu0 0.0
    %2569 = vmatpush.msra.mxu0 0.0
    %2570 = vmatpush.msra.mxu0 0.0
    %2571 = vmatpush.msra.mxu0 0.0
    %2572 = vmatpush.msra.mxu0 0.0
    %2573 = vmatpush.msra.mxu0 0.0
    %2574 = vmatpush.msra.mxu0 0.0
    %2575 = vmatpush.msra.mxu0 0.0
    %2576 = vmatpush.msra.mxu0 %v953
    %2577 = vmatpush.msra.mxu0 %v952
    %2578 = vmatpush.msra.mxu0 %v951
    %2579 = vmatpush.msra.mxu0 %v950
    %2580 = vmatmul.f32.gmra.mxu0 %v2562
    %v2581 = vpop.f32.mrf.mxu0
    %v2582 = vadd.f32 %v1064, %v2581
    %2583 = vdwg.mxu0
    %2585 = vrot.lane.b32.xlu0 %v2582, 124
    %v2586 = vpop.permute.xlu0 %2585
    %v2588 = vsub.f32 %v2582, %v2586
    %2590 = vrot.lane.b32.xlu0 %v2560, 96
    %v2591 = vpop.permute.xlu0 %2590
    %v2593 = vrcp.pop %v2591
    %v2594 = vmul.f32 %v2591, %v2593
    %v2595 = vsub.f32 1.0, %v2594
    %v2596 = vmul.f32 %v2593, %v2595
    %v2597 = vadd.f32 %v2593, %v2596
    %vm2598 = vweird.f32 %v2591
    %vm2599 = vweird.f32 %v2593
    %vm2600 = vmor %vm2598, %vm2599
    %v2601 = vsel %vm2600, %v2593, %v2597
    %v2602 = vand.u32 2147483647, %v2591
    %vm2603 = vcmp.eq.f32.partialorder %v2602, 8.507059e+37
    %v2604 = vand.u32 %v2591, 2147483648
    %v2605 = vor.u32 1.1754944e-38, %v2604
    %v2606 = vsel %vm2603, %v2605, %v2601
    %v2607 = vmul.f32 %v2588, %v2606
    %v2608 = vmul.f32 %v2607, %v2607
    %v2609 = vmul.f32 %v2443, %v2608
    %v2610 = vadd.f32 %v2445, %v2609
    %v2611 = vmul.f32 %v2582, %v2446
    %v2612 = vadd.f32 %v2459, %v2611
    %v2613 = vld [vmem:[%s2 + $0x48] sm:$0xff]
    %2615 = vrot.lane.b32.xlu0 %v2613, 32
    %v2616 = vpop.permute.xlu0 %2615
    %v2618 = vmul.f32 %v2560, %v2616
    %2620 = vrot.lane.b32.xlu0 %v2618, 96
    %v2621 = vpop.permute.xlu0 %2620
    %v2623 = vadd.f32 %v2612, %v2621
    %s2624 = sld [smem:[#allocation2 + $0x5]]
    %v2626 = vsel %vm72, %v2623, 0
    %2628 = vmatpush.msra.mxu0 0.0
    %2629 = vmatpush.msra.mxu0 0.0
    %2630 = vmatpush.msra.mxu0 0.0
    %2631 = vmatpush.msra.mxu0 0.0
    %2632 = vmatpush.msra.mxu0 0.0
    %2633 = vmatpush.msra.mxu0 0.0
    %2634 = vmatpush.msra.mxu0 0.0
    %2635 = vmatpush.msra.mxu0 0.0
    %2636 = vmatpush.msra.mxu0 0.0
    %2637 = vmatpush.msra.mxu0 0.0
    %2638 = vmatpush.msra.mxu0 0.0
    %2639 = vmatpush.msra.mxu0 0.0
    %2640 = vmatpush.msra.mxu0 0.0
    %2641 = vmatpush.msra.mxu0 0.0
    %2642 = vmatpush.msra.mxu0 0.0
    %2643 = vmatpush.msra.mxu0 %v959
    %2644 = vmatmul.f32.gmra.mxu0 %v2626
    %v2645 = vpop.f32.mrf.mxu0
    %v2646 = vadd.f32 %v931, %v2645
    %2647 = vdwg.mxu0
    %v2648 = vmax.f32 %v2646, 0.0
    %vm2649 = vcmp.ne.f32.partialorder %v2646, %v2646
    %v2650 = vadd.f32 %v2646, 0.0
    %v2651 = vand.u32 2147483647, %v2646
    %v2652 = vsub.f32 0.0, %v2651
    %v2653 = vmul.f32 %v2652, 1.442695
    %v2654 = vpow.pop %v2653
    %v2655 = vadd.f32 %v2654, 1.0
    %v2656 = vlog2.pop %v2655
    %v2657 = vmul.f32 %v2656, 0.6931472
    %v2658 = vmul.f32 -0.5, %v2654
    %v2659 = vadd.f32 %v2658, 1.0
    %v2660 = vmul.f32 %v2659, %v2654
    %v2661 = vand.u32 2147483647, %v2654
    %vm2662 = vcmp.lt.f32.partialorder %v2661, 0.0004427343
    %v2663 = vsel %vm2662, %v2660, %v2657
    %v2664 = vadd.f32 %v2648, %v2663
    %v2665 = vsel %vm2649, %v2650, %v2664
    %v2667 = vsel %vm1002, %v2665, 0
    %2669 = vmatpush.msra.mxu0 0.0
    %2670 = vmatpush.msra.mxu0 0.0
    %2671 = vmatpush.msra.mxu0 0.0
    %2672 = vmatpush.msra.mxu0 0.0
    %2673 = vmatpush.msra.mxu0 %v949
    %2674 = vmatpush.msra.mxu0 %v948
    %2675 = vmatpush.msra.mxu0 %v947
    %2676 = vmatpush.msra.mxu0 %v946
    %2677 = vmatpush.msra.mxu0 %v945
    %2678 = vmatpush.msra.mxu0 %v944
    %2679 = vmatpush.msra.mxu0 %v943
    %2680 = vmatpush.msra.mxu0 %v942
    %2681 = vmatpush.msra.mxu0 %v941
    %2682 = vmatpush.msra.mxu0 %v940
    %2683 = vmatpush.msra.mxu0 %v939
    %2684 = vmatpush.msra.mxu0 %v938
    %2685 = vmatmul.f32.gmra.mxu0 %v2667
    %v2686 = vpop.f32.mrf.mxu0
    %v2687 = vadd.f32 %v1000, %v2686
    %2688 = vdwg.mxu0
    %v2689 = vmax.f32 %v2687, 0.0
    %vm2690 = vcmp.ne.f32.partialorder %v2687, %v2687
    %v2691 = vadd.f32 %v2687, 0.0
    %v2692 = vand.u32 2147483647, %v2687
    %v2693 = vsub.f32 0.0, %v2692
    %v2694 = vmul.f32 %v2693, 1.442695
    %v2695 = vpow.pop %v2694
    %v2696 = vadd.f32 %v2695, 1.0
    %v2697 = vlog2.pop %v2696
    %v2698 = vmul.f32 %v2697, 0.6931472
    %v2699 = vmul.f32 -0.5, %v2695
    %v2700 = vadd.f32 %v2699, 1.0
    %v2701 = vmul.f32 %v2700, %v2695
    %v2702 = vand.u32 2147483647, %v2695
    %vm2703 = vcmp.lt.f32.partialorder %v2702, 0.0004427343
    %v2704 = vsel %vm2703, %v2701, %v2698
    %v2705 = vadd.f32 %v2689, %v2704
    %v2706 = vsel %vm2690, %v2691, %v2705
    %v2707 = vxor.u32 %v2687, 2147483648
    %v2708 = vmul.f32 %v2707, 1.442695
    %v2709 = vpow.pop %v2708
    %v2710 = vadd.f32 %v2709, 1.0
    %v2711 = vrcp.pop %v2710
    %v2712 = vmul.f32 %v2710, %v2711
    %v2713 = vsub.f32 1.0, %v2712
    %v2714 = vmul.f32 %v2711, %v2713
    %v2715 = vadd.f32 %v2711, %v2714
    %vm2716 = vweird.f32 %v2710
    %vm2717 = vweird.f32 %v2711
    %vm2718 = vmor %vm2716, %vm2717
    %v2719 = vsel %vm2718, %v2711, %v2715
    %v2720 = vand.u32 2147483647, %v2710
    %vm2721 = vcmp.eq.f32.partialorder %v2720, 8.507059e+37
    %v2722 = vand.u32 %v2710, 2147483648
    %v2723 = vor.u32 1.1754944e-38, %v2722
    %v2724 = vsel %vm2721, %v2723, %v2719
    %v2725 = vmul.f32 1.0, %v2724
    %v2727 = vsel %vm929, %v2706, 0
    %2729 = vmatpush.msra.mxu0 0.0
    %2730 = vmatpush.msra.mxu0 0.0
    %2731 = vmatpush.msra.mxu0 0.0
    %2732 = vmatpush.msra.mxu0 0.0
    %2733 = vmatpush.msra.mxu0 0.0
    %2734 = vmatpush.msra.mxu0 0.0
    %2735 = vmatpush.msra.mxu0 0.0
    %2736 = vmatpush.msra.mxu0 0.0
    %2737 = vmatpush.msra.mxu0 0.0
    %2738 = vmatpush.msra.mxu0 0.0
    %2739 = vmatpush.msra.mxu0 0.0
    %2740 = vmatpush.msra.mxu0 0.0
    %2741 = vmatpush.msra.mxu0 %v953
    %2742 = vmatpush.msra.mxu0 %v952
    %2743 = vmatpush.msra.mxu0 %v951
    %2744 = vmatpush.msra.mxu0 %v950
    %2745 = vmatmul.f32.gmra.mxu0 %v2727
    %v2746 = vpop.f32.mrf.mxu0
    %v2747 = vadd.f32 %v1064, %v2746
    %2748 = vdwg.mxu0
    %2750 = vrot.lane.b32.xlu0 %v2747, 124
    %v2751 = vpop.permute.xlu0 %2750
    %v2753 = vsub.f32 %v2747, %v2751
    %2755 = vrot.lane.b32.xlu0 %v2725, 96
    %v2756 = vpop.permute.xlu0 %2755
    %v2758 = vrcp.pop %v2756
    %v2759 = vmul.f32 %v2756, %v2758
    %v2760 = vsub.f32 1.0, %v2759
    %v2761 = vmul.f32 %v2758, %v2760
    %v2762 = vadd.f32 %v2758, %v2761
    %vm2763 = vweird.f32 %v2756
    %vm2764 = vweird.f32 %v2758
    %vm2765 = vmor %vm2763, %vm2764
    %v2766 = vsel %vm2765, %v2758, %v2762
    %v2767 = vand.u32 2147483647, %v2756
    %vm2768 = vcmp.eq.f32.partialorder %v2767, 8.507059e+37
    %v2769 = vand.u32 %v2756, 2147483648
    %v2770 = vor.u32 1.1754944e-38, %v2769
    %v2771 = vsel %vm2768, %v2770, %v2766
    %v2772 = vmul.f32 %v2753, %v2771
    %s2773 = smul.f32 %s2624, 0.5
    %v2774 = vmul.f32 %v2772, %v2772
    %v2775 = vstv %s2773
    %v2776 = vmul.f32 %v2775, %v2774
    %v2777 = vadd.f32 %v2610, %v2776
    %v2778 = vstv %s2624
    %v2779 = vmul.f32 %v2747, %v2778
    %v2780 = vadd.f32 %v2623, %v2779
    %v2781 = vld [vmem:[%s2 + $0x50] sm:$0xff]
    %2783 = vrot.lane.b32.xlu0 %v2781, 32
    %v2784 = vpop.permute.xlu0 %2783
    %v2786 = vmul.f32 %v2725, %v2784
    %2788 = vrot.lane.b32.xlu0 %v2786, 96
    %v2789 = vpop.permute.xlu0 %2788
    %v2791 = vadd.f32 %v2780, %v2789
    %v2793 = vsel %vm72, %v2791, 0
    %2795 = vmatpush.msra.mxu0 0.0
    %2796 = vmatpush.msra.mxu0 0.0
    %2797 = vmatpush.msra.mxu0 0.0
    %2798 = vmatpush.msra.mxu0 0.0
    %2799 = vmatpush.msra.mxu0 0.0
    %2800 = vmatpush.msra.mxu0 0.0
    %2801 = vmatpush.msra.mxu0 0.0
    %2802 = vmatpush.msra.mxu0 0.0
    %2803 = vmatpush.msra.mxu0 0.0
    %2804 = vmatpush.msra.mxu0 0.0
    %2805 = vmatpush.msra.mxu0 0.0
    %2806 = vmatpush.msra.mxu0 0.0
    %2807 = vmatpush.msra.mxu0 0.0
    %2808 = vmatpush.msra.mxu0 0.0
    %2809 = vmatpush.msra.mxu0 0.0
    %2810 = vmatpush.msra.mxu0 %v959
    %2811 = vmatmul.f32.gmra.mxu0 %v2793
    %v2812 = vpop.f32.mrf.mxu0
    %v2813 = vadd.f32 %v931, %v2812
    %2814 = vdwg.mxu0
    %v2815 = vmax.f32 %v2813, 0.0
    %vm2816 = vcmp.ne.f32.partialorder %v2813, %v2813
    %v2817 = vadd.f32 %v2813, 0.0
    %v2818 = vand.u32 2147483647, %v2813
    %v2819 = vsub.f32 0.0, %v2818
    %v2820 = vmul.f32 %v2819, 1.442695
    %v2821 = vpow.pop %v2820
    %v2822 = vadd.f32 %v2821, 1.0
    %v2823 = vlog2.pop %v2822
    %v2824 = vmul.f32 %v2823, 0.6931472
    %v2825 = vmul.f32 -0.5, %v2821
    %v2826 = vadd.f32 %v2825, 1.0
    %v2827 = vmul.f32 %v2826, %v2821
    %v2828 = vand.u32 2147483647, %v2821
    %vm2829 = vcmp.lt.f32.partialorder %v2828, 0.0004427343
    %v2830 = vsel %vm2829, %v2827, %v2824
    %v2831 = vadd.f32 %v2815, %v2830
    %v2832 = vsel %vm2816, %v2817, %v2831
    %v2834 = vsel %vm1002, %v2832, 0
    %2836 = vmatpush.msra.mxu0 0.0
    %2837 = vmatpush.msra.mxu0 0.0
    %2838 = vmatpush.msra.mxu0 0.0
    %2839 = vmatpush.msra.mxu0 0.0
    %2840 = vmatpush.msra.mxu0 %v949
    %2841 = vmatpush.msra.mxu0 %v948
    %2842 = vmatpush.msra.mxu0 %v947
    %2843 = vmatpush.msra.mxu0 %v946
    %2844 = vmatpush.msra.mxu0 %v945
    %2845 = vmatpush.msra.mxu0 %v944
    %2846 = vmatpush.msra.mxu0 %v943
    %2847 = vmatpush.msra.mxu0 %v942
    %2848 = vmatpush.msra.mxu0 %v941
    %2849 = vmatpush.msra.mxu0 %v940
    %2850 = vmatpush.msra.mxu0 %v939
    %2851 = vmatpush.msra.mxu0 %v938
    %2852 = vmatmul.f32.gmra.mxu0 %v2834
    %v2853 = vpop.f32.mrf.mxu0
    %v2854 = vadd.f32 %v1000, %v2853
    %2855 = vdwg.mxu0
    %v2856 = vmax.f32 %v2854, 0.0
    %vm2857 = vcmp.ne.f32.partialorder %v2854, %v2854
    %v2858 = vadd.f32 %v2854, 0.0
    %v2859 = vand.u32 2147483647, %v2854
    %v2860 = vsub.f32 0.0, %v2859
    %v2861 = vmul.f32 %v2860, 1.442695
    %v2862 = vpow.pop %v2861
    %v2863 = vadd.f32 %v2862, 1.0
    %v2864 = vlog2.pop %v2863
    %v2865 = vmul.f32 %v2864, 0.6931472
    %v2866 = vmul.f32 -0.5, %v2862
    %v2867 = vadd.f32 %v2866, 1.0
    %v2868 = vmul.f32 %v2867, %v2862
    %v2869 = vand.u32 2147483647, %v2862
    %vm2870 = vcmp.lt.f32.partialorder %v2869, 0.0004427343
    %v2871 = vsel %vm2870, %v2868, %v2865
    %v2872 = vadd.f32 %v2856, %v2871
    %v2873 = vsel %vm2857, %v2858, %v2872
    %v2874 = vxor.u32 %v2854, 2147483648
    %v2875 = vmul.f32 %v2874, 1.442695
    %v2876 = vpow.pop %v2875
    %v2877 = vadd.f32 %v2876, 1.0
    %v2878 = vrcp.pop %v2877
    %v2879 = vmul.f32 %v2877, %v2878
    %v2880 = vsub.f32 1.0, %v2879
    %v2881 = vmul.f32 %v2878, %v2880
    %v2882 = vadd.f32 %v2878, %v2881
    %vm2883 = vweird.f32 %v2877
    %vm2884 = vweird.f32 %v2878
    %vm2885 = vmor %vm2883, %vm2884
    %v2886 = vsel %vm2885, %v2878, %v2882
    %v2887 = vand.u32 2147483647, %v2877
    %vm2888 = vcmp.eq.f32.partialorder %v2887, 8.507059e+37
    %v2889 = vand.u32 %v2877, 2147483648
    %v2890 = vor.u32 1.1754944e-38, %v2889
    %v2891 = vsel %vm2888, %v2890, %v2886
    %v2892 = vmul.f32 1.0, %v2891
    %v2894 = vsel %vm929, %v2873, 0
    %2896 = vmatpush.msra.mxu0 0.0
    %2897 = vmatpush.msra.mxu0 0.0
    %2898 = vmatpush.msra.mxu0 0.0
    %2899 = vmatpush.msra.mxu0 0.0
    %2900 = vmatpush.msra.mxu0 0.0
    %2901 = vmatpush.msra.mxu0 0.0
    %2902 = vmatpush.msra.mxu0 0.0
    %2903 = vmatpush.msra.mxu0 0.0
    %2904 = vmatpush.msra.mxu0 0.0
    %2905 = vmatpush.msra.mxu0 0.0
    %2906 = vmatpush.msra.mxu0 0.0
    %2907 = vmatpush.msra.mxu0 0.0
    %2908 = vmatpush.msra.mxu0 %v953
    %2909 = vmatpush.msra.mxu0 %v952
    %2910 = vmatpush.msra.mxu0 %v951
    %2911 = vmatpush.msra.mxu0 %v950
    %2912 = vmatmul.f32.gmra.mxu0 %v2894
    %v2913 = vpop.f32.mrf.mxu0
    %v2914 = vadd.f32 %v1064, %v2913
    %2915 = vdwg.mxu0
    %2917 = vrot.lane.b32.xlu0 %v2914, 124
    %v2918 = vpop.permute.xlu0 %2917
    %v2920 = vsub.f32 %v2914, %v2918
    %2922 = vrot.lane.b32.xlu0 %v2892, 96
    %v2923 = vpop.permute.xlu0 %2922
    %v2925 = vrcp.pop %v2923
    %v2926 = vmul.f32 %v2923, %v2925
    %v2927 = vsub.f32 1.0, %v2926
    %v2928 = vmul.f32 %v2925, %v2927
    %v2929 = vadd.f32 %v2925, %v2928
    %vm2930 = vweird.f32 %v2923
    %vm2931 = vweird.f32 %v2925
    %vm2932 = vmor %vm2930, %vm2931
    %v2933 = vsel %vm2932, %v2925, %v2929
    %v2934 = vand.u32 2147483647, %v2923
    %vm2935 = vcmp.eq.f32.partialorder %v2934, 8.507059e+37
    %v2936 = vand.u32 %v2923, 2147483648
    %v2937 = vor.u32 1.1754944e-38, %v2936
    %v2938 = vsel %vm2935, %v2937, %v2933
    %v2939 = vmul.f32 %v2920, %v2938
    %v2940 = vmul.f32 %v2939, %v2939
    %v2941 = vmul.f32 %v2775, %v2940
    %v2942 = vadd.f32 %v2777, %v2941
    %v2943 = vmul.f32 %v2914, %v2778
    %v2944 = vadd.f32 %v2791, %v2943
    %v2945 = vld [vmem:[%s2 + $0x58] sm:$0xff]
    %2947 = vrot.lane.b32.xlu0 %v2945, 32
    %v2948 = vpop.permute.xlu0 %2947
    %v2950 = vmul.f32 %v2892, %v2948
    %2952 = vrot.lane.b32.xlu0 %v2950, 96
    %v2953 = vpop.permute.xlu0 %2952
    %v2955 = vadd.f32 %v2944, %v2953
    %s2956 = sld [smem:[#allocation2 + $0x6]]
    %v2958 = vsel %vm72, %v2955, 0
    %2960 = vmatpush.msra.mxu0 0.0
    %2961 = vmatpush.msra.mxu0 0.0
    %2962 = vmatpush.msra.mxu0 0.0
    %2963 = vmatpush.msra.mxu0 0.0
    %2964 = vmatpush.msra.mxu0 0.0
    %2965 = vmatpush.msra.mxu0 0.0
    %2966 = vmatpush.msra.mxu0 0.0
    %2967 = vmatpush.msra.mxu0 0.0
    %2968 = vmatpush.msra.mxu0 0.0
    %2969 = vmatpush.msra.mxu0 0.0
    %2970 = vmatpush.msra.mxu0 0.0
    %2971 = vmatpush.msra.mxu0 0.0
    %2972 = vmatpush.msra.mxu0 0.0
    %2973 = vmatpush.msra.mxu0 0.0
    %2974 = vmatpush.msra.mxu0 0.0
    %2975 = vmatpush.msra.mxu0 %v959
    %2976 = vmatmul.f32.gmra.mxu0 %v2958
    %v2977 = vpop.f32.mrf.mxu0
    %v2978 = vadd.f32 %v930, %v2977
    %2979 = vdwg.mxu0
    %v2980 = vmax.f32 %v2978, 0.0
    %vm2981 = vcmp.ne.f32.partialorder %v2978, %v2978
    %v2982 = vadd.f32 %v2978, 0.0
    %v2983 = vand.u32 2147483647, %v2978
    %v2984 = vsub.f32 0.0, %v2983
    %v2985 = vmul.f32 %v2984, 1.442695
    %v2986 = vpow.pop %v2985
    %v2987 = vadd.f32 %v2986, 1.0
    %v2988 = vlog2.pop %v2987
    %v2989 = vmul.f32 %v2988, 0.6931472
    %v2990 = vmul.f32 -0.5, %v2986
    %v2991 = vadd.f32 %v2990, 1.0
    %v2992 = vmul.f32 %v2991, %v2986
    %v2993 = vand.u32 2147483647, %v2986
    %vm2994 = vcmp.lt.f32.partialorder %v2993, 0.0004427343
    %v2995 = vsel %vm2994, %v2992, %v2989
    %v2996 = vadd.f32 %v2980, %v2995
    %v2997 = vsel %vm2981, %v2982, %v2996
    %v2999 = vsel %vm1002, %v2997, 0
    %3001 = vmatpush.msra.mxu0 0.0
    %3002 = vmatpush.msra.mxu0 0.0
    %3003 = vmatpush.msra.mxu0 0.0
    %3004 = vmatpush.msra.mxu0 0.0
    %3005 = vmatpush.msra.mxu0 %v949
    %3006 = vmatpush.msra.mxu0 %v948
    %3007 = vmatpush.msra.mxu0 %v947
    %3008 = vmatpush.msra.mxu0 %v946
    %3009 = vmatpush.msra.mxu0 %v945
    %3010 = vmatpush.msra.mxu0 %v944
    %3011 = vmatpush.msra.mxu0 %v943
    %3012 = vmatpush.msra.mxu0 %v942
    %3013 = vmatpush.msra.mxu0 %v941
    %3014 = vmatpush.msra.mxu0 %v940
    %3015 = vmatpush.msra.mxu0 %v939
    %3016 = vmatpush.msra.mxu0 %v938
    %3017 = vmatmul.f32.gmra.mxu0 %v2999
    %v3018 = vpop.f32.mrf.mxu0
    %v3019 = vadd.f32 %v1000, %v3018
    %3020 = vdwg.mxu0
    %v3021 = vmax.f32 %v3019, 0.0
    %vm3022 = vcmp.ne.f32.partialorder %v3019, %v3019
    %v3023 = vadd.f32 %v3019, 0.0
    %v3024 = vand.u32 2147483647, %v3019
    %v3025 = vsub.f32 0.0, %v3024
    %v3026 = vmul.f32 %v3025, 1.442695
    %v3027 = vpow.pop %v3026
    %v3028 = vadd.f32 %v3027, 1.0
    %v3029 = vlog2.pop %v3028
    %v3030 = vmul.f32 %v3029, 0.6931472
    %v3031 = vmul.f32 -0.5, %v3027
    %v3032 = vadd.f32 %v3031, 1.0
    %v3033 = vmul.f32 %v3032, %v3027
    %v3034 = vand.u32 2147483647, %v3027
    %vm3035 = vcmp.lt.f32.partialorder %v3034, 0.0004427343
    %v3036 = vsel %vm3035, %v3033, %v3030
    %v3037 = vadd.f32 %v3021, %v3036
    %v3038 = vsel %vm3022, %v3023, %v3037
    %v3039 = vxor.u32 %v3019, 2147483648
    %v3040 = vmul.f32 %v3039, 1.442695
    %v3041 = vpow.pop %v3040
    %v3042 = vadd.f32 %v3041, 1.0
    %v3043 = vrcp.pop %v3042
    %v3044 = vmul.f32 %v3042, %v3043
    %v3045 = vsub.f32 1.0, %v3044
    %v3046 = vmul.f32 %v3043, %v3045
    %v3047 = vadd.f32 %v3043, %v3046
    %vm3048 = vweird.f32 %v3042
    %vm3049 = vweird.f32 %v3043
    %vm3050 = vmor %vm3048, %vm3049
    %v3051 = vsel %vm3050, %v3043, %v3047
    %v3052 = vand.u32 2147483647, %v3042
    %vm3053 = vcmp.eq.f32.partialorder %v3052, 8.507059e+37
    %v3054 = vand.u32 %v3042, 2147483648
    %v3055 = vor.u32 1.1754944e-38, %v3054
    %v3056 = vsel %vm3053, %v3055, %v3051
    %v3057 = vmul.f32 1.0, %v3056
    %v3059 = vsel %vm929, %v3038, 0
    %3061 = vmatpush.msra.mxu0 0.0
    %3062 = vmatpush.msra.mxu0 0.0
    %3063 = vmatpush.msra.mxu0 0.0
    %3064 = vmatpush.msra.mxu0 0.0
    %3065 = vmatpush.msra.mxu0 0.0
    %3066 = vmatpush.msra.mxu0 0.0
    %3067 = vmatpush.msra.mxu0 0.0
    %3068 = vmatpush.msra.mxu0 0.0
    %3069 = vmatpush.msra.mxu0 0.0
    %3070 = vmatpush.msra.mxu0 0.0
    %3071 = vmatpush.msra.mxu0 0.0
    %3072 = vmatpush.msra.mxu0 0.0
    %3073 = vmatpush.msra.mxu0 %v953
    %3074 = vmatpush.msra.mxu0 %v952
    %3075 = vmatpush.msra.mxu0 %v951
    %3076 = vmatpush.msra.mxu0 %v950
    %3077 = vmatmul.f32.gmra.mxu0 %v3059
    %v3078 = vpop.f32.mrf.mxu0
    %v3079 = vadd.f32 %v1064, %v3078
    %3080 = vdwg.mxu0
    %3082 = vrot.lane.b32.xlu0 %v3079, 124
    %v3083 = vpop.permute.xlu0 %3082
    %v3085 = vsub.f32 %v3079, %v3083
    %3087 = vrot.lane.b32.xlu0 %v3057, 96
    %v3088 = vpop.permute.xlu0 %3087
    %v3090 = vrcp.pop %v3088
    %v3091 = vmul.f32 %v3088, %v3090
    %v3092 = vsub.f32 1.0, %v3091
    %v3093 = vmul.f32 %v3090, %v3092
    %v3094 = vadd.f32 %v3090, %v3093
    %vm3095 = vweird.f32 %v3088
    %vm3096 = vweird.f32 %v3090
    %vm3097 = vmor %vm3095, %vm3096
    %v3098 = vsel %vm3097, %v3090, %v3094
    %v3099 = vand.u32 2147483647, %v3088
    %vm3100 = vcmp.eq.f32.partialorder %v3099, 8.507059e+37
    %v3101 = vand.u32 %v3088, 2147483648
    %v3102 = vor.u32 1.1754944e-38, %v3101
    %v3103 = vsel %vm3100, %v3102, %v3098
    %v3104 = vmul.f32 %v3085, %v3103
    %s3105 = smul.f32 %s2956, 0.5
    %v3106 = vmul.f32 %v3104, %v3104
    %v3107 = vstv %s3105
    %v3108 = vmul.f32 %v3107, %v3106
    %v3109 = vadd.f32 %v2942, %v3108
    %v3110 = vstv %s2956
    %v3111 = vmul.f32 %v3079, %v3110
    %v3112 = vadd.f32 %v2955, %v3111
    %v3113 = vld [vmem:[%s2 + $0x60] sm:$0xff]
    %3115 = vrot.lane.b32.xlu0 %v3113, 32
    %v3116 = vpop.permute.xlu0 %3115
    %v3118 = vmul.f32 %v3057, %v3116
    %3120 = vrot.lane.b32.xlu0 %v3118, 96
    %v3121 = vpop.permute.xlu0 %3120
    %v3123 = vadd.f32 %v3112, %v3121
    %v3125 = vsel %vm72, %v3123, 0
    %3127 = vmatpush.msra.mxu0 0.0
    %3128 = vmatpush.msra.mxu0 0.0
    %3129 = vmatpush.msra.mxu0 0.0
    %3130 = vmatpush.msra.mxu0 0.0
    %3131 = vmatpush.msra.mxu0 0.0
    %3132 = vmatpush.msra.mxu0 0.0
    %3133 = vmatpush.msra.mxu0 0.0
    %3134 = vmatpush.msra.mxu0 0.0
    %3135 = vmatpush.msra.mxu0 0.0
    %3136 = vmatpush.msra.mxu0 0.0
    %3137 = vmatpush.msra.mxu0 0.0
    %3138 = vmatpush.msra.mxu0 0.0
    %3139 = vmatpush.msra.mxu0 0.0
    %3140 = vmatpush.msra.mxu0 0.0
    %3141 = vmatpush.msra.mxu0 0.0
    %3142 = vmatpush.msra.mxu0 %v959
    %3143 = vmatmul.f32.gmra.mxu0 %v3125
    %v3144 = vpop.f32.mrf.mxu0
    %v3145 = vadd.f32 %v930, %v3144
    %3146 = vdwg.mxu0
    %v3147 = vmax.f32 %v3145, 0.0
    %vm3148 = vcmp.ne.f32.partialorder %v3145, %v3145
    %v3149 = vadd.f32 %v3145, 0.0
    %v3150 = vand.u32 2147483647, %v3145
    %v3151 = vsub.f32 0.0, %v3150
    %v3152 = vmul.f32 %v3151, 1.442695
    %v3153 = vpow.pop %v3152
    %v3154 = vadd.f32 %v3153, 1.0
    %v3155 = vlog2.pop %v3154
    %v3156 = vmul.f32 %v3155, 0.6931472
    %v3157 = vmul.f32 -0.5, %v3153
    %v3158 = vadd.f32 %v3157, 1.0
    %v3159 = vmul.f32 %v3158, %v3153
    %v3160 = vand.u32 2147483647, %v3153
    %vm3161 = vcmp.lt.f32.partialorder %v3160, 0.0004427343
    %v3162 = vsel %vm3161, %v3159, %v3156
    %v3163 = vadd.f32 %v3147, %v3162
    %v3164 = vsel %vm3148, %v3149, %v3163
    %v3166 = vsel %vm1002, %v3164, 0
    %3168 = vmatpush.msra.mxu0 0.0
    %3169 = vmatpush.msra.mxu0 0.0
    %3170 = vmatpush.msra.mxu0 0.0
    %3171 = vmatpush.msra.mxu0 0.0
    %3172 = vmatpush.msra.mxu0 %v949
    %3173 = vmatpush.msra.mxu0 %v948
    %3174 = vmatpush.msra.mxu0 %v947
    %3175 = vmatpush.msra.mxu0 %v946
    %3176 = vmatpush.msra.mxu0 %v945
    %3177 = vmatpush.msra.mxu0 %v944
    %3178 = vmatpush.msra.mxu0 %v943
    %3179 = vmatpush.msra.mxu0 %v942
    %3180 = vmatpush.msra.mxu0 %v941
    %3181 = vmatpush.msra.mxu0 %v940
    %3182 = vmatpush.msra.mxu0 %v939
    %3183 = vmatpush.msra.mxu0 %v938
    %3184 = vmatmul.f32.gmra.mxu0 %v3166
    %v3185 = vpop.f32.mrf.mxu0
    %v3186 = vadd.f32 %v1000, %v3185
    %3187 = vdwg.mxu0
    %v3188 = vmax.f32 %v3186, 0.0
    %vm3189 = vcmp.ne.f32.partialorder %v3186, %v3186
    %v3190 = vadd.f32 %v3186, 0.0
    %v3191 = vand.u32 2147483647, %v3186
    %v3192 = vsub.f32 0.0, %v3191
    %v3193 = vmul.f32 %v3192, 1.442695
    %v3194 = vpow.pop %v3193
    %v3195 = vadd.f32 %v3194, 1.0
    %v3196 = vlog2.pop %v3195
    %v3197 = vmul.f32 %v3196, 0.6931472
    %v3198 = vmul.f32 -0.5, %v3194
    %v3199 = vadd.f32 %v3198, 1.0
    %v3200 = vmul.f32 %v3199, %v3194
    %v3201 = vand.u32 2147483647, %v3194
    %vm3202 = vcmp.lt.f32.partialorder %v3201, 0.0004427343
    %v3203 = vsel %vm3202, %v3200, %v3197
    %v3204 = vadd.f32 %v3188, %v3203
    %v3205 = vsel %vm3189, %v3190, %v3204
    %v3206 = vxor.u32 %v3186, 2147483648
    %v3207 = vmul.f32 %v3206, 1.442695
    %v3208 = vpow.pop %v3207
    %v3209 = vadd.f32 %v3208, 1.0
    %v3210 = vrcp.pop %v3209
    %v3211 = vmul.f32 %v3209, %v3210
    %v3212 = vsub.f32 1.0, %v3211
    %v3213 = vmul.f32 %v3210, %v3212
    %v3214 = vadd.f32 %v3210, %v3213
    %vm3215 = vweird.f32 %v3209
    %vm3216 = vweird.f32 %v3210
    %vm3217 = vmor %vm3215, %vm3216
    %v3218 = vsel %vm3217, %v3210, %v3214
    %v3219 = vand.u32 2147483647, %v3209
    %vm3220 = vcmp.eq.f32.partialorder %v3219, 8.507059e+37
    %v3221 = vand.u32 %v3209, 2147483648
    %v3222 = vor.u32 1.1754944e-38, %v3221
    %v3223 = vsel %vm3220, %v3222, %v3218
    %v3224 = vmul.f32 1.0, %v3223
    %v3226 = vsel %vm929, %v3205, 0
    %3228 = vmatpush.msra.mxu0 0.0
    %3229 = vmatpush.msra.mxu0 0.0
    %3230 = vmatpush.msra.mxu0 0.0
    %3231 = vmatpush.msra.mxu0 0.0
    %3232 = vmatpush.msra.mxu0 0.0
    %3233 = vmatpush.msra.mxu0 0.0
    %3234 = vmatpush.msra.mxu0 0.0
    %3235 = vmatpush.msra.mxu0 0.0
    %3236 = vmatpush.msra.mxu0 0.0
    %3237 = vmatpush.msra.mxu0 0.0
    %3238 = vmatpush.msra.mxu0 0.0
    %3239 = vmatpush.msra.mxu0 0.0
    %3240 = vmatpush.msra.mxu0 %v953
    %3241 = vmatpush.msra.mxu0 %v952
    %3242 = vmatpush.msra.mxu0 %v951
    %3243 = vmatpush.msra.mxu0 %v950
    %3244 = vmatmul.f32.gmra.mxu0 %v3226
    %v3245 = vpop.f32.mrf.mxu0
    %v3246 = vadd.f32 %v1064, %v3245
    %3247 = vdwg.mxu0
    %3249 = vrot.lane.b32.xlu0 %v3246, 124
    %v3250 = vpop.permute.xlu0 %3249
    %v3252 = vsub.f32 %v3246, %v3250
    %3254 = vrot.lane.b32.xlu0 %v3224, 96
    %v3255 = vpop.permute.xlu0 %3254
    %v3257 = vrcp.pop %v3255
    %v3258 = vmul.f32 %v3255, %v3257
    %v3259 = vsub.f32 1.0, %v3258
    %v3260 = vmul.f32 %v3257, %v3259
    %v3261 = vadd.f32 %v3257, %v3260
    %vm3262 = vweird.f32 %v3255
    %vm3263 = vweird.f32 %v3257
    %vm3264 = vmor %vm3262, %vm3263
    %v3265 = vsel %vm3264, %v3257, %v3261
    %v3266 = vand.u32 2147483647, %v3255
    %vm3267 = vcmp.eq.f32.partialorder %v3266, 8.507059e+37
    %v3268 = vand.u32 %v3255, 2147483648
    %v3269 = vor.u32 1.1754944e-38, %v3268
    %v3270 = vsel %vm3267, %v3269, %v3265
    %v3271 = vmul.f32 %v3252, %v3270
    %v3272 = vmul.f32 %v3271, %v3271
    %v3273 = vmul.f32 %v3107, %v3272
    %v3274 = vadd.f32 %v3109, %v3273
    %v3275 = vmul.f32 %v3246, %v3110
    %v3276 = vadd.f32 %v3123, %v3275
    %v3277 = vld [vmem:[%s2 + $0x68] sm:$0xff]
    %3279 = vrot.lane.b32.xlu0 %v3277, 32
    %v3280 = vpop.permute.xlu0 %3279
    %v3282 = vmul.f32 %v3224, %v3280
    %3284 = vrot.lane.b32.xlu0 %v3282, 96
    %v3285 = vpop.permute.xlu0 %3284
    %v3287 = vadd.f32 %v3276, %v3285
    %3288 = vrot.lane.b32.xlu0 %v937, 32
    %v3289 = vpop.permute.xlu0 %3288
    %3290 = vrot.lane.b32.xlu0 %v925, 4
    %v3291 = vpop.permute.xlu0 %3290
    %v3294 = vsel %vm72, %v3287, 0
    %v3296 = vsel %vm97, %v3289, 0
    %3298 = vmatpush.msra.mxu0 0.0
    %3299 = vmatpush.msra.mxu0 0.0
    %3300 = vmatpush.msra.mxu0 0.0
    %3301 = vmatpush.msra.mxu0 0.0
    %3302 = vmatpush.msra.mxu0 0.0
    %3303 = vmatpush.msra.mxu0 0.0
    %3304 = vmatpush.msra.mxu0 0.0
    %3305 = vmatpush.msra.mxu0 0.0
    %3306 = vmatpush.msra.mxu0 0.0
    %3307 = vmatpush.msra.mxu0 0.0
    %3308 = vmatpush.msra.mxu0 0.0
    %3309 = vmatpush.msra.mxu0 0.0
    %3310 = vmatpush.msra.mxu0 0.0
    %3311 = vmatpush.msra.mxu0 0.0
    %3312 = vmatpush.msra.mxu0 0.0
    %3313 = vmatpush.msra.mxu0 %v3296
    %3314 = vmatmul.f32.gmra.mxu0 %v956
    %v3315 = vpop.f32.mrf.mxu0
    %v3316 = vadd.f32 %v3291, %v3315
    %3317 = vmatmul.f32.gmra.mxu0 %v1298
    %v3318 = vpop.f32.mrf.mxu0
    %v3319 = vadd.f32 %v3291, %v3318
    %3320 = vmatmul.f32.gmra.mxu0 %v1630
    %v3321 = vpop.f32.mrf.mxu0
    %v3322 = vadd.f32 %v3291, %v3321
    %3323 = vmatmul.f32.gmra.mxu0 %v1962
    %v3324 = vpop.f32.mrf.mxu0
    %v3325 = vadd.f32 %v3291, %v3324
    %3326 = vmatmul.f32.gmra.mxu0 %v2294
    %v3327 = vpop.f32.mrf.mxu0
    %v3328 = vadd.f32 %v3291, %v3327
    %3329 = vmatmul.f32.gmra.mxu0 %v2626
    %v3330 = vpop.f32.mrf.mxu0
    %v3331 = vadd.f32 %v3291, %v3330
    %3332 = vmatmul.f32.gmra.mxu0 %v2958
    %v3333 = vpop.f32.mrf.mxu0
    %v3334 = vadd.f32 %v3291, %v3333
    %3335 = vmatmul.f32.gmra.mxu0 %v3294
    %v3336 = vpop.f32.mrf.mxu0
    %v3337 = vadd.f32 %v3291, %v3336
    %3338 = vdwg.mxu0
    %v3339 = vsub.f32 %v51, %v3316
    %v3340 = vsub.f32 %v52, %v3319
    %v3341 = vsub.f32 %v53, %v3322
    %v3342 = vsub.f32 %v54, %v3325
    %v3343 = vsub.f32 %v55, %v3328
    %v3344 = vsub.f32 %v56, %v3331
    %v3345 = vsub.f32 %v57, %v3334
    %v3346 = vsub.f32 %v58, %v3337
    %v3347 = vmul.f32 %v3339, %v3339
    %v3348 = vmul.f32 %v3340, %v3340
    %v3349 = vmul.f32 %v3341, %v3341
    %v3350 = vmul.f32 %v3342, %v3342
    %v3351 = vmul.f32 %v3343, %v3343
    %v3352 = vmul.f32 %v3344, %v3344
    %v3353 = vmul.f32 %v3345, %v3345
    %v3354 = vmul.f32 %v3346, %v3346
    %v3355 = vmul.f32 %v3347, -50.0
    %v3356 = vmul.f32 %v3348, -50.0
    %v3357 = vmul.f32 %v3349, -50.0
    %v3358 = vmul.f32 %v3350, -50.0
    %v3359 = vmul.f32 %v3351, -50.0
    %v3360 = vmul.f32 %v3352, -50.0
    %v3361 = vmul.f32 %v3353, -50.0
    %v3362 = vmul.f32 %v3354, -50.0
    %v3363 = vadd.f32 %v3355, 1.3836466
    %v3364 = vadd.f32 %v3356, 1.3836466
    %v3365 = vadd.f32 %v3357, 1.3836466
    %v3366 = vadd.f32 %v3358, 1.3836466
    %v3367 = vadd.f32 %v3359, 1.3836466
    %v3368 = vadd.f32 %v3360, 1.3836466
    %v3369 = vadd.f32 %v3361, 1.3836466
    %v3370 = vadd.f32 %v3362, 1.3836466
    %3371 = vset.pattern.permute.xlu0 4
    %3372 = vperm.xlu0 %3371, %v51
    %v3373 = vpop.permute.xlu0 %3372
    %3375 = vset.pattern.permute.xlu0 4
    %3376 = vperm.xlu0 %3375, %v52
    %v3377 = vpop.permute.xlu0 %3376
    %3379 = vset.pattern.permute.xlu0 4
    %3380 = vperm.xlu0 %3379, %v53
    %v3381 = vpop.permute.xlu0 %3380
    %3383 = vset.pattern.permute.xlu0 4
    %3384 = vperm.xlu0 %3383, %v54
    %v3385 = vpop.permute.xlu0 %3384
    %3387 = vset.pattern.permute.xlu0 4
    %3388 = vperm.xlu0 %3387, %v55
    %v3389 = vpop.permute.xlu0 %3388
    %3391 = vset.pattern.permute.xlu0 4
    %3392 = vperm.xlu0 %3391, %v56
    %v3393 = vpop.permute.xlu0 %3392
    %3395 = vset.pattern.permute.xlu0 4
    %3396 = vperm.xlu0 %3395, %v57
    %v3397 = vpop.permute.xlu0 %3396
    %3399 = vset.pattern.permute.xlu0 4
    %3400 = vperm.xlu0 %3399, %v58
    %v3401 = vpop.permute.xlu0 %3400
    %v3403 = vmul.f32 %v3363, %v3373
    %v3404 = vmul.f32 %v3364, %v3377
    %v3405 = vmul.f32 %v3365, %v3381
    %v3406 = vmul.f32 %v3366, %v3385
    %v3407 = vmul.f32 %v3367, %v3389
    %v3408 = vmul.f32 %v3368, %v3393
    %v3409 = vmul.f32 %v3369, %v3397
    %v3410 = vmul.f32 %v3370, %v3401
    %v3411 = vsel %vm72, %v3403, 0.0
    %v3412 = vsel %vm72, %v3404, 0.0
    %v3413 = vadd.f32 %v3411, %v3412
    %v3414 = vsel %vm72, %v3405, 0.0
    %v3415 = vadd.f32 %v3413, %v3414
    %v3416 = vsel %vm72, %v3406, 0.0
    %v3417 = vadd.f32 %v3415, %v3416
    %v3418 = vsel %vm72, %v3407, 0.0
    %v3419 = vadd.f32 %v3417, %v3418
    %v3420 = vsel %vm72, %v3408, 0.0
    %v3421 = vadd.f32 %v3419, %v3420
    %v3422 = vsel %vm72, %v3409, 0.0
    %v3423 = vadd.f32 %v3421, %v3422
    %v3424 = vsel %vm72, %v3410, 0.0
    %v3425 = vadd.f32 %v3423, %v3424
    %3426 = vadd.xlane.f32.xlu0 %v3425
    %v3427 = vpop.xlane.xlu0 %3426
    %v3428 = vrot.slane %v3427, 4
    %v3429 = vadd.f32 %v3427, %v3428
    %v3430 = vrot.slane %v3429, 2
    %v3431 = vadd.f32 %v3429, %v3430
    %v3432 = vrot.slane %v3431, 1
    %v3433 = vadd.f32 %v3431, %v3432
    %s3434 = vtos %v3433
    %s3435 = smul.f32 %s3434, 0.125
    %v3436 = vld [vmem:[%s10 + $0x2] sm:$0x1]
    %v3438 = vperm.slane %v3436, 0
    %v3440 = vsub.f32 %v833, %v3438
    %v3441 = vmul.f32 %v3440, 2.0
    %v3442 = vmul.f32 %v3441, 1.442695
    %v3443 = vpow.pop %v3442
    %v3444 = vmul.f32 %v3440, %v3440
    %v3445 = vmul.f32 %v3436, -2.0
    %v3446 = vmul.f32 %v3445, 1.442695
    %v3447 = vpow.pop %v3446
    %v3449 = vperm.slane %v3447, 0
    %3450 = vrot.lane.b32.xlu0 %v3449, 124
    %v3451 = vpop.permute.xlu0 %3450
    %v3453 = vmul.f32 %v3444, %v3451
    %3455 = vrot.lane.b32.xlu0 %v3453, 4
    %v3456 = vpop.permute.xlu0 %3455
    %v3458 = vadd.f32 %v3443, %v3456
    %v3459 = vsub.f32 %v3458, 1.0
    %v3460 = vmul.f32 %v3459, 0.5
    %v3461 = vsub.f32 %v3460, %v3440
    %3463 = vrot.lane.b32.xlu0 %v3461, 124
    %v3464 = vpop.permute.xlu0 %3463
    %v3466 = vsel %vm72, %v3464, 0.0
    %3467 = vadd.xlane.f32.xlu0 %v3466
    %v3468 = vpop.xlane.xlu0 %3467
    %v3469 = vrot.slane %v3468, 4
    %v3470 = vadd.f32 %v3468, %v3469
    %v3471 = vrot.slane %v3470, 2
    %v3472 = vadd.f32 %v3470, %v3471
    %v3473 = vrot.slane %v3472, 1
    %v3474 = vadd.f32 %v3472, %v3473
    %s3475 = vtos %v3474
    %v3476 = vsel %vm72, %v3274, 0.0
    %3477 = vadd.xlane.f32.xlu0 %v3476
    %v3478 = vpop.xlane.xlu0 %3477
    %v3479 = vrot.slane %v3478, 4
    %v3480 = vadd.f32 %v3478, %v3479
    %v3481 = vrot.slane %v3480, 2
    %v3482 = vadd.f32 %v3480, %v3481
    %v3483 = vrot.slane %v3482, 1
    %v3484 = vadd.f32 %v3482, %v3483
    %s3485 = vtos %v3484
    %s3486 = sadd.f32 %s3475, %s3485
    %s3487 = smul.f32 %s3486, 0.125
    %v3488 = vstv %s3435
    %v3489 = vstv %s3487
    %vm3490 = vcmask 7168
    %v3491 = vsel %vm3490, %v3488, %v3489
    %vm3492 = vcmask 8192
    %3493 = vst.msk [vmem:[%s11] sm:$0x1] %vm3492, %v3491
    // Predicated region
    $region50: #{latent_sde_forward.3} parent=1 // pred_check
      _
    $region51: #{latent_sde_forward.3} parent=1 // pred_check_branch
      %3495 = sbr.rel (0) target = $region53
    $region52: #{latent_sde_forward.3} parent=1 // pred_region
      _
    $region53: #{latent_sde_forward.3} parent=1 // pred_fallthru
      _
    // Predicated region
    $region54: #{latent_sde_forward.3} parent=1 // pred_check
      _
    $region55: #{latent_sde_forward.3} parent=1 // pred_check_branch
      %3497 = sbr.rel (0) target = $region57
    $region56: #{latent_sde_forward.3} parent=1 // pred_region
      _
    $region57: #{latent_sde_forward.3} parent=1 // pred_fallthru
      _
    %3498 = vsyncpa [#allocation3], 1

</llo_original>
